<compile_context>
chip_gen: v5e
topology: v5e:2x2
jax: 0.10.0
libtpu: 0.0.40
codegen_flags: <defaults>
</compile_context>

<pallas_src>
import functools

import jax
import jax.numpy as jnp
from jax import lax
from jax.experimental import pallas as pl
from jax.experimental.pallas import tpu as pltpu

BN_EPS = 1e-5
# Tiles below keep the double-buffered working set at a few MiB, so this fits
# comfortably inside v7x's 64 MiB physical VMEM (and v5e/v6e's 128 MiB).
VMEM_LIMIT = 32 * 1024 * 1024

# Subpixel decomposition of ConvTranspose2d(k=5, s=2, padding=2, output_padding=1):
#   out[2m+ph, 2n+pw] = sum_{(dh,kh) in TAPS[ph]} sum_{(dw,kw) in TAPS[pw]}
#                         x[m+dh, n+dw, :] @ W[:, :, kh, kw]
# (W in PyTorch ConvTranspose2d layout (Cin, Cout, kh, kw); out-of-range x = 0)
PHASE_TAPS = {0: ((-1, 4), (0, 2), (1, 0)), 1: ((0, 3), (1, 1))}
PHASES = ((0, 0), (0, 1), (1, 0), (1, 1))


def _pick_tile(dim, target, align):
    """Largest multiple of `align` that divides `dim` and is <= target, else full dim."""
    if dim <= target:
        return dim
    t = (target // align) * align
    while t >= align:
        if dim % t == 0:
            return t
        t -= align
    return dim


# ----------------------------------------------------------------------------
# Kernel 1: tiled GEMM + per-channel partial BN statistics (one-pass variance)
# ----------------------------------------------------------------------------
def _matmul_stats_kernel(x_ref, w_ref, y_ref, s1_ref, s2_ref, acc_ref):
    @pl.when(pl.program_id(2) == 0)
    def _():
        acc_ref[...] = jnp.zeros_like(acc_ref)

    acc_ref[...] += jnp.dot(x_ref[...], w_ref[...],
                            preferred_element_type=jnp.float32)

    @pl.when(pl.program_id(2) == pl.num_programs(2) - 1)
    def _():
        y = acc_ref[...]
        y_ref[...] = y
        s1_ref[...] = jnp.sum(y, axis=0, keepdims=True)[None]        # (1,1,tn)
        s2_ref[...] = jnp.sum(y * y, axis=0, keepdims=True)[None]    # (1,1,tn)


def matmul_stats(x, w, *, tm=512, tn=256, tk=512):
    """Y = X @ W (bf16 in, f32 out) + per-(M-tile) channel sums of Y and Y^2."""
    m, k = x.shape
    k2, c = w.shape
    assert k == k2
    bm = _pick_tile(m, tm, 8)
    bn = _pick_tile(c, tn, 128)
    bk = _pick_tile(k, tk, 128)
    gm, gn, gk = m // bm, c // bn, k // bk
    return pl.pallas_call(
        _matmul_stats_kernel,
        grid=(gm, gn, gk),
        in_specs=[
            pl.BlockSpec((bm, bk), lambda i, j, kk: (i, kk)),
            pl.BlockSpec((bk, bn), lambda i, j, kk: (kk, j)),
        ],
        out_specs=(
            pl.BlockSpec((bm, bn), lambda i, j, kk: (i, j)),
            pl.BlockSpec((1, 1, bn), lambda i, j, kk: (i, 0, j)),
            pl.BlockSpec((1, 1, bn), lambda i, j, kk: (i, 0, j)),
        ),
        out_shape=(
            jax.ShapeDtypeStruct((m, c), jnp.float32),
            jax.ShapeDtypeStruct((gm, 1, c), jnp.float32),
            jax.ShapeDtypeStruct((gm, 1, c), jnp.float32),
        ),
        scratch_shapes=[pltpu.VMEM((bm, bn), jnp.float32)],
        compiler_params=pltpu.CompilerParams(
            dimension_semantics=("parallel", "parallel", "arbitrary"),
            vmem_limit_bytes=VMEM_LIMIT),
    )(x, w)


# ----------------------------------------------------------------------------
# Kernel 2: lane-dense elementwise  out = relu(y * scale + shift)  (BN+ReLU)
# ----------------------------------------------------------------------------
def _scale_shift_relu_kernel(y_ref, sc_ref, sh_ref, o_ref):
    y = y_ref[...] * sc_ref[...] + sh_ref[...]
    o_ref[...] = jnp.maximum(y, 0.0).astype(o_ref.dtype)


def scale_shift_relu(y, scale, shift, *, out_dtype=jnp.bfloat16, tm=1024, tn=1024):
    m, c = y.shape
    bm = _pick_tile(m, tm, 8)
    bn = _pick_tile(c, tn, 128)
    return pl.pallas_call(
        _scale_shift_relu_kernel,
        grid=(m // bm, c // bn),
        in_specs=[
            pl.BlockSpec((bm, bn), lambda i, j: (i, j)),
            pl.BlockSpec((1, bn), lambda i, j: (0, j)),
            pl.BlockSpec((1, bn), lambda i, j: (0, j)),
        ],
        out_specs=pl.BlockSpec((bm, bn), lambda i, j: (i, j)),
        out_shape=jax.ShapeDtypeStruct((m, c), out_dtype),
        compiler_params=pltpu.CompilerParams(
            dimension_semantics=("parallel", "parallel"),
            vmem_limit_bytes=VMEM_LIMIT),
    )(y, scale.reshape(1, c).astype(jnp.float32),
       shift.reshape(1, c).astype(jnp.float32))


def _bn_scale_shift(sum_y, sum_y2, count, gamma, beta, eps=BN_EPS):
    """Fold global batch statistics + gamma/beta into a per-channel scale/shift."""
    mean = sum_y / count
    var = sum_y2 / count - mean * mean            # biased variance, one pass
    scale = gamma * lax.rsqrt(var + eps)
    shift = beta - mean * scale
    return scale, shift


# ----------------------------------------------------------------------------
# Layers
# ----------------------------------------------------------------------------
def linear_bn_relu(x_bf16, w_bf16, gamma, beta):
    y, s1, s2 = matmul_stats(x_bf16, w_bf16)
    count = jnp.float32(y.shape[0])
    scale, shift = _bn_scale_shift(jnp.sum(s1, axis=(0, 1)), jnp.sum(s2, axis=(0, 1)),
                                   count, gamma, beta)
    return scale_shift_relu(y, scale, shift)                        # bf16 (N, C)


def dconv_bn_relu_apply(a_nhwc, phase_w, gamma, beta):
    """ConvTranspose2d(5,2,p=2,op=1,bias=False)+BN2d+ReLU via 4 subpixel GEMMs.

    a_nhwc: bf16 (N, H, W, Cin);  phase_w: 4 bf16 (T*Cin, Cout) GEMM weights.
    Returns bf16 (N, 2H, 2W, Cout).
    """
    n, h, w, cin = a_nhwc.shape
    cout = phase_w[0].shape[1]
    ap = jnp.pad(a_nhwc, ((0, 0), (1, 1), (1, 1), (0, 0)))          # zero halo of 1

    ys, sum_y, sum_y2 = [], 0.0, 0.0
    for (ph, pw), wmat in zip(PHASES, phase_w):
        vtaps, htaps = PHASE_TAPS[ph], PHASE_TAPS[pw]
        cols = [ap[:, 1 + dh:1 + dh + h, 1 + dw:1 + dw + w, :]
                for dh, _ in vtaps for dw, _ in htaps]              # T slices (N,H,W,Cin)
        patches = jnp.stack(cols, axis=3).reshape(n * h * w, len(cols) * cin)
        y, s1, s2 = matmul_stats(patches, wmat)                     # (N*H*W, Cout)
        ys.append(y)
        sum_y = sum_y + jnp.sum(s1, axis=(0, 1))
        sum_y2 = sum_y2 + jnp.sum(s2, axis=(0, 1))

    count = jnp.float32(4 * n * h * w)                              # all output pixels
    scale, shift = _bn_scale_shift(sum_y, sum_y2, count, gamma, beta)

    y_all = jnp.stack(ys, axis=0).reshape(4 * n * h * w, cout)
    out = scale_shift_relu(y_all, scale, shift)                     # bf16
    out = out.reshape(2, 2, n, h, w, cout)                          # (ph, pw, N, H, W, C)
    out = out.transpose(2, 3, 0, 4, 1, 5).reshape(n, 2 * h, 2 * w, cout)
    return out


# ----------------------------------------------------------------------------
# Parameters (PyTorch layout) + one-time kernel-layout preparation
# ----------------------------------------------------------------------------
def init_params(key, in_dim, dim):
    k1, k2, k3 = jax.random.split(key, 3)
    feat = dim * 8 * 4 * 4
    return {
        "w_l1": 0.05 * jax.random.normal(k1, (in_dim, feat), jnp.float32),
        "g_l1": jnp.ones((feat,), jnp.float32),
        "b_l1": jnp.zeros((feat,), jnp.float32),
        # ConvTranspose2d weights in PyTorch layout (Cin, Cout, kh, kw)
        "w_dc1": 0.05 * jax.random.normal(k2, (dim * 8, dim * 4, 5, 5), jnp.float32),
        "g_dc1": jnp.ones((dim * 4,), jnp.float32),
        "b_dc1": jnp.zeros((dim * 4,), jnp.float32),
        "w_dc2": 0.05 * jax.random.normal(k3, (dim * 4, dim * 2, 5, 5), jnp.float32),
        "g_dc2": jnp.ones((dim * 2,), jnp.float32),
        "b_dc2": jnp.zeros((dim * 2,), jnp.float32),
    }


def _phase_weight(wt, ph, pw):
    """(Cin, Cout, 5, 5) PyTorch ConvTranspose2d weight -> (T*Cin, Cout) GEMM weight."""
    mats = [wt[:, :, kh, kw] for _, kh in PHASE_TAPS[ph] for _, kw in PHASE_TAPS[pw]]
    return jnp.stack(mats, axis=0).reshape(-1, wt.shape[1])


def prepare_kernel_params(params):
    """One-time weight re-layout (flip + phase split) and bf16 cast for the kernel path."""
    kp = {"w_l1": params["w_l1"].astype(jnp.bfloat16),
          "g_l1": params["g_l1"], "b_l1": params["b_l1"]}
    for name in ("dc1", "dc2"):
        kp["w_" + name] = [_phase_weight(params["w_" + name], ph, pw).astype(jnp.bfloat16)
                           for ph, pw in PHASES]
        kp["g_" + name] = params["g_" + name]
        kp["b_" + name] = params["b_" + name]
    return kp


def identity_generator_forward(kparams, x, dim):
    n = x.shape[0]
    # l1: Linear(bias=False) + BatchNorm1d + ReLU
    y = linear_bn_relu(x.astype(jnp.bfloat16), kparams["w_l1"],
                       kparams["g_l1"], kparams["b_l1"])            # bf16 (N, dim*8*16)
    # y.view(N, dim*8, 4, 4) -> NHWC internally
    y = y.reshape(n, dim * 8, 4, 4).transpose(0, 2, 3, 1)           # (N, 4, 4, dim*8)
    # l2_5: two dconv_bn_relu blocks (subpixel-decomposed GEMMs)
    y = dconv_bn_relu_apply(y, kparams["w_dc1"], kparams["g_dc1"], kparams["b_dc1"])
    y = dconv_bn_relu_apply(y, kparams["w_dc2"], kparams["g_dc2"], kparams["b_dc2"])
    # module boundary: NCHW, f32
    return y.transpose(0, 3, 1, 2).astype(jnp.float32)


# ----------------------------------------------------------------------------
# Pure-JAX reference (same bf16 operand rounding as the kernel's MXU feed)
# ----------------------------------------------------------------------------
def _q(x):
    return x.astype(jnp.bfloat16).astype(jnp.float32)


def _bn_relu_ref(y, gamma, beta, axes):
    mean = jnp.mean(y, axis=axes, keepdims=True)
    var = jnp.mean(jnp.square(y - mean), axis=axes, keepdims=True)
    return jnp.maximum((y - mean) / jnp.sqrt(var + BN_EPS) * gamma + beta, 0.0)


def reference_forward(params, x, dim):
    y = _q(x) @ _q(params["w_l1"])
    y = _bn_relu_ref(y, params["g_l1"][None, :], params["b_l1"][None, :], (0,))
    y = _q(y)
    y = y.reshape(x.shape[0], dim * 8, 4, 4)
    for wn, gn, bn in (("w_dc1", "g_dc1", "b_dc1"), ("w_dc2", "g_dc2", "b_dc2")):
        wt = _q(params[wn])
        w_conv = jnp.transpose(jnp.flip(wt, axis=(2, 3)), (1, 0, 2, 3))  # (Cout,Cin,kh,kw)
        y = lax.conv_general_dilated(
            y, w_conv, window_strides=(1, 1), padding=((2, 3), (2, 3)),
            lhs_dilation=(2, 2), dimension_numbers=("NCHW", "OIHW", "NCHW"))
        y = _bn_relu_ref(y, params[gn].reshape(1, -1, 1, 1),
                         params[bn].reshape(1, -1, 1, 1), (0, 2, 3))
        y = _q(y)
    return y


if __name__ == "__main__":
    N, IN_DIM, DIM = 2, 32, 8   # small shapes; full module default is in_dim=100, dim=64

    key = jax.random.PRNGKey(0)
    kx, kp = jax.random.split(key)
    x = jax.random.normal(kx, (N, IN_DIM), jnp.float32)
    params = init_params(kp, IN_DIM, DIM)
    kparams = prepare_kernel_params(params)

    fwd = jax.jit(functools.partial(identity_generator_forward, dim=DIM))
    out = jax.block_until_ready(fwd(kparams, x))
    assert out.shape == (N, DIM * 2, 16, 16), out.shape

    ref = jax.block_until_ready(reference_forward(params, x, DIM))
    if not bool(jnp.allclose(out, ref, atol=2e-2, rtol=2e-2)):
        raise AssertionError("Pallas output does not match JAX reference")

    print("KERNEL_OK")
</pallas_src>

<mosaic_0001>
module attributes {stable_mosaic.version = 11 : i64} {
  func.func @_matmul_stats_kernel(%arg0: i32, %arg1: i32, %arg2: i32, %arg3: memref<2x32xbf16, #tpu.memory_space<vmem>>, %arg4: memref<32x256xbf16, #tpu.memory_space<vmem>>, %arg5: memref<2x256xf32, #tpu.memory_space<vmem>>, %arg6: memref<1x1x256xf32, #tpu.memory_space<vmem>>, %arg7: memref<1x1x256xf32, #tpu.memory_space<vmem>>, %arg8: memref<2x256xf32, #tpu.memory_space<vmem>>) attributes {dimension_semantics = [#tpu.dimension_semantics<parallel>, #tpu.dimension_semantics<parallel>, #tpu.dimension_semantics<arbitrary>], iteration_bounds = array<i64: 1, 4, 1>, scalar_prefetch = 0 : i64, scratch_operands = 1 : i64, tpu.core_type = #tpu.core_type<tc>, window_params = [{transform_indices = @transform_0, window_bounds = array<i64: 2, 32>}, {transform_indices = @transform_1, window_bounds = array<i64: 32, 256>}, {transform_indices = @transform_2, window_bounds = array<i64: 2, 256>}, {transform_indices = @transform_3, window_bounds = array<i64: 1, 1, 256>}, {transform_indices = @transform_4, window_bounds = array<i64: 1, 1, 256>}]} {
    %c0_i32 = arith.constant 0 : i32
    %0 = arith.cmpi eq, %arg2, %c0_i32 : i32
    %1 = arith.extui %0 : i1 to i32
    %c0_i32_0 = arith.constant 0 : i32
    %2 = arith.cmpi ne, %1, %c0_i32_0 : i32
    scf.if %2 {
      %cst_10 = arith.constant 0.000000e+00 : f32
      %12 = vector.broadcast %cst_10 : f32 to vector<2x256xf32>
      %c0_11 = arith.constant 0 : index
      %c0_12 = arith.constant 0 : index
      %13 = vector.load %arg8[%c0_11, %c0_12] : memref<2x256xf32, #tpu.memory_space<vmem>>, vector<2x256xf32>
      tpu.vector_store %arg8[%c0_11, %c0_12], %12 {strides = array<i32>} : memref<2x256xf32, #tpu.memory_space<vmem>>, vector<2x256xf32>,
    } else {
    }
    %c0 = arith.constant 0 : index
    %c0_1 = arith.constant 0 : index
    %3 = vector.load %arg8[%c0, %c0_1] : memref<2x256xf32, #tpu.memory_space<vmem>>, vector<2x256xf32>
    %c0_2 = arith.constant 0 : index
    %c0_3 = arith.constant 0 : index
    %4 = vector.load %arg3[%c0_2, %c0_3] : memref<2x32xbf16, #tpu.memory_space<vmem>>, vector<2x32xbf16>
    %c0_4 = arith.constant 0 : index
    %c0_5 = arith.constant 0 : index
    %5 = vector.load %arg4[%c0_4, %c0_5] : memref<32x256xbf16, #tpu.memory_space<vmem>>, vector<32x256xbf16>
    %cst = arith.constant dense<0.000000e+00> : vector<2x256xf32>
    %6 = tpu.matmul %4, %5, %cst {dimension_numbers = #tpu.dot_dimension_numbers<[1], [0], [0], [1], [0, 0, 1, 1], [], []>} : vector<2x32xbf16>, vector<32x256xbf16>, vector<2x256xf32> -> vector<2x256xf32>
    %7 = arith.addf %3, %6 : vector<2x256xf32>
    %c0_6 = arith.constant 0 : index
    %c0_7 = arith.constant 0 : index
    %8 = vector.load %arg8[%c0_6, %c0_7] : memref<2x256xf32, #tpu.memory_space<vmem>>, vector<2x256xf32>
    tpu.vector_store %arg8[%c0_6, %c0_7], %7 {strides = array<i32>} : memref<2x256xf32, #tpu.memory_space<vmem>>, vector<2x256xf32>,
    %c0_i32_8 = arith.constant 0 : i32
    %9 = arith.cmpi eq, %arg2, %c0_i32_8 : i32
    %10 = arith.extui %9 : i1 to i32
    %c0_i32_9 = arith.constant 0 : i32
    %11 = arith.cmpi ne, %10, %c0_i32_9 : i32
    scf.if %11 {
      %c0_10 = arith.constant 0 : index
      %c0_11 = arith.constant 0 : index
      %12 = vector.load %arg8[%c0_10, %c0_11] : memref<2x256xf32, #tpu.memory_space<vmem>>, vector<2x256xf32>
      %c0_12 = arith.constant 0 : index
      %c0_13 = arith.constant 0 : index
      %13 = vector.load %arg5[%c0_12, %c0_13] : memref<2x256xf32, #tpu.memory_space<vmem>>, vector<2x256xf32>
      tpu.vector_store %arg5[%c0_12, %c0_13], %12 {strides = array<i32>} : memref<2x256xf32, #tpu.memory_space<vmem>>, vector<2x256xf32>,
      %cst_14 = arith.constant dense<0.000000e+00> : vector<256xf32>
      %14 = vector.multi_reduction <add>, %12, %cst_14 [0] : vector<2x256xf32> to vector<256xf32>
      %15 = vector.shape_cast %14 : vector<256xf32> to vector<1x256xf32>
      %16 = vector.shape_cast %15 : vector<1x256xf32> to vector<1x1x256xf32>
      %c0_15 = arith.constant 0 : index
      %c0_16 = arith.constant 0 : index
      %c0_17 = arith.constant 0 : index
      %17 = vector.load %arg6[%c0_15, %c0_16, %c0_17] : memref<1x1x256xf32, #tpu.memory_space<vmem>>, vector<1x1x256xf32>
      tpu.vector_store %arg6[%c0_15, %c0_16, %c0_17], %16 {strides = array<i32>} : memref<1x1x256xf32, #tpu.memory_space<vmem>>, vector<1x1x256xf32>,
      %18 = arith.mulf %12, %12 : vector<2x256xf32>
      %cst_18 = arith.constant dense<0.000000e+00> : vector<256xf32>
      %19 = vector.multi_reduction <add>, %18, %cst_18 [0] : vector<2x256xf32> to vector<256xf32>
      %20 = vector.shape_cast %19 : vector<256xf32> to vector<1x256xf32>
      %21 = vector.shape_cast %20 : vector<1x256xf32> to vector<1x1x256xf32>
      %c0_19 = arith.constant 0 : index
      %c0_20 = arith.constant 0 : index
      %c0_21 = arith.constant 0 : index
      %22 = vector.load %arg7[%c0_19, %c0_20, %c0_21] : memref<1x1x256xf32, #tpu.memory_space<vmem>>, vector<1x1x256xf32>
      tpu.vector_store %arg7[%c0_19, %c0_20, %c0_21], %21 {strides = array<i32>} : memref<1x1x256xf32, #tpu.memory_space<vmem>>, vector<1x1x256xf32>,
    } else {
    }
    return
  }
  func.func @transform_0(%arg0: i32, %arg1: i32, %arg2: i32) -> (i32, i32) {
    %c0_i32 = arith.constant 0 : i32
    return %arg0, %arg2 : i32, i32
  }
  func.func @transform_1(%arg0: i32, %arg1: i32, %arg2: i32) -> (i32, i32) {
    %c0_i32 = arith.constant 0 : i32
    return %arg2, %arg1 : i32, i32
  }
  func.func @transform_2(%arg0: i32, %arg1: i32, %arg2: i32) -> (i32, i32) {
    %c0_i32 = arith.constant 0 : i32
    return %arg0, %arg1 : i32, i32
  }
  func.func @transform_3(%arg0: i32, %arg1: i32, %arg2: i32) -> (i32, i32, i32) {
    %c0_i32 = arith.constant 0 : i32
    %c0_i32_0 = arith.constant 0 : i32
    return %arg0, %c0_i32, %arg1 : i32, i32, i32
  }
  func.func @transform_4(%arg0: i32, %arg1: i32, %arg2: i32) -> (i32, i32, i32) {
    %c0_i32 = arith.constant 0 : i32
    %c0_i32_0 = arith.constant 0 : i32
    return %arg0, %c0_i32, %arg1 : i32, i32, i32
  }
}

module attributes {stable_mosaic.version = 11 : i64} {
  func.func @_scale_shift_relu_kernel(%arg0: i32, %arg1: i32, %arg2: memref<2x1024xf32, #tpu.memory_space<vmem>>, %arg3: memref<1x1024xf32, #tpu.memory_space<vmem>>, %arg4: memref<1x1024xf32, #tpu.memory_space<vmem>>, %arg5: memref<2x1024xbf16, #tpu.memory_space<vmem>>) attributes {dimension_semantics = [#tpu.dimension_semantics<parallel>, #tpu.dimension_semantics<parallel>], iteration_bounds = array<i64: 1, 1>, scalar_prefetch = 0 : i64, scratch_operands = 0 : i64, tpu.core_type = #tpu.core_type<tc>, window_params = [{transform_indices = @transform_0, window_bounds = array<i64: 2, 1024>}, {transform_indices = @transform_1, window_bounds = array<i64: 1, 1024>}, {transform_indices = @transform_2, window_bounds = array<i64: 1, 1024>}, {transform_indices = @transform_3, window_bounds = array<i64: 2, 1024>}]} {
    %c0 = arith.constant 0 : index
    %c0_0 = arith.constant 0 : index
    %0 = vector.load %arg2[%c0, %c0_0] : memref<2x1024xf32, #tpu.memory_space<vmem>>, vector<2x1024xf32>
    %c0_1 = arith.constant 0 : index
    %c0_2 = arith.constant 0 : index
    %1 = vector.load %arg3[%c0_1, %c0_2] : memref<1x1024xf32, #tpu.memory_space<vmem>>, vector<1x1024xf32>
    %2 = vector.broadcast %1 : vector<1x1024xf32> to vector<2x1024xf32>
    %3 = arith.mulf %0, %2 : vector<2x1024xf32>
    %c0_3 = arith.constant 0 : index
    %c0_4 = arith.constant 0 : index
    %4 = vector.load %arg4[%c0_3, %c0_4] : memref<1x1024xf32, #tpu.memory_space<vmem>>, vector<1x1024xf32>
    %5 = vector.broadcast %4 : vector<1x1024xf32> to vector<2x1024xf32>
    %6 = arith.addf %3, %5 : vector<2x1024xf32>
    %cst = arith.constant 0.000000e+00 : f32
    %7 = vector.broadcast %cst : f32 to vector<2x1024xf32>
    %8 = arith.maximumf %6, %7 : vector<2x1024xf32>
    %9 = arith.truncf %8 : vector<2x1024xf32> to vector<2x1024xbf16>
    %c0_5 = arith.constant 0 : index
    %c0_6 = arith.constant 0 : index
    %10 = vector.load %arg5[%c0_5, %c0_6] : memref<2x1024xbf16, #tpu.memory_space<vmem>>, vector<2x1024xbf16>
    tpu.vector_store %arg5[%c0_5, %c0_6], %9 {strides = array<i32>} : memref<2x1024xbf16, #tpu.memory_space<vmem>>, vector<2x1024xbf16>,
    return
  }
  func.func @transform_0(%arg0: i32, %arg1: i32) -> (i32, i32) {
    %c0_i32 = arith.constant 0 : i32
    return %arg0, %arg1 : i32, i32
  }
  func.func @transform_1(%arg0: i32, %arg1: i32) -> (i32, i32) {
    %c0_i32 = arith.constant 0 : i32
    %c0_i32_0 = arith.constant 0 : i32
    return %c0_i32, %arg1 : i32, i32
  }
  func.func @transform_2(%arg0: i32, %arg1: i32) -> (i32, i32) {
    %c0_i32 = arith.constant 0 : i32
    %c0_i32_0 = arith.constant 0 : i32
    return %c0_i32, %arg1 : i32, i32
  }
  func.func @transform_3(%arg0: i32, %arg1: i32) -> (i32, i32) {
    %c0_i32 = arith.constant 0 : i32
    return %arg0, %arg1 : i32, i32
  }
}

module attributes {stable_mosaic.version = 11 : i64} {
  func.func @_matmul_stats_kernel(%arg0: i32, %arg1: i32, %arg2: i32, %arg3: memref<32x256xbf16, #tpu.memory_space<vmem>>, %arg4: memref<256x32xbf16, #tpu.memory_space<vmem>>, %arg5: memref<32x32xf32, #tpu.memory_space<vmem>>, %arg6: memref<1x1x32xf32, #tpu.memory_space<vmem>>, %arg7: memref<1x1x32xf32, #tpu.memory_space<vmem>>, %arg8: memref<32x32xf32, #tpu.memory_space<vmem>>) attributes {dimension_semantics = [#tpu.dimension_semantics<parallel>, #tpu.dimension_semantics<parallel>, #tpu.dimension_semantics<arbitrary>], iteration_bounds = array<i64: 1, 1, 1>, scalar_prefetch = 0 : i64, scratch_operands = 1 : i64, tpu.core_type = #tpu.core_type<tc>, window_params = [{transform_indices = @transform_0, window_bounds = array<i64: 32, 256>}, {transform_indices = @transform_1, window_bounds = array<i64: 256, 32>}, {transform_indices = @transform_2, window_bounds = array<i64: 32, 32>}, {transform_indices = @transform_3, window_bounds = array<i64: 1, 1, 32>}, {transform_indices = @transform_4, window_bounds = array<i64: 1, 1, 32>}]} {
    %c0_i32 = arith.constant 0 : i32
    %0 = arith.cmpi eq, %arg2, %c0_i32 : i32
    %1 = arith.extui %0 : i1 to i32
    %c0_i32_0 = arith.constant 0 : i32
    %2 = arith.cmpi ne, %1, %c0_i32_0 : i32
    scf.if %2 {
      %cst_10 = arith.constant 0.000000e+00 : f32
      %12 = vector.broadcast %cst_10 : f32 to vector<32x32xf32>
      %c0_11 = arith.constant 0 : index
      %c0_12 = arith.constant 0 : index
      %13 = vector.load %arg8[%c0_11, %c0_12] : memref<32x32xf32, #tpu.memory_space<vmem>>, vector<32x32xf32>
      tpu.vector_store %arg8[%c0_11, %c0_12], %12 {strides = array<i32>} : memref<32x32xf32, #tpu.memory_space<vmem>>, vector<32x32xf32>,
    } else {
    }
    %c0 = arith.constant 0 : index
    %c0_1 = arith.constant 0 : index
    %3 = vector.load %arg8[%c0, %c0_1] : memref<32x32xf32, #tpu.memory_space<vmem>>, vector<32x32xf32>
    %c0_2 = arith.constant 0 : index
    %c0_3 = arith.constant 0 : index
    %4 = vector.load %arg3[%c0_2, %c0_3] : memref<32x256xbf16, #tpu.memory_space<vmem>>, vector<32x256xbf16>
    %c0_4 = arith.constant 0 : index
    %c0_5 = arith.constant 0 : index
    %5 = vector.load %arg4[%c0_4, %c0_5] : memref<256x32xbf16, #tpu.memory_space<vmem>>, vector<256x32xbf16>
    %cst = arith.constant dense<0.000000e+00> : vector<32x32xf32>
    %6 = tpu.matmul %4, %5, %cst {dimension_numbers = #tpu.dot_dimension_numbers<[1], [0], [0], [1], [0, 0, 1, 1], [], []>} : vector<32x256xbf16>, vector<256x32xbf16>, vector<32x32xf32> -> vector<32x32xf32>
    %7 = arith.addf %3, %6 : vector<32x32xf32>
    %c0_6 = arith.constant 0 : index
    %c0_7 = arith.constant 0 : index
    %8 = vector.load %arg8[%c0_6, %c0_7] : memref<32x32xf32, #tpu.memory_space<vmem>>, vector<32x32xf32>
    tpu.vector_store %arg8[%c0_6, %c0_7], %7 {strides = array<i32>} : memref<32x32xf32, #tpu.memory_space<vmem>>, vector<32x32xf32>,
    %c0_i32_8 = arith.constant 0 : i32
    %9 = arith.cmpi eq, %arg2, %c0_i32_8 : i32
    %10 = arith.extui %9 : i1 to i32
    %c0_i32_9 = arith.constant 0 : i32
    %11 = arith.cmpi ne, %10, %c0_i32_9 : i32
    scf.if %11 {
      %c0_10 = arith.constant 0 : index
      %c0_11 = arith.constant 0 : index
      %12 = vector.load %arg8[%c0_10, %c0_11] : memref<32x32xf32, #tpu.memory_space<vmem>>, vector<32x32xf32>
      %c0_12 = arith.constant 0 : index
      %c0_13 = arith.constant 0 : index
      %13 = vector.load %arg5[%c0_12, %c0_13] : memref<32x32xf32, #tpu.memory_space<vmem>>, vector<32x32xf32>
      tpu.vector_store %arg5[%c0_12, %c0_13], %12 {strides = array<i32>} : memref<32x32xf32, #tpu.memory_space<vmem>>, vector<32x32xf32>,
      %cst_14 = arith.constant dense<0.000000e+00> : vector<32xf32>
      %14 = vector.multi_reduction <add>, %12, %cst_14 [0] : vector<32x32xf32> to vector<32xf32>
      %15 = vector.shape_cast %14 : vector<32xf32> to vector<1x32xf32>
      %16 = vector.shape_cast %15 : vector<1x32xf32> to vector<1x1x32xf32>
      %c0_15 = arith.constant 0 : index
      %c0_16 = arith.constant 0 : index
      %c0_17 = arith.constant 0 : index
      %17 = vector.load %arg6[%c0_15, %c0_16, %c0_17] : memref<1x1x32xf32, #tpu.memory_space<vmem>>, vector<1x1x32xf32>
      tpu.vector_store %arg6[%c0_15, %c0_16, %c0_17], %16 {strides = array<i32>} : memref<1x1x32xf32, #tpu.memory_space<vmem>>, vector<1x1x32xf32>,
      %18 = arith.mulf %12, %12 : vector<32x32xf32>
      %cst_18 = arith.constant dense<0.000000e+00> : vector<32xf32>
      %19 = vector.multi_reduction <add>, %18, %cst_18 [0] : vector<32x32xf32> to vector<32xf32>
      %20 = vector.shape_cast %19 : vector<32xf32> to vector<1x32xf32>
      %21 = vector.shape_cast %20 : vector<1x32xf32> to vector<1x1x32xf32>
      %c0_19 = arith.constant 0 : index
      %c0_20 = arith.constant 0 : index
      %c0_21 = arith.constant 0 : index
      %22 = vector.load %arg7[%c0_19, %c0_20, %c0_21] : memref<1x1x32xf32, #tpu.memory_space<vmem>>, vector<1x1x32xf32>
      tpu.vector_store %arg7[%c0_19, %c0_20, %c0_21], %21 {strides = array<i32>} : memref<1x1x32xf32, #tpu.memory_space<vmem>>, vector<1x1x32xf32>,
    } else {
    }
    return
  }
  func.func @transform_0(%arg0: i32, %arg1: i32, %arg2: i32) -> (i32, i32) {
    %c0_i32 = arith.constant 0 : i32
    return %arg0, %arg2 : i32, i32
  }
  func.func @transform_1(%arg0: i32, %arg1: i32, %arg2: i32) -> (i32, i32) {
    %c0_i32 = arith.constant 0 : i32
    return %arg2, %arg1 : i32, i32
  }
  func.func @transform_2(%arg0: i32, %arg1: i32, %arg2: i32) -> (i32, i32) {
    %c0_i32 = arith.constant 0 : i32
    return %arg0, %arg1 : i32, i32
  }
  func.func @transform_3(%arg0: i32, %arg1: i32, %arg2: i32) -> (i32, i32, i32) {
    %c0_i32 = arith.constant 0 : i32
    %c0_i32_0 = arith.constant 0 : i32
    return %arg0, %c0_i32, %arg1 : i32, i32, i32
  }
  func.func @transform_4(%arg0: i32, %arg1: i32, %arg2: i32) -> (i32, i32, i32) {
    %c0_i32 = arith.constant 0 : i32
    %c0_i32_0 = arith.constant 0 : i32
    return %arg0, %c0_i32, %arg1 : i32, i32, i32
  }
}

module attributes {stable_mosaic.version = 11 : i64} {
  func.func @_matmul_stats_kernel(%arg0: i32, %arg1: i32, %arg2: i32, %arg3: memref<32x384xbf16, #tpu.memory_space<vmem>>, %arg4: memref<384x32xbf16, #tpu.memory_space<vmem>>, %arg5: memref<32x32xf32, #tpu.memory_space<vmem>>, %arg6: memref<1x1x32xf32, #tpu.memory_space<vmem>>, %arg7: memref<1x1x32xf32, #tpu.memory_space<vmem>>, %arg8: memref<32x32xf32, #tpu.memory_space<vmem>>) attributes {dimension_semantics = [#tpu.dimension_semantics<parallel>, #tpu.dimension_semantics<parallel>, #tpu.dimension_semantics<arbitrary>], iteration_bounds = array<i64: 1, 1, 1>, scalar_prefetch = 0 : i64, scratch_operands = 1 : i64, tpu.core_type = #tpu.core_type<tc>, window_params = [{transform_indices = @transform_0, window_bounds = array<i64: 32, 384>}, {transform_indices = @transform_1, window_bounds = array<i64: 384, 32>}, {transform_indices = @transform_2, window_bounds = array<i64: 32, 32>}, {transform_indices = @transform_3, window_bounds = array<i64: 1, 1, 32>}, {transform_indices = @transform_4, window_bounds = array<i64: 1, 1, 32>}]} {
    %c0_i32 = arith.constant 0 : i32
    %0 = arith.cmpi eq, %arg2, %c0_i32 : i32
    %1 = arith.extui %0 : i1 to i32
    %c0_i32_0 = arith.constant 0 : i32
    %2 = arith.cmpi ne, %1, %c0_i32_0 : i32
    scf.if %2 {
      %cst_10 = arith.constant 0.000000e+00 : f32
      %12 = vector.broadcast %cst_10 : f32 to vector<32x32xf32>
      %c0_11 = arith.constant 0 : index
      %c0_12 = arith.constant 0 : index
      %13 = vector.load %arg8[%c0_11, %c0_12] : memref<32x32xf32, #tpu.memory_space<vmem>>, vector<32x32xf32>
      tpu.vector_store %arg8[%c0_11, %c0_12], %12 {strides = array<i32>} : memref<32x32xf32, #tpu.memory_space<vmem>>, vector<32x32xf32>,
    } else {
    }
    %c0 = arith.constant 0 : index
    %c0_1 = arith.constant 0 : index
    %3 = vector.load %arg8[%c0, %c0_1] : memref<32x32xf32, #tpu.memory_space<vmem>>, vector<32x32xf32>
    %c0_2 = arith.constant 0 : index
    %c0_3 = arith.constant 0 : index
    %4 = vector.load %arg3[%c0_2, %c0_3] : memref<32x384xbf16, #tpu.memory_space<vmem>>, vector<32x384xbf16>
    %c0_4 = arith.constant 0 : index
    %c0_5 = arith.constant 0 : index
    %5 = vector.load %arg4[%c0_4, %c0_5] : memref<384x32xbf16, #tpu.memory_space<vmem>>, vector<384x32xbf16>
    %cst = arith.constant dense<0.000000e+00> : vector<32x32xf32>
    %6 = tpu.matmul %4, %5, %cst {dimension_numbers = #tpu.dot_dimension_numbers<[1], [0], [0], [1], [0, 0, 1, 1], [], []>} : vector<32x384xbf16>, vector<384x32xbf16>, vector<32x32xf32> -> vector<32x32xf32>
    %7 = arith.addf %3, %6 : vector<32x32xf32>
    %c0_6 = arith.constant 0 : index
    %c0_7 = arith.constant 0 : index
    %8 = vector.load %arg8[%c0_6, %c0_7] : memref<32x32xf32, #tpu.memory_space<vmem>>, vector<32x32xf32>
    tpu.vector_store %arg8[%c0_6, %c0_7], %7 {strides = array<i32>} : memref<32x32xf32, #tpu.memory_space<vmem>>, vector<32x32xf32>,
    %c0_i32_8 = arith.constant 0 : i32
    %9 = arith.cmpi eq, %arg2, %c0_i32_8 : i32
    %10 = arith.extui %9 : i1 to i32
    %c0_i32_9 = arith.constant 0 : i32
    %11 = arith.cmpi ne, %10, %c0_i32_9 : i32
    scf.if %11 {
      %c0_10 = arith.constant 0 : index
      %c0_11 = arith.constant 0 : index
      %12 = vector.load %arg8[%c0_10, %c0_11] : memref<32x32xf32, #tpu.memory_space<vmem>>, vector<32x32xf32>
      %c0_12 = arith.constant 0 : index
      %c0_13 = arith.constant 0 : index
      %13 = vector.load %arg5[%c0_12, %c0_13] : memref<32x32xf32, #tpu.memory_space<vmem>>, vector<32x32xf32>
      tpu.vector_store %arg5[%c0_12, %c0_13], %12 {strides = array<i32>} : memref<32x32xf32, #tpu.memory_space<vmem>>, vector<32x32xf32>,
      %cst_14 = arith.constant dense<0.000000e+00> : vector<32xf32>
      %14 = vector.multi_reduction <add>, %12, %cst_14 [0] : vector<32x32xf32> to vector<32xf32>
      %15 = vector.shape_cast %14 : vector<32xf32> to vector<1x32xf32>
      %16 = vector.shape_cast %15 : vector<1x32xf32> to vector<1x1x32xf32>
      %c0_15 = arith.constant 0 : index
      %c0_16 = arith.constant 0 : index
      %c0_17 = arith.constant 0 : index
      %17 = vector.load %arg6[%c0_15, %c0_16, %c0_17] : memref<1x1x32xf32, #tpu.memory_space<vmem>>, vector<1x1x32xf32>
      tpu.vector_store %arg6[%c0_15, %c0_16, %c0_17], %16 {strides = array<i32>} : memref<1x1x32xf32, #tpu.memory_space<vmem>>, vector<1x1x32xf32>,
      %18 = arith.mulf %12, %12 : vector<32x32xf32>
      %cst_18 = arith.constant dense<0.000000e+00> : vector<32xf32>
      %19 = vector.multi_reduction <add>, %18, %cst_18 [0] : vector<32x32xf32> to vector<32xf32>
      %20 = vector.shape_cast %19 : vector<32xf32> to vector<1x32xf32>
      %21 = vector.shape_cast %20 : vector<1x32xf32> to vector<1x1x32xf32>
      %c0_19 = arith.constant 0 : index
      %c0_20 = arith.constant 0 : index
      %c0_21 = arith.constant 0 : index
      %22 = vector.load %arg7[%c0_19, %c0_20, %c0_21] : memref<1x1x32xf32, #tpu.memory_space<vmem>>, vector<1x1x32xf32>
      tpu.vector_store %arg7[%c0_19, %c0_20, %c0_21], %21 {strides = array<i32>} : memref<1x1x32xf32, #tpu.memory_space<vmem>>, vector<1x1x32xf32>,
    } else {
    }
    return
  }
  func.func @transform_0(%arg0: i32, %arg1: i32, %arg2: i32) -> (i32, i32) {
    %c0_i32 = arith.constant 0 : i32
    return %arg0, %arg2 : i32, i32
  }
  func.func @transform_1(%arg0: i32, %arg1: i32, %arg2: i32) -> (i32, i32) {
    %c0_i32 = arith.constant 0 : i32
    return %arg2, %arg1 : i32, i32
  }
  func.func @transform_2(%arg0: i32, %arg1: i32, %arg2: i32) -> (i32, i32) {
    %c0_i32 = arith.constant 0 : i32
    return %arg0, %arg1 : i32, i32
  }
  func.func @transform_3(%arg0: i32, %arg1: i32, %arg2: i32) -> (i32, i32, i32) {
    %c0_i32 = arith.constant 0 : i32
    %c0_i32_0 = arith.constant 0 : i32
    return %arg0, %c0_i32, %arg1 : i32, i32, i32
  }
  func.func @transform_4(%arg0: i32, %arg1: i32, %arg2: i32) -> (i32, i32, i32) {
    %c0_i32 = arith.constant 0 : i32
    %c0_i32_0 = arith.constant 0 : i32
    return %arg0, %c0_i32, %arg1 : i32, i32, i32
  }
}

module attributes {stable_mosaic.version = 11 : i64} {
  func.func @_matmul_stats_kernel(%arg0: i32, %arg1: i32, %arg2: i32, %arg3: memref<32x576xbf16, #tpu.memory_space<vmem>>, %arg4: memref<576x32xbf16, #tpu.memory_space<vmem>>, %arg5: memref<32x32xf32, #tpu.memory_space<vmem>>, %arg6: memref<1x1x32xf32, #tpu.memory_space<vmem>>, %arg7: memref<1x1x32xf32, #tpu.memory_space<vmem>>, %arg8: memref<32x32xf32, #tpu.memory_space<vmem>>) attributes {dimension_semantics = [#tpu.dimension_semantics<parallel>, #tpu.dimension_semantics<parallel>, #tpu.dimension_semantics<arbitrary>], iteration_bounds = array<i64: 1, 1, 1>, scalar_prefetch = 0 : i64, scratch_operands = 1 : i64, tpu.core_type = #tpu.core_type<tc>, window_params = [{transform_indices = @transform_0, window_bounds = array<i64: 32, 576>}, {transform_indices = @transform_1, window_bounds = array<i64: 576, 32>}, {transform_indices = @transform_2, window_bounds = array<i64: 32, 32>}, {transform_indices = @transform_3, window_bounds = array<i64: 1, 1, 32>}, {transform_indices = @transform_4, window_bounds = array<i64: 1, 1, 32>}]} {
    %c0_i32 = arith.constant 0 : i32
    %0 = arith.cmpi eq, %arg2, %c0_i32 : i32
    %1 = arith.extui %0 : i1 to i32
    %c0_i32_0 = arith.constant 0 : i32
    %2 = arith.cmpi ne, %1, %c0_i32_0 : i32
    scf.if %2 {
      %cst_10 = arith.constant 0.000000e+00 : f32
      %12 = vector.broadcast %cst_10 : f32 to vector<32x32xf32>
      %c0_11 = arith.constant 0 : index
      %c0_12 = arith.constant 0 : index
      %13 = vector.load %arg8[%c0_11, %c0_12] : memref<32x32xf32, #tpu.memory_space<vmem>>, vector<32x32xf32>
      tpu.vector_store %arg8[%c0_11, %c0_12], %12 {strides = array<i32>} : memref<32x32xf32, #tpu.memory_space<vmem>>, vector<32x32xf32>,
    } else {
    }
    %c0 = arith.constant 0 : index
    %c0_1 = arith.constant 0 : index
    %3 = vector.load %arg8[%c0, %c0_1] : memref<32x32xf32, #tpu.memory_space<vmem>>, vector<32x32xf32>
    %c0_2 = arith.constant 0 : index
    %c0_3 = arith.constant 0 : index
    %4 = vector.load %arg3[%c0_2, %c0_3] : memref<32x576xbf16, #tpu.memory_space<vmem>>, vector<32x576xbf16>
    %c0_4 = arith.constant 0 : index
    %c0_5 = arith.constant 0 : index
    %5 = vector.load %arg4[%c0_4, %c0_5] : memref<576x32xbf16, #tpu.memory_space<vmem>>, vector<576x32xbf16>
    %cst = arith.constant dense<0.000000e+00> : vector<32x32xf32>
    %6 = tpu.matmul %4, %5, %cst {dimension_numbers = #tpu.dot_dimension_numbers<[1], [0], [0], [1], [0, 0, 1, 1], [], []>} : vector<32x576xbf16>, vector<576x32xbf16>, vector<32x32xf32> -> vector<32x32xf32>
    %7 = arith.addf %3, %6 : vector<32x32xf32>
    %c0_6 = arith.constant 0 : index
    %c0_7 = arith.constant 0 : index
    %8 = vector.load %arg8[%c0_6, %c0_7] : memref<32x32xf32, #tpu.memory_space<vmem>>, vector<32x32xf32>
    tpu.vector_store %arg8[%c0_6, %c0_7], %7 {strides = array<i32>} : memref<32x32xf32, #tpu.memory_space<vmem>>, vector<32x32xf32>,
    %c0_i32_8 = arith.constant 0 : i32
    %9 = arith.cmpi eq, %arg2, %c0_i32_8 : i32
    %10 = arith.extui %9 : i1 to i32
    %c0_i32_9 = arith.constant 0 : i32
    %11 = arith.cmpi ne, %10, %c0_i32_9 : i32
    scf.if %11 {
      %c0_10 = arith.constant 0 : index
      %c0_11 = arith.constant 0 : index
      %12 = vector.load %arg8[%c0_10, %c0_11] : memref<32x32xf32, #tpu.memory_space<vmem>>, vector<32x32xf32>
      %c0_12 = arith.constant 0 : index
      %c0_13 = arith.constant 0 : index
      %13 = vector.load %arg5[%c0_12, %c0_13] : memref<32x32xf32, #tpu.memory_space<vmem>>, vector<32x32xf32>
      tpu.vector_store %arg5[%c0_12, %c0_13], %12 {strides = array<i32>} : memref<32x32xf32, #tpu.memory_space<vmem>>, vector<32x32xf32>,
      %cst_14 = arith.constant dense<0.000000e+00> : vector<32xf32>
      %14 = vector.multi_reduction <add>, %12, %cst_14 [0] : vector<32x32xf32> to vector<32xf32>
      %15 = vector.shape_cast %14 : vector<32xf32> to vector<1x32xf32>
      %16 = vector.shape_cast %15 : vector<1x32xf32> to vector<1x1x32xf32>
      %c0_15 = arith.constant 0 : index
      %c0_16 = arith.constant 0 : index
      %c0_17 = arith.constant 0 : index
      %17 = vector.load %arg6[%c0_15, %c0_16, %c0_17] : memref<1x1x32xf32, #tpu.memory_space<vmem>>, vector<1x1x32xf32>
      tpu.vector_store %arg6[%c0_15, %c0_16, %c0_17], %16 {strides = array<i32>} : memref<1x1x32xf32, #tpu.memory_space<vmem>>, vector<1x1x32xf32>,
      %18 = arith.mulf %12, %12 : vector<32x32xf32>
      %cst_18 = arith.constant dense<0.000000e+00> : vector<32xf32>
      %19 = vector.multi_reduction <add>, %18, %cst_18 [0] : vector<32x32xf32> to vector<32xf32>
      %20 = vector.shape_cast %19 : vector<32xf32> to vector<1x32xf32>
      %21 = vector.shape_cast %20 : vector<1x32xf32> to vector<1x1x32xf32>
      %c0_19 = arith.constant 0 : index
      %c0_20 = arith.constant 0 : index
      %c0_21 = arith.constant 0 : index
      %22 = vector.load %arg7[%c0_19, %c0_20, %c0_21] : memref<1x1x32xf32, #tpu.memory_space<vmem>>, vector<1x1x32xf32>
      tpu.vector_store %arg7[%c0_19, %c0_20, %c0_21], %21 {strides = array<i32>} : memref<1x1x32xf32, #tpu.memory_space<vmem>>, vector<1x1x32xf32>,
    } else {
    }
    return
  }
  func.func @transform_0(%arg0: i32, %arg1: i32, %arg2: i32) -> (i32, i32) {
    %c0_i32 = arith.constant 0 : i32
    return %arg0, %arg2 : i32, i32
  }
  func.func @transform_1(%arg0: i32, %arg1: i32, %arg2: i32) -> (i32, i32) {
    %c0_i32 = arith.constant 0 : i32
    return %arg2, %arg1 : i32, i32
  }
  func.func @transform_2(%arg0: i32, %arg1: i32, %arg2: i32) -> (i32, i32) {
    %c0_i32 = arith.constant 0 : i32
    return %arg0, %arg1 : i32, i32
  }
  func.func @transform_3(%arg0: i32, %arg1: i32, %arg2: i32) -> (i32, i32, i32) {
    %c0_i32 = arith.constant 0 : i32
    %c0_i32_0 = arith.constant 0 : i32
    return %arg0, %c0_i32, %arg1 : i32, i32, i32
  }
  func.func @transform_4(%arg0: i32, %arg1: i32, %arg2: i32) -> (i32, i32, i32) {
    %c0_i32 = arith.constant 0 : i32
    %c0_i32_0 = arith.constant 0 : i32
    return %arg0, %c0_i32, %arg1 : i32, i32, i32
  }
}

module attributes {stable_mosaic.version = 11 : i64} {
  func.func @_scale_shift_relu_kernel(%arg0: i32, %arg1: i32, %arg2: memref<128x32xf32, #tpu.memory_space<vmem>>, %arg3: memref<1x32xf32, #tpu.memory_space<vmem>>, %arg4: memref<1x32xf32, #tpu.memory_space<vmem>>, %arg5: memref<128x32xbf16, #tpu.memory_space<vmem>>) attributes {dimension_semantics = [#tpu.dimension_semantics<parallel>, #tpu.dimension_semantics<parallel>], iteration_bounds = array<i64: 1, 1>, scalar_prefetch = 0 : i64, scratch_operands = 0 : i64, tpu.core_type = #tpu.core_type<tc>, window_params = [{transform_indices = @transform_0, window_bounds = array<i64: 128, 32>}, {transform_indices = @transform_1, window_bounds = array<i64: 1, 32>}, {transform_indices = @transform_2, window_bounds = array<i64: 1, 32>}, {transform_indices = @transform_3, window_bounds = array<i64: 128, 32>}]} {
    %c0 = arith.constant 0 : index
    %c0_0 = arith.constant 0 : index
    %0 = vector.load %arg2[%c0, %c0_0] : memref<128x32xf32, #tpu.memory_space<vmem>>, vector<128x32xf32>
    %c0_1 = arith.constant 0 : index
    %c0_2 = arith.constant 0 : index
    %1 = vector.load %arg3[%c0_1, %c0_2] : memref<1x32xf32, #tpu.memory_space<vmem>>, vector<1x32xf32>
    %2 = vector.broadcast %1 : vector<1x32xf32> to vector<128x32xf32>
    %3 = arith.mulf %0, %2 : vector<128x32xf32>
    %c0_3 = arith.constant 0 : index
    %c0_4 = arith.constant 0 : index
    %4 = vector.load %arg4[%c0_3, %c0_4] : memref<1x32xf32, #tpu.memory_space<vmem>>, vector<1x32xf32>
    %5 = vector.broadcast %4 : vector<1x32xf32> to vector<128x32xf32>
    %6 = arith.addf %3, %5 : vector<128x32xf32>
    %cst = arith.constant 0.000000e+00 : f32
    %7 = vector.broadcast %cst : f32 to vector<128x32xf32>
    %8 = arith.maximumf %6, %7 : vector<128x32xf32>
    %9 = arith.truncf %8 : vector<128x32xf32> to vector<128x32xbf16>
    %c0_5 = arith.constant 0 : index
    %c0_6 = arith.constant 0 : index
    %10 = vector.load %arg5[%c0_5, %c0_6] : memref<128x32xbf16, #tpu.memory_space<vmem>>, vector<128x32xbf16>
    tpu.vector_store %arg5[%c0_5, %c0_6], %9 {strides = array<i32>} : memref<128x32xbf16, #tpu.memory_space<vmem>>, vector<128x32xbf16>,
    return
  }
  func.func @transform_0(%arg0: i32, %arg1: i32) -> (i32, i32) {
    %c0_i32 = arith.constant 0 : i32
    return %arg0, %arg1 : i32, i32
  }
  func.func @transform_1(%arg0: i32, %arg1: i32) -> (i32, i32) {
    %c0_i32 = arith.constant 0 : i32
    %c0_i32_0 = arith.constant 0 : i32
    return %c0_i32, %arg1 : i32, i32
  }
  func.func @transform_2(%arg0: i32, %arg1: i32) -> (i32, i32) {
    %c0_i32 = arith.constant 0 : i32
    %c0_i32_0 = arith.constant 0 : i32
    return %c0_i32, %arg1 : i32, i32
  }
  func.func @transform_3(%arg0: i32, %arg1: i32) -> (i32, i32) {
    %c0_i32 = arith.constant 0 : i32
    return %arg0, %arg1 : i32, i32
  }
}

module attributes {stable_mosaic.version = 11 : i64} {
  func.func @_matmul_stats_kernel(%arg0: i32, %arg1: i32, %arg2: i32, %arg3: memref<128x128xbf16, #tpu.memory_space<vmem>>, %arg4: memref<128x16xbf16, #tpu.memory_space<vmem>>, %arg5: memref<128x16xf32, #tpu.memory_space<vmem>>, %arg6: memref<1x1x16xf32, #tpu.memory_space<vmem>>, %arg7: memref<1x1x16xf32, #tpu.memory_space<vmem>>, %arg8: memref<128x16xf32, #tpu.memory_space<vmem>>) attributes {dimension_semantics = [#tpu.dimension_semantics<parallel>, #tpu.dimension_semantics<parallel>, #tpu.dimension_semantics<arbitrary>], iteration_bounds = array<i64: 1, 1, 1>, scalar_prefetch = 0 : i64, scratch_operands = 1 : i64, tpu.core_type = #tpu.core_type<tc>, window_params = [{transform_indices = @transform_0, window_bounds = array<i64: 128, 128>}, {transform_indices = @transform_1, window_bounds = array<i64: 128, 16>}, {transform_indices = @transform_2, window_bounds = array<i64: 128, 16>}, {transform_indices = @transform_3, window_bounds = array<i64: 1, 1, 16>}, {transform_indices = @transform_4, window_bounds = array<i64: 1, 1, 16>}]} {
    %c0_i32 = arith.constant 0 : i32
    %0 = arith.cmpi eq, %arg2, %c0_i32 : i32
    %1 = arith.extui %0 : i1 to i32
    %c0_i32_0 = arith.constant 0 : i32
    %2 = arith.cmpi ne, %1, %c0_i32_0 : i32
    scf.if %2 {
      %cst_10 = arith.constant 0.000000e+00 : f32
      %12 = vector.broadcast %cst_10 : f32 to vector<128x16xf32>
      %c0_11 = arith.constant 0 : index
      %c0_12 = arith.constant 0 : index
      %13 = vector.load %arg8[%c0_11, %c0_12] : memref<128x16xf32, #tpu.memory_space<vmem>>, vector<128x16xf32>
      tpu.vector_store %arg8[%c0_11, %c0_12], %12 {strides = array<i32>} : memref<128x16xf32, #tpu.memory_space<vmem>>, vector<128x16xf32>,
    } else {
    }
    %c0 = arith.constant 0 : index
    %c0_1 = arith.constant 0 : index
    %3 = vector.load %arg8[%c0, %c0_1] : memref<128x16xf32, #tpu.memory_space<vmem>>, vector<128x16xf32>
    %c0_2 = arith.constant 0 : index
    %c0_3 = arith.constant 0 : index
    %4 = vector.load %arg3[%c0_2, %c0_3] : memref<128x128xbf16, #tpu.memory_space<vmem>>, vector<128x128xbf16>
    %c0_4 = arith.constant 0 : index
    %c0_5 = arith.constant 0 : index
    %5 = vector.load %arg4[%c0_4, %c0_5] : memref<128x16xbf16, #tpu.memory_space<vmem>>, vector<128x16xbf16>
    %cst = arith.constant dense<0.000000e+00> : vector<128x16xf32>
    %6 = tpu.matmul %4, %5, %cst {dimension_numbers = #tpu.dot_dimension_numbers<[1], [0], [0], [1], [0, 0, 1, 1], [], []>} : vector<128x128xbf16>, vector<128x16xbf16>, vector<128x16xf32> -> vector<128x16xf32>
    %7 = arith.addf %3, %6 : vector<128x16xf32>
    %c0_6 = arith.constant 0 : index
    %c0_7 = arith.constant 0 : index
    %8 = vector.load %arg8[%c0_6, %c0_7] : memref<128x16xf32, #tpu.memory_space<vmem>>, vector<128x16xf32>
    tpu.vector_store %arg8[%c0_6, %c0_7], %7 {strides = array<i32>} : memref<128x16xf32, #tpu.memory_space<vmem>>, vector<128x16xf32>,
    %c0_i32_8 = arith.constant 0 : i32
    %9 = arith.cmpi eq, %arg2, %c0_i32_8 : i32
    %10 = arith.extui %9 : i1 to i32
    %c0_i32_9 = arith.constant 0 : i32
    %11 = arith.cmpi ne, %10, %c0_i32_9 : i32
    scf.if %11 {
      %c0_10 = arith.constant 0 : index
      %c0_11 = arith.constant 0 : index
      %12 = vector.load %arg8[%c0_10, %c0_11] : memref<128x16xf32, #tpu.memory_space<vmem>>, vector<128x16xf32>
      %c0_12 = arith.constant 0 : index
      %c0_13 = arith.constant 0 : index
      %13 = vector.load %arg5[%c0_12, %c0_13] : memref<128x16xf32, #tpu.memory_space<vmem>>, vector<128x16xf32>
      tpu.vector_store %arg5[%c0_12, %c0_13], %12 {strides = array<i32>} : memref<128x16xf32, #tpu.memory_space<vmem>>, vector<128x16xf32>,
      %cst_14 = arith.constant dense<0.000000e+00> : vector<16xf32>
      %14 = vector.multi_reduction <add>, %12, %cst_14 [0] : vector<128x16xf32> to vector<16xf32>
      %15 = vector.shape_cast %14 : vector<16xf32> to vector<1x16xf32>
      %16 = vector.shape_cast %15 : vector<1x16xf32> to vector<1x1x16xf32>
      %c0_15 = arith.constant 0 : index
      %c0_16 = arith.constant 0 : index
      %c0_17 = arith.constant 0 : index
      %17 = vector.load %arg6[%c0_15, %c0_16, %c0_17] : memref<1x1x16xf32, #tpu.memory_space<vmem>>, vector<1x1x16xf32>
      tpu.vector_store %arg6[%c0_15, %c0_16, %c0_17], %16 {strides = array<i32>} : memref<1x1x16xf32, #tpu.memory_space<vmem>>, vector<1x1x16xf32>,
      %18 = arith.mulf %12, %12 : vector<128x16xf32>
      %cst_18 = arith.constant dense<0.000000e+00> : vector<16xf32>
      %19 = vector.multi_reduction <add>, %18, %cst_18 [0] : vector<128x16xf32> to vector<16xf32>
      %20 = vector.shape_cast %19 : vector<16xf32> to vector<1x16xf32>
      %21 = vector.shape_cast %20 : vector<1x16xf32> to vector<1x1x16xf32>
      %c0_19 = arith.constant 0 : index
      %c0_20 = arith.constant 0 : index
      %c0_21 = arith.constant 0 : index
      %22 = vector.load %arg7[%c0_19, %c0_20, %c0_21] : memref<1x1x16xf32, #tpu.memory_space<vmem>>, vector<1x1x16xf32>
      tpu.vector_store %arg7[%c0_19, %c0_20, %c0_21], %21 {strides = array<i32>} : memref<1x1x16xf32, #tpu.memory_space<vmem>>, vector<1x1x16xf32>,
    } else {
    }
    return
  }
  func.func @transform_0(%arg0: i32, %arg1: i32, %arg2: i32) -> (i32, i32) {
    %c0_i32 = arith.constant 0 : i32
    return %arg0, %arg2 : i32, i32
  }
  func.func @transform_1(%arg0: i32, %arg1: i32, %arg2: i32) -> (i32, i32) {
    %c0_i32 = arith.constant 0 : i32
    return %arg2, %arg1 : i32, i32
  }
  func.func @transform_2(%arg0: i32, %arg1: i32, %arg2: i32) -> (i32, i32) {
    %c0_i32 = arith.constant 0 : i32
    return %arg0, %arg1 : i32, i32
  }
  func.func @transform_3(%arg0: i32, %arg1: i32, %arg2: i32) -> (i32, i32, i32) {
    %c0_i32 = arith.constant 0 : i32
    %c0_i32_0 = arith.constant 0 : i32
    return %arg0, %c0_i32, %arg1 : i32, i32, i32
  }
  func.func @transform_4(%arg0: i32, %arg1: i32, %arg2: i32) -> (i32, i32, i32) {
    %c0_i32 = arith.constant 0 : i32
    %c0_i32_0 = arith.constant 0 : i32
    return %arg0, %c0_i32, %arg1 : i32, i32, i32
  }
}

module attributes {stable_mosaic.version = 11 : i64} {
  func.func @_matmul_stats_kernel(%arg0: i32, %arg1: i32, %arg2: i32, %arg3: memref<128x192xbf16, #tpu.memory_space<vmem>>, %arg4: memref<192x16xbf16, #tpu.memory_space<vmem>>, %arg5: memref<128x16xf32, #tpu.memory_space<vmem>>, %arg6: memref<1x1x16xf32, #tpu.memory_space<vmem>>, %arg7: memref<1x1x16xf32, #tpu.memory_space<vmem>>, %arg8: memref<128x16xf32, #tpu.memory_space<vmem>>) attributes {dimension_semantics = [#tpu.dimension_semantics<parallel>, #tpu.dimension_semantics<parallel>, #tpu.dimension_semantics<arbitrary>], iteration_bounds = array<i64: 1, 1, 1>, scalar_prefetch = 0 : i64, scratch_operands = 1 : i64, tpu.core_type = #tpu.core_type<tc>, window_params = [{transform_indices = @transform_0, window_bounds = array<i64: 128, 192>}, {transform_indices = @transform_1, window_bounds = array<i64: 192, 16>}, {transform_indices = @transform_2, window_bounds = array<i64: 128, 16>}, {transform_indices = @transform_3, window_bounds = array<i64: 1, 1, 16>}, {transform_indices = @transform_4, window_bounds = array<i64: 1, 1, 16>}]} {
    %c0_i32 = arith.constant 0 : i32
    %0 = arith.cmpi eq, %arg2, %c0_i32 : i32
    %1 = arith.extui %0 : i1 to i32
    %c0_i32_0 = arith.constant 0 : i32
    %2 = arith.cmpi ne, %1, %c0_i32_0 : i32
    scf.if %2 {
      %cst_10 = arith.constant 0.000000e+00 : f32
      %12 = vector.broadcast %cst_10 : f32 to vector<128x16xf32>
      %c0_11 = arith.constant 0 : index
      %c0_12 = arith.constant 0 : index
      %13 = vector.load %arg8[%c0_11, %c0_12] : memref<128x16xf32, #tpu.memory_space<vmem>>, vector<128x16xf32>
      tpu.vector_store %arg8[%c0_11, %c0_12], %12 {strides = array<i32>} : memref<128x16xf32, #tpu.memory_space<vmem>>, vector<128x16xf32>,
    } else {
    }
    %c0 = arith.constant 0 : index
    %c0_1 = arith.constant 0 : index
    %3 = vector.load %arg8[%c0, %c0_1] : memref<128x16xf32, #tpu.memory_space<vmem>>, vector<128x16xf32>
    %c0_2 = arith.constant 0 : index
    %c0_3 = arith.constant 0 : index
    %4 = vector.load %arg3[%c0_2, %c0_3] : memref<128x192xbf16, #tpu.memory_space<vmem>>, vector<128x192xbf16>
    %c0_4 = arith.constant 0 : index
    %c0_5 = arith.constant 0 : index
    %5 = vector.load %arg4[%c0_4, %c0_5] : memref<192x16xbf16, #tpu.memory_space<vmem>>, vector<192x16xbf16>
    %cst = arith.constant dense<0.000000e+00> : vector<128x16xf32>
    %6 = tpu.matmul %4, %5, %cst {dimension_numbers = #tpu.dot_dimension_numbers<[1], [0], [0], [1], [0, 0, 1, 1], [], []>} : vector<128x192xbf16>, vector<192x16xbf16>, vector<128x16xf32> -> vector<128x16xf32>
    %7 = arith.addf %3, %6 : vector<128x16xf32>
    %c0_6 = arith.constant 0 : index
    %c0_7 = arith.constant 0 : index
    %8 = vector.load %arg8[%c0_6, %c0_7] : memref<128x16xf32, #tpu.memory_space<vmem>>, vector<128x16xf32>
    tpu.vector_store %arg8[%c0_6, %c0_7], %7 {strides = array<i32>} : memref<128x16xf32, #tpu.memory_space<vmem>>, vector<128x16xf32>,
    %c0_i32_8 = arith.constant 0 : i32
    %9 = arith.cmpi eq, %arg2, %c0_i32_8 : i32
    %10 = arith.extui %9 : i1 to i32
    %c0_i32_9 = arith.constant 0 : i32
    %11 = arith.cmpi ne, %10, %c0_i32_9 : i32
    scf.if %11 {
      %c0_10 = arith.constant 0 : index
      %c0_11 = arith.constant 0 : index
      %12 = vector.load %arg8[%c0_10, %c0_11] : memref<128x16xf32, #tpu.memory_space<vmem>>, vector<128x16xf32>
      %c0_12 = arith.constant 0 : index
      %c0_13 = arith.constant 0 : index
      %13 = vector.load %arg5[%c0_12, %c0_13] : memref<128x16xf32, #tpu.memory_space<vmem>>, vector<128x16xf32>
      tpu.vector_store %arg5[%c0_12, %c0_13], %12 {strides = array<i32>} : memref<128x16xf32, #tpu.memory_space<vmem>>, vector<128x16xf32>,
      %cst_14 = arith.constant dense<0.000000e+00> : vector<16xf32>
      %14 = vector.multi_reduction <add>, %12, %cst_14 [0] : vector<128x16xf32> to vector<16xf32>
      %15 = vector.shape_cast %14 : vector<16xf32> to vector<1x16xf32>
      %16 = vector.shape_cast %15 : vector<1x16xf32> to vector<1x1x16xf32>
      %c0_15 = arith.constant 0 : index
      %c0_16 = arith.constant 0 : index
      %c0_17 = arith.constant 0 : index
      %17 = vector.load %arg6[%c0_15, %c0_16, %c0_17] : memref<1x1x16xf32, #tpu.memory_space<vmem>>, vector<1x1x16xf32>
      tpu.vector_store %arg6[%c0_15, %c0_16, %c0_17], %16 {strides = array<i32>} : memref<1x1x16xf32, #tpu.memory_space<vmem>>, vector<1x1x16xf32>,
      %18 = arith.mulf %12, %12 : vector<128x16xf32>
      %cst_18 = arith.constant dense<0.000000e+00> : vector<16xf32>
      %19 = vector.multi_reduction <add>, %18, %cst_18 [0] : vector<128x16xf32> to vector<16xf32>
      %20 = vector.shape_cast %19 : vector<16xf32> to vector<1x16xf32>
      %21 = vector.shape_cast %20 : vector<1x16xf32> to vector<1x1x16xf32>
      %c0_19 = arith.constant 0 : index
      %c0_20 = arith.constant 0 : index
      %c0_21 = arith.constant 0 : index
      %22 = vector.load %arg7[%c0_19, %c0_20, %c0_21] : memref<1x1x16xf32, #tpu.memory_space<vmem>>, vector<1x1x16xf32>
      tpu.vector_store %arg7[%c0_19, %c0_20, %c0_21], %21 {strides = array<i32>} : memref<1x1x16xf32, #tpu.memory_space<vmem>>, vector<1x1x16xf32>,
    } else {
    }
    return
  }
  func.func @transform_0(%arg0: i32, %arg1: i32, %arg2: i32) -> (i32, i32) {
    %c0_i32 = arith.constant 0 : i32
    return %arg0, %arg2 : i32, i32
  }
  func.func @transform_1(%arg0: i32, %arg1: i32, %arg2: i32) -> (i32, i32) {
    %c0_i32 = arith.constant 0 : i32
    return %arg2, %arg1 : i32, i32
  }
  func.func @transform_2(%arg0: i32, %arg1: i32, %arg2: i32) -> (i32, i32) {
    %c0_i32 = arith.constant 0 : i32
    return %arg0, %arg1 : i32, i32
  }
  func.func @transform_3(%arg0: i32, %arg1: i32, %arg2: i32) -> (i32, i32, i32) {
    %c0_i32 = arith.constant 0 : i32
    %c0_i32_0 = arith.constant 0 : i32
    return %arg0, %c0_i32, %arg1 : i32, i32, i32
  }
  func.func @transform_4(%arg0: i32, %arg1: i32, %arg2: i32) -> (i32, i32, i32) {
    %c0_i32 = arith.constant 0 : i32
    %c0_i32_0 = arith.constant 0 : i32
    return %arg0, %c0_i32, %arg1 : i32, i32, i32
  }
}

module attributes {stable_mosaic.version = 11 : i64} {
  func.func @_matmul_stats_kernel(%arg0: i32, %arg1: i32, %arg2: i32, %arg3: memref<128x288xbf16, #tpu.memory_space<vmem>>, %arg4: memref<288x16xbf16, #tpu.memory_space<vmem>>, %arg5: memref<128x16xf32, #tpu.memory_space<vmem>>, %arg6: memref<1x1x16xf32, #tpu.memory_space<vmem>>, %arg7: memref<1x1x16xf32, #tpu.memory_space<vmem>>, %arg8: memref<128x16xf32, #tpu.memory_space<vmem>>) attributes {dimension_semantics = [#tpu.dimension_semantics<parallel>, #tpu.dimension_semantics<parallel>, #tpu.dimension_semantics<arbitrary>], iteration_bounds = array<i64: 1, 1, 1>, scalar_prefetch = 0 : i64, scratch_operands = 1 : i64, tpu.core_type = #tpu.core_type<tc>, window_params = [{transform_indices = @transform_0, window_bounds = array<i64: 128, 288>}, {transform_indices = @transform_1, window_bounds = array<i64: 288, 16>}, {transform_indices = @transform_2, window_bounds = array<i64: 128, 16>}, {transform_indices = @transform_3, window_bounds = array<i64: 1, 1, 16>}, {transform_indices = @transform_4, window_bounds = array<i64: 1, 1, 16>}]} {
    %c0_i32 = arith.constant 0 : i32
    %0 = arith.cmpi eq, %arg2, %c0_i32 : i32
    %1 = arith.extui %0 : i1 to i32
    %c0_i32_0 = arith.constant 0 : i32
    %2 = arith.cmpi ne, %1, %c0_i32_0 : i32
    scf.if %2 {
      %cst_10 = arith.constant 0.000000e+00 : f32
      %12 = vector.broadcast %cst_10 : f32 to vector<128x16xf32>
      %c0_11 = arith.constant 0 : index
      %c0_12 = arith.constant 0 : index
      %13 = vector.load %arg8[%c0_11, %c0_12] : memref<128x16xf32, #tpu.memory_space<vmem>>, vector<128x16xf32>
      tpu.vector_store %arg8[%c0_11, %c0_12], %12 {strides = array<i32>} : memref<128x16xf32, #tpu.memory_space<vmem>>, vector<128x16xf32>,
    } else {
    }
    %c0 = arith.constant 0 : index
    %c0_1 = arith.constant 0 : index
    %3 = vector.load %arg8[%c0, %c0_1] : memref<128x16xf32, #tpu.memory_space<vmem>>, vector<128x16xf32>
    %c0_2 = arith.constant 0 : index
    %c0_3 = arith.constant 0 : index
    %4 = vector.load %arg3[%c0_2, %c0_3] : memref<128x288xbf16, #tpu.memory_space<vmem>>, vector<128x288xbf16>
    %c0_4 = arith.constant 0 : index
    %c0_5 = arith.constant 0 : index
    %5 = vector.load %arg4[%c0_4, %c0_5] : memref<288x16xbf16, #tpu.memory_space<vmem>>, vector<288x16xbf16>
    %cst = arith.constant dense<0.000000e+00> : vector<128x16xf32>
    %6 = tpu.matmul %4, %5, %cst {dimension_numbers = #tpu.dot_dimension_numbers<[1], [0], [0], [1], [0, 0, 1, 1], [], []>} : vector<128x288xbf16>, vector<288x16xbf16>, vector<128x16xf32> -> vector<128x16xf32>
    %7 = arith.addf %3, %6 : vector<128x16xf32>
    %c0_6 = arith.constant 0 : index
    %c0_7 = arith.constant 0 : index
    %8 = vector.load %arg8[%c0_6, %c0_7] : memref<128x16xf32, #tpu.memory_space<vmem>>, vector<128x16xf32>
    tpu.vector_store %arg8[%c0_6, %c0_7], %7 {strides = array<i32>} : memref<128x16xf32, #tpu.memory_space<vmem>>, vector<128x16xf32>,
    %c0_i32_8 = arith.constant 0 : i32
    %9 = arith.cmpi eq, %arg2, %c0_i32_8 : i32
    %10 = arith.extui %9 : i1 to i32
    %c0_i32_9 = arith.constant 0 : i32
    %11 = arith.cmpi ne, %10, %c0_i32_9 : i32
    scf.if %11 {
      %c0_10 = arith.constant 0 : index
      %c0_11 = arith.constant 0 : index
      %12 = vector.load %arg8[%c0_10, %c0_11] : memref<128x16xf32, #tpu.memory_space<vmem>>, vector<128x16xf32>
      %c0_12 = arith.constant 0 : index
      %c0_13 = arith.constant 0 : index
      %13 = vector.load %arg5[%c0_12, %c0_13] : memref<128x16xf32, #tpu.memory_space<vmem>>, vector<128x16xf32>
      tpu.vector_store %arg5[%c0_12, %c0_13], %12 {strides = array<i32>} : memref<128x16xf32, #tpu.memory_space<vmem>>, vector<128x16xf32>,
      %cst_14 = arith.constant dense<0.000000e+00> : vector<16xf32>
      %14 = vector.multi_reduction <add>, %12, %cst_14 [0] : vector<128x16xf32> to vector<16xf32>
      %15 = vector.shape_cast %14 : vector<16xf32> to vector<1x16xf32>
      %16 = vector.shape_cast %15 : vector<1x16xf32> to vector<1x1x16xf32>
      %c0_15 = arith.constant 0 : index
      %c0_16 = arith.constant 0 : index
      %c0_17 = arith.constant 0 : index
      %17 = vector.load %arg6[%c0_15, %c0_16, %c0_17] : memref<1x1x16xf32, #tpu.memory_space<vmem>>, vector<1x1x16xf32>
      tpu.vector_store %arg6[%c0_15, %c0_16, %c0_17], %16 {strides = array<i32>} : memref<1x1x16xf32, #tpu.memory_space<vmem>>, vector<1x1x16xf32>,
      %18 = arith.mulf %12, %12 : vector<128x16xf32>
      %cst_18 = arith.constant dense<0.000000e+00> : vector<16xf32>
      %19 = vector.multi_reduction <add>, %18, %cst_18 [0] : vector<128x16xf32> to vector<16xf32>
      %20 = vector.shape_cast %19 : vector<16xf32> to vector<1x16xf32>
      %21 = vector.shape_cast %20 : vector<1x16xf32> to vector<1x1x16xf32>
      %c0_19 = arith.constant 0 : index
      %c0_20 = arith.constant 0 : index
      %c0_21 = arith.constant 0 : index
      %22 = vector.load %arg7[%c0_19, %c0_20, %c0_21] : memref<1x1x16xf32, #tpu.memory_space<vmem>>, vector<1x1x16xf32>
      tpu.vector_store %arg7[%c0_19, %c0_20, %c0_21], %21 {strides = array<i32>} : memref<1x1x16xf32, #tpu.memory_space<vmem>>, vector<1x1x16xf32>,
    } else {
    }
    return
  }
  func.func @transform_0(%arg0: i32, %arg1: i32, %arg2: i32) -> (i32, i32) {
    %c0_i32 = arith.constant 0 : i32
    return %arg0, %arg2 : i32, i32
  }
  func.func @transform_1(%arg0: i32, %arg1: i32, %arg2: i32) -> (i32, i32) {
    %c0_i32 = arith.constant 0 : i32
    return %arg2, %arg1 : i32, i32
  }
  func.func @transform_2(%arg0: i32, %arg1: i32, %arg2: i32) -> (i32, i32) {
    %c0_i32 = arith.constant 0 : i32
    return %arg0, %arg1 : i32, i32
  }
  func.func @transform_3(%arg0: i32, %arg1: i32, %arg2: i32) -> (i32, i32, i32) {
    %c0_i32 = arith.constant 0 : i32
    %c0_i32_0 = arith.constant 0 : i32
    return %arg0, %c0_i32, %arg1 : i32, i32, i32
  }
  func.func @transform_4(%arg0: i32, %arg1: i32, %arg2: i32) -> (i32, i32, i32) {
    %c0_i32 = arith.constant 0 : i32
    %c0_i32_0 = arith.constant 0 : i32
    return %arg0, %c0_i32, %arg1 : i32, i32, i32
  }
}

module attributes {stable_mosaic.version = 11 : i64} {
  func.func @_scale_shift_relu_kernel(%arg0: i32, %arg1: i32, %arg2: memref<512x16xf32, #tpu.memory_space<vmem>>, %arg3: memref<1x16xf32, #tpu.memory_space<vmem>>, %arg4: memref<1x16xf32, #tpu.memory_space<vmem>>, %arg5: memref<512x16xbf16, #tpu.memory_space<vmem>>) attributes {dimension_semantics = [#tpu.dimension_semantics<parallel>, #tpu.dimension_semantics<parallel>], iteration_bounds = array<i64: 1, 1>, scalar_prefetch = 0 : i64, scratch_operands = 0 : i64, tpu.core_type = #tpu.core_type<tc>, window_params = [{transform_indices = @transform_0, window_bounds = array<i64: 512, 16>}, {transform_indices = @transform_1, window_bounds = array<i64: 1, 16>}, {transform_indices = @transform_2, window_bounds = array<i64: 1, 16>}, {transform_indices = @transform_3, window_bounds = array<i64: 512, 16>}]} {
    %c0 = arith.constant 0 : index
    %c0_0 = arith.constant 0 : index
    %0 = vector.load %arg2[%c0, %c0_0] : memref<512x16xf32, #tpu.memory_space<vmem>>, vector<512x16xf32>
    %c0_1 = arith.constant 0 : index
    %c0_2 = arith.constant 0 : index
    %1 = vector.load %arg3[%c0_1, %c0_2] : memref<1x16xf32, #tpu.memory_space<vmem>>, vector<1x16xf32>
    %2 = vector.broadcast %1 : vector<1x16xf32> to vector<512x16xf32>
    %3 = arith.mulf %0, %2 : vector<512x16xf32>
    %c0_3 = arith.constant 0 : index
    %c0_4 = arith.constant 0 : index
    %4 = vector.load %arg4[%c0_3, %c0_4] : memref<1x16xf32, #tpu.memory_space<vmem>>, vector<1x16xf32>
    %5 = vector.broadcast %4 : vector<1x16xf32> to vector<512x16xf32>
    %6 = arith.addf %3, %5 : vector<512x16xf32>
    %cst = arith.constant 0.000000e+00 : f32
    %7 = vector.broadcast %cst : f32 to vector<512x16xf32>
    %8 = arith.maximumf %6, %7 : vector<512x16xf32>
    %9 = arith.truncf %8 : vector<512x16xf32> to vector<512x16xbf16>
    %c0_5 = arith.constant 0 : index
    %c0_6 = arith.constant 0 : index
    %10 = vector.load %arg5[%c0_5, %c0_6] : memref<512x16xbf16, #tpu.memory_space<vmem>>, vector<512x16xbf16>
    tpu.vector_store %arg5[%c0_5, %c0_6], %9 {strides = array<i32>} : memref<512x16xbf16, #tpu.memory_space<vmem>>, vector<512x16xbf16>,
    return
  }
  func.func @transform_0(%arg0: i32, %arg1: i32) -> (i32, i32) {
    %c0_i32 = arith.constant 0 : i32
    return %arg0, %arg1 : i32, i32
  }
  func.func @transform_1(%arg0: i32, %arg1: i32) -> (i32, i32) {
    %c0_i32 = arith.constant 0 : i32
    %c0_i32_0 = arith.constant 0 : i32
    return %c0_i32, %arg1 : i32, i32
  }
  func.func @transform_2(%arg0: i32, %arg1: i32) -> (i32, i32) {
    %c0_i32 = arith.constant 0 : i32
    %c0_i32_0 = arith.constant 0 : i32
    return %c0_i32, %arg1 : i32, i32
  }
  func.func @transform_3(%arg0: i32, %arg1: i32) -> (i32, i32) {
    %c0_i32 = arith.constant 0 : i32
    return %arg0, %arg1 : i32, i32
  }
}

</mosaic_0001>

<llo_original>
// kernel: identity_generator_forward.13
$region0: #{identity_generator_forward.13}
  #allocation0 [shape = 'u32[]', space=smem, size = 0x4, offset = 0x4, fixed_abs, tag = 'smem constant byte address 0x4 - core index']
  #allocation1 [shape = 'u32[72,128]{1,0:T(1,128)}', space=vmem, size = 0x9000, scoped, tag = 'internal scratch']
  %s0 = inlined_call_operand.vmem [shape: f32[2,1024], index: 0, kind: input, shape index: {}]
  %s1 = inlined_call_operand.vmem [shape: f32[1,1024], index: 1, kind: input, shape index: {}]
  %s2 = inlined_call_operand.vmem [shape: f32[1,1024], index: 2, kind: input, shape index: {}]
  %s3 = inlined_call_operand.vmem [shape: bf16[2,1024], index: 3, kind: output, shape index: {}]
  %s4 = sld [smem:[#allocation0]]
  $region22: #{identity_generator_forward.13} parent=0
    _
  %s6 = ssub.s32 1, %s4
  %s7 = scalar_select 0, %s6, %s4
  // Predicated region
  $region2: #{identity_generator_forward.13} parent=0 // pred_check
    _
  $region3: #{identity_generator_forward.13} parent=0 // pred_check_branch
    %9 = sbr.rel (0) target = $region5
  $region4: #{identity_generator_forward.13} parent=0 // pred_region
    _
  $region5: #{identity_generator_forward.13} parent=0 // pred_fallthru
    _
  // Predicated region
  $region6: #{identity_generator_forward.13} parent=0 // pred_check
    _
  $region7: #{identity_generator_forward.13} parent=0 // pred_check_branch
    %11 = sbr.rel (0) target = $region9
  $region8: #{identity_generator_forward.13} parent=0 // pred_region
    _
  $region9: #{identity_generator_forward.13} parent=0 // pred_fallthru
    _
  // Predicated region
  $region10: #{identity_generator_forward.13} parent=0 // pred_check
    _
  $region11: #{identity_generator_forward.13} parent=0 // pred_check_branch
    %13 = sbr.rel (0) target = $region13
  $region12: #{identity_generator_forward.13} parent=0 // pred_region
    _
  $region13: #{identity_generator_forward.13} parent=0 // pred_fallthru
    _
  %v14 = vld [vmem:[%s0] sm:$0xff]
  %v15 = vld [vmem:[%s0 + $0x8] sm:$0xff]
  %v16 = vld [vmem:[%s1] sm:$0xff]
  %v18 = vperm.slane %v16, 0
  %v19 = vperm.slane %v16, 1
  %v20 = vperm.slane %v16, 2
  %v21 = vperm.slane %v16, 3
  %v22 = vperm.slane %v16, 4
  %v23 = vperm.slane %v16, 5
  %v24 = vperm.slane %v16, 6
  %v25 = vperm.slane %v16, 7
  %v26 = vrot.slane %v19, 6
  %v27 = vrot.slane %v20, 4
  %v28 = vrot.slane %v21, 2
  %v29 = vrot.slane %v23, 6
  %v30 = vrot.slane %v24, 4
  %v31 = vrot.slane %v25, 2
  %vm32 = vcmask 1041408
  %v33 = vsel %vm32, %v18, %v26
  %vm34 = vcmask 1045508
  %v35 = vsel %vm34, %v27, %v28
  %vm36 = vcmask 1043456
  %v37 = vsel %vm36, %v33, %v35
  %v38 = vsel %vm32, %v22, %v29
  %v39 = vsel %vm34, %v30, %v31
  %v40 = vsel %vm36, %v38, %v39
  %v43 = vmul.f32 %v14, %v37
  %v44 = vmul.f32 %v15, %v40
  %v45 = vld [vmem:[%s2] sm:$0xff]
  %v47 = vperm.slane %v45, 0
  %v48 = vperm.slane %v45, 1
  %v49 = vperm.slane %v45, 2
  %v50 = vperm.slane %v45, 3
  %v51 = vperm.slane %v45, 4
  %v52 = vperm.slane %v45, 5
  %v53 = vperm.slane %v45, 6
  %v54 = vperm.slane %v45, 7
  %v55 = vrot.slane %v48, 6
  %v56 = vrot.slane %v49, 4
  %v57 = vrot.slane %v50, 2
  %v58 = vrot.slane %v52, 6
  %v59 = vrot.slane %v53, 4
  %v60 = vrot.slane %v54, 2
  %v61 = vsel %vm32, %v47, %v55
  %v62 = vsel %vm34, %v56, %v57
  %v63 = vsel %vm36, %v61, %v62
  %v64 = vsel %vm32, %v51, %v58
  %v65 = vsel %vm34, %v59, %v60
  %v66 = vsel %vm36, %v64, %v65
  %v69 = vadd.f32 %v43, %v63
  %v70 = vadd.f32 %v44, %v66
  %v71 = vmax.f32 %v69, 0.0
  %v72 = vmax.f32 %v70, 0.0
  %75 = vst [vmem:[#allocation1] ss:$4 sm:$0xff] %v71
  %s76 = scalar_lea.vmem [#allocation1], 32
  %77 = vst [vmem:[%s76] ss:$4 sm:$0xff] %v72
  %v78 = vld.sshfl [vmem:[#allocation1] sm:$0xff pattern:$0x73625140]
  %v79 = vld.sshfl [vmem:[#allocation1 + $0x8] sm:$0xff pattern:$0x73625140]
  %v80 = vld.sshfl [vmem:[#allocation1 + $0x10] sm:$0xff pattern:$0x73625140]
  %v81 = vld.sshfl [vmem:[#allocation1 + $0x18] sm:$0xff pattern:$0x73625140]
  %v82 = vld.sshfl [vmem:[#allocation1 + $0x20] sm:$0xff pattern:$0x73625140]
  %v83 = vld.sshfl [vmem:[#allocation1 + $0x28] sm:$0xff pattern:$0x73625140]
  %v84 = vld.sshfl [vmem:[#allocation1 + $0x30] sm:$0xff pattern:$0x73625140]
  %v85 = vld.sshfl [vmem:[#allocation1 + $0x38] sm:$0xff pattern:$0x73625140]
  %v94 = vpack.c.bf16 %v79, %v78
  %v95 = vpack.c.bf16 %v81, %v80
  %v96 = vpack.c.bf16 %v83, %v82
  %v97 = vpack.c.bf16 %v85, %v84
  %v102 = vrot.slane %v94, 3
  %v103 = vrot.slane %v95, 6
  %v104 = vrot.slane %v95, 1
  %v105 = vrot.slane %v96, 4
  %v106 = vrot.slane %v96, 7
  %v107 = vrot.slane %v97, 2
  %v108 = vrot.slane %v97, 5
  %vm109 = vcmask 1040384
  %v112 = vsel %vm109, %v94, %v102
  %vm113 = vcmask 1042434
  %v116 = vsel %vm113, %v103, %v104
  %v117 = vsel %vm32, %v112, %v116
  %vm118 = vcmask 1044484
  %v121 = vsel %vm118, %v105, %v106
  %vm122 = vcmask 1046534
  %v125 = vsel %vm122, %v107, %v108
  %v126 = vsel %vm34, %v121, %v125
  %v127 = vsel %vm36, %v117, %v126
  %129 = vst [vmem:[%s3] sm:$0xff] %v127
  // Predicated region
  $region14: #{identity_generator_forward.13} parent=0 // pred_check
    _
  $region15: #{identity_generator_forward.13} parent=0 // pred_check_branch
    %131 = sbr.rel (0) target = $region17
  $region16: #{identity_generator_forward.13} parent=0 // pred_region
    _
  $region17: #{identity_generator_forward.13} parent=0 // pred_fallthru
    _
  // Predicated region
  $region18: #{identity_generator_forward.13} parent=0 // pred_check
    _
  $region19: #{identity_generator_forward.13} parent=0 // pred_check_branch
    %133 = sbr.rel (0) target = $region21
  $region20: #{identity_generator_forward.13} parent=0 // pred_region
    _
  $region21: #{identity_generator_forward.13} parent=0 // pred_fallthru
    _

// kernel: identity_generator_forward.12
$region0: #{identity_generator_forward.12}
  #allocation0 [shape = 'u32[]', space=smem, size = 0x4, offset = 0x4, fixed_abs, tag = 'smem constant byte address 0x4 - core index']
  #allocation1 [shape = 'u32[72,128]{1,0:T(1,128)}', space=vmem, size = 0x9000, scoped, tag = 'internal scratch']
  #allocation2 [shape = 'f32[2,256]{1,0:T(2,128)}', space=vmem, size = 0x800, scoped, tag = 'scratch operand']
  %s0 = inlined_call_operand.vmem [shape: bf16[2,32], index: 0, kind: input, shape index: {}]
  %s1 = inlined_call_operand.hbm [shape: bf16[32,1024], index: 1, kind: input, shape index: {}]
  %s2 = inlined_call_operand.vmem [shape: f32[2,1024], index: 2, kind: output, shape index: {0}]
  %s3 = inlined_call_operand.vmem [shape: f32[1,1,1024], index: 3, kind: output, shape index: {1}]
  %s4 = inlined_call_operand.vmem [shape: f32[1,1,1024], index: 4, kind: output, shape index: {2}]
  %5 = xla_tuple %s2, %s3, %s4
  %s6 = sld [smem:[#allocation0]]
  $region69: #{identity_generator_forward.12} parent=0
    _
  %s8 = ssub.s32 1, %s6
  %s9 = scalar_select 0, %s8, %s6
  $region1: #{identity_generator_forward.12} parent=0
    #allocation3 [shape = 'u8[32768]{0}', space=vmem, size = 0x8000, scoped, tag = 'input window, operand 1']
    #allocation4 [shape = 's32[2]{0}', space=sflag, size = 0x8, scoped, tag = 'scoped memory for identity_generator_forward.12']
    %10 = vsyncpa [#allocation4], 0
    %s11 = scalar_lea.sflag [#allocation4], 1
    %12 = vsyncpa %s11, 0
    loop: start=0, step=1, limit=6
    $region2: #{identity_generator_forward.12} parent=1 // loop_pre_header
      _
    $region3: #{identity_generator_forward.12} parent=1 // loop_header
      %s14 = sphi 0, %s18
      %p15 = scmp.ge.s32.totalorder %s14, 6
      %s21 = sphi 0, %s40
      %s22 = sphi 0, %s36
      %s23 = sphi 0, %s32
      %s24 = sphi 0, %s21
      %s25 = sphi 0, %s22
      %s26 = sphi 0, %s23
      %s27 = sphi 0, %s24
      %s28 = sphi 0, %s25
      %s29 = sphi 0, %s26
      %s45 = sphi 0, %s47
      %s48 = sphi 0, %s45
      %s49 = sphi 0, %s48
      %s65 = sphi 0, %s49
      %s73 = sphi 0, %s75
      %s76 = sphi 0, %s73
      %s77 = sphi 0, %s76
      %s93 = sphi 0, %s77
      %s101 = sphi 0, %s103
      %s104 = sphi 0, %s101
      %s105 = sphi 0, %s104
      %s121 = sphi 0, %s105
      %s129 = sphi 0, %s131
      %s132 = sphi 0, %s129
      %s133 = sphi 0, %s132
      %s149 = sphi 0, %s133
      %s157 = sphi 0, %s159
      %s160 = sphi 0, %s157
      %s161 = sphi 0, %s160
      %s177 = sphi 0, %s161
    $region4: #{identity_generator_forward.12} parent=1 // loop_header_branch
      %17 = sbr.rel (%p15) target = $region8
    $region5: #{identity_generator_forward.12} parent=1 // loop_body
      %s19 = ssub.s32 %s14, 1
      %s20 = ssub.s32 %s14, 2
      %s30 = sadd.s32 1, %s23
      %p31 = scmp.ge.s32.totalorder %s30, 1
      %s32 = scalar_select %p31, 0, %s30
      %s33 = sadd.s32 1, %s22
      %s34 = scalar_select %p31, %s33, %s22
      %p35 = scmp.ge.s32.totalorder %s34, 4
      %s36 = scalar_select %p35, 0, %s34
      %s37 = sadd.s32 1, %s21
      %s38 = scalar_select %p35, %s37, %s21
      %p39 = scmp.ge.s32.totalorder %s38, 1
      %s40 = scalar_select %p39, 0, %s38
      %s41 = ssub.s32 %s21, %s40
      %s42 = ssub.s32 %s23, %s32
      %s43 = sor.u32 %s41, %s42
      %p44 = scmp.eq.s32.totalorder %s43, 0
      %s46 = sadd.s32 %s45, 1
      %s47 = scalar_select %p44, %s45, %s46
      %p50 = pneg %p44
      %p51 = scmp.eq.s32.totalorder %s14, 3
      %p52 = por %p50, %p51
      %p53 = scmp.ne.s32.totalorder %s45, %s48
      %p54 = scmp.eq.s32.totalorder %s14, 0
      %p55 = por %p53, %p54
      %p56 = scmp.ne.s32.totalorder %s45, %s48
      %p57 = scmp.eq.s32.totalorder %s19, 3
      %p58 = por %p56, %p57
      %p59 = scmp.ne.s32.totalorder %s48, %s49
      %p60 = scmp.eq.s32.totalorder %s19, 0
      %p61 = por %p59, %p60
      %p62 = scmp.ne.s32.totalorder %s48, %s49
      %p63 = scmp.eq.s32.totalorder %s20, 3
      %p64 = por %p62, %p63
      %p66 = scmp.ne.s32.totalorder %s49, %s65
      %p67 = scmp.eq.s32.totalorder %s20, 0
      %p68 = por %p66, %p67
      %s69 = ssub.s32 %s23, %s32
      %s70 = ssub.s32 %s22, %s36
      %s71 = sor.u32 %s69, %s70
      %p72 = scmp.eq.s32.totalorder %s71, 0
      %s74 = sadd.s32 %s73, 1
      %s75 = scalar_select %p72, %s73, %s74
      %p78 = pneg %p72
      %p79 = scmp.eq.s32.totalorder %s14, 3
      %p80 = por %p78, %p79
      %p81 = scmp.ne.s32.totalorder %s73, %s76
      %p82 = scmp.eq.s32.totalorder %s14, 0
      %p83 = por %p81, %p82
      %p84 = scmp.ne.s32.totalorder %s73, %s76
      %p85 = scmp.eq.s32.totalorder %s19, 3
      %p86 = por %p84, %p85
      %p87 = scmp.ne.s32.totalorder %s76, %s77
      %p88 = scmp.eq.s32.totalorder %s19, 0
      %p89 = por %p87, %p88
      %p90 = scmp.ne.s32.totalorder %s76, %s77
      %p91 = scmp.eq.s32.totalorder %s20, 3
      %p92 = por %p90, %p91
      %p94 = scmp.ne.s32.totalorder %s77, %s93
      %p95 = scmp.eq.s32.totalorder %s20, 0
      %p96 = por %p94, %p95
      %s97 = ssub.s32 %s21, %s40
      %s98 = ssub.s32 %s22, %s36
      %s99 = sor.u32 %s97, %s98
      %p100 = scmp.eq.s32.totalorder %s99, 0
      %s102 = sadd.s32 %s101, 1
      %s103 = scalar_select %p100, %s101, %s102
      %p106 = pneg %p100
      %p107 = scmp.eq.s32.totalorder %s14, 3
      %p108 = por %p106, %p107
      %p109 = scmp.ne.s32.totalorder %s101, %s104
      %p110 = scmp.eq.s32.totalorder %s14, 0
      %p111 = por %p109, %p110
      %p112 = scmp.ne.s32.totalorder %s101, %s104
      %p113 = scmp.eq.s32.totalorder %s19, 3
      %p114 = por %p112, %p113
      %p115 = scmp.ne.s32.totalorder %s104, %s105
      %p116 = scmp.eq.s32.totalorder %s19, 0
      %p117 = por %p115, %p116
      %p118 = scmp.ne.s32.totalorder %s104, %s105
      %p119 = scmp.eq.s32.totalorder %s20, 3
      %p120 = por %p118, %p119
      %p122 = scmp.ne.s32.totalorder %s105, %s121
      %p123 = scmp.eq.s32.totalorder %s20, 0
      %p124 = por %p122, %p123
      %s125 = ssub.s32 %s21, %s40
      %s126 = ssub.s32 %s22, %s36
      %s127 = sor.u32 %s125, %s126
      %p128 = scmp.eq.s32.totalorder %s127, 0
      %s130 = sadd.s32 %s129, 1
      %s131 = scalar_select %p128, %s129, %s130
      %p134 = pneg %p128
      %p135 = scmp.eq.s32.totalorder %s14, 3
      %p136 = por %p134, %p135
      %p137 = scmp.ne.s32.totalorder %s129, %s132
      %p138 = scmp.eq.s32.totalorder %s14, 0
      %p139 = por %p137, %p138
      %p140 = scmp.ne.s32.totalorder %s129, %s132
      %p141 = scmp.eq.s32.totalorder %s19, 3
      %p142 = por %p140, %p141
      %p143 = scmp.ne.s32.totalorder %s132, %s133
      %p144 = scmp.eq.s32.totalorder %s19, 0
      %p145 = por %p143, %p144
      %p146 = scmp.ne.s32.totalorder %s132, %s133
      %p147 = scmp.eq.s32.totalorder %s20, 3
      %p148 = por %p146, %p147
      %p150 = scmp.ne.s32.totalorder %s133, %s149
      %p151 = scmp.eq.s32.totalorder %s20, 0
      %p152 = por %p150, %p151
      %s153 = ssub.s32 %s21, %s40
      %s154 = ssub.s32 %s22, %s36
      %s155 = sor.u32 %s153, %s154
      %p156 = scmp.eq.s32.totalorder %s155, 0
      %s158 = sadd.s32 %s157, 1
      %s159 = scalar_select %p156, %s157, %s158
      %p162 = pneg %p156
      %p163 = scmp.eq.s32.totalorder %s14, 3
      %p164 = por %p162, %p163
      %p165 = scmp.ne.s32.totalorder %s157, %s160
      %p166 = scmp.eq.s32.totalorder %s14, 0
      %p167 = por %p165, %p166
      %p168 = scmp.ne.s32.totalorder %s157, %s160
      %p169 = scmp.eq.s32.totalorder %s19, 3
      %p170 = por %p168, %p169
      %p171 = scmp.ne.s32.totalorder %s160, %s161
      %p172 = scmp.eq.s32.totalorder %s19, 0
      %p173 = por %p171, %p172
      %p174 = scmp.ne.s32.totalorder %s160, %s161
      %p175 = scmp.eq.s32.totalorder %s20, 3
      %p176 = por %p174, %p175
      %p178 = scmp.ne.s32.totalorder %s161, %s177
      %p179 = scmp.eq.s32.totalorder %s20, 0
      %p180 = por %p178, %p179
      %p181 = scmp.le.s32.totalorder 1, %s14
      %p182 = scmp.lt.s32.totalorder %s14, 5
      %p183 = pnand %p181, %p182
      %p184 = pneg %p183
      // Predicated region
      $region9: #{identity_generator_forward.12} parent=5 // pred_check
        _
      $region10: #{identity_generator_forward.12} parent=5 // pred_check_branch
        %186 = sbr.rel (%p183) target = $region12
      $region11: #{identity_generator_forward.12} parent=5 // pred_region
        %s187 = ssub.s32 %s14, 1
        // Predicated region
        $region13: #{identity_generator_forward.12} parent=11 // pred_check
          %p188 = pneg %p61
        $region14: #{identity_generator_forward.12} parent=11 // pred_check_branch
          %190 = sbr.rel (%p188) target = $region16
        $region15: #{identity_generator_forward.12} parent=11 // pred_region
          %p191 = scmp.lt.s32.totalorder %s24, 0
          %s192 = scalar_select %p191, %s24, 0
          %p193 = scmp.lt.s32.totalorder %s26, 0
          %s194 = scalar_select %p193, %s26, 0
          %s195 = sadd.s32 %s194, %s192
          %s196 = scalar_lea.vmem %s0, %s195
        $region16: #{identity_generator_forward.12} parent=11 // pred_fallthru
          _
      $region12: #{identity_generator_forward.12} parent=5 // pred_fallthru
        _
      %p197 = scmp.lt.s32.totalorder %s14, 4
      // Predicated region
      $region17: #{identity_generator_forward.12} parent=5 // pred_check
        %p198 = pneg %p197
      $region18: #{identity_generator_forward.12} parent=5 // pred_check_branch
        %200 = sbr.rel (%p198) target = $region20
      $region19: #{identity_generator_forward.12} parent=5 // pred_region
        // Predicated region
        $region21: #{identity_generator_forward.12} parent=19 // pred_check
          %p201 = pneg %p83
        $region22: #{identity_generator_forward.12} parent=19 // pred_check_branch
          %203 = sbr.rel (%p201) target = $region24
        $region23: #{identity_generator_forward.12} parent=19 // pred_region
          %s204 = sand.u32 %s73, 1
          %s205 = scalar_lea.sflag [#allocation4], %s204
          %s206 = sand.u32 %s73, 1
          %s207 = smul.addr %s206, 32
          %s208 = scalar_lea.vmem [#allocation3], %s207
          %s209 = smul.u32 4, %s23
          %s210 = smul.u32 2, %s22
          %212 = vsyncadd %s205, 0
          %s213 = smul.addr %s209, 8
          %s214 = sadd.s32 %s210, %s213
          %s215 = smul.addr %s214, 4
          %s216 = scalar_lea.hbm %s1, %s215
          %s217 = sshll.u32 %s216, 4
          %s218 = int_to_ptr.hbm [resolvable:$true] %s217
          %s219 = sshll.u32 %s208, 4
          %s220 = int_to_ptr.vmem [resolvable:$true] %s219
          %225 = dma.hbm_to_vmem [thread:$0]  %s218, 512, %s220, %s205, 512, 128, 8
        $region24: #{identity_generator_forward.12} parent=19 // pred_fallthru
          _
      $region20: #{identity_generator_forward.12} parent=5 // pred_fallthru
        _
      %p226 = scmp.le.s32.totalorder 1, %s14
      %p227 = scmp.lt.s32.totalorder %s14, 5
      %p228 = pnand %p226, %p227
      %p229 = pneg %p228
      // Predicated region
      $region25: #{identity_generator_forward.12} parent=5 // pred_check
        _
      $region26: #{identity_generator_forward.12} parent=5 // pred_check_branch
        %231 = sbr.rel (%p228) target = $region28
      $region27: #{identity_generator_forward.12} parent=5 // pred_region
        %s232 = ssub.s32 %s14, 1
        %s233 = sand.u32 %s76, 1
        %s234 = scalar_lea.sflag [#allocation4], %s233
        %s235 = sand.u32 %s76, 1
        %s236 = smul.addr %s235, 32
        %s237 = scalar_lea.vmem [#allocation3], %s236
        // Predicated region
        $region29: #{identity_generator_forward.12} parent=27 // pred_check
          %p238 = pneg %p89
        $region30: #{identity_generator_forward.12} parent=27 // pred_check_branch
          %240 = sbr.rel (%p238) target = $region32
        $region31: #{identity_generator_forward.12} parent=27 // pred_region
          %242 = dma.done %s234, 512
        $region32: #{identity_generator_forward.12} parent=27 // pred_fallthru
          _
        %p243 = scmp.lt.s32.totalorder %s24, 0
        %s244 = scalar_select %p243, %s24, 0
        %p245 = scmp.lt.s32.totalorder %s26, 0
        %s246 = scalar_select %p245, %s26, 0
        %s247 = sadd.s32 %s246, %s244
        %s248 = scalar_lea.vmem %s0, %s247
        %p249 = pneg %p61
        %p250 = pneg %p58
        %s251 = sand.u32 %s76, 1
        %s252 = scalar_lea.sflag [#allocation4], %s251
        %s253 = sand.u32 %s76, 1
        %s254 = smul.addr %s253, 32
        %s255 = scalar_lea.vmem [#allocation3], %s254
        %p256 = pneg %p89
        %p257 = pneg %p86
        %p258 = pneg %p117
        %p259 = pneg %p114
        %s260 = smul.u32 2, %s25
        %p261 = scmp.lt.s32.totalorder %s24, 0
        %s262 = scalar_select %p261, %s24, 0
        %p263 = scmp.lt.s32.totalorder %s260, 7
        %s264 = scalar_select %p263, %s260, 7
        %s265 = smul.addr %s262, 8
        %s266 = sadd.s32 %s264, %s265
        %s267 = smul.addr %s266, 2
        %s268 = scalar_lea.vmem %s2, %s267
        %p269 = pneg %p145
        %p270 = pneg %p142
        %s271 = smul.u32 2, %s25
        %p272 = scmp.lt.s32.totalorder %s24, 0
        %s273 = scalar_select %p272, %s24, 0
        %p274 = scmp.lt.s32.totalorder %s271, 7
        %s275 = scalar_select %p274, %s271, 7
        %s276 = smul.addr %s273, 8
        %s277 = sadd.s32 %s275, %s276
        %s278 = scalar_lea.vmem %s3, %s277
        %p279 = pneg %p173
        %p280 = pneg %p170
        %s281 = smul.u32 2, %s25
        %p282 = scmp.lt.s32.totalorder %s24, 0
        %s283 = scalar_select %p282, %s24, 0
        %p284 = scmp.lt.s32.totalorder %s281, 7
        %s285 = scalar_select %p284, %s281, 7
        %s286 = smul.addr %s283, 8
        %s287 = sadd.s32 %s285, %s286
        %s288 = scalar_lea.vmem %s4, %s287
        %p289 = scmp.lt.s32.totalorder %s24, 0
        %s290 = scalar_select %p289, %s24, 0
        %p291 = scmp.lt.s32.totalorder %s26, 0
        %s292 = scalar_select %p291, %s26, 0
        %s293 = sadd.s32 %s292, %s290
        %s294 = scalar_lea.vmem %s0, %s293
        %s295 = smul.u32 4, %s26
        %s296 = smul.u32 2, %s25
        %s297 = smul.u32 2, %s25
        %p298 = scmp.lt.s32.totalorder %s24, 0
        %s299 = scalar_select %p298, %s24, 0
        %p300 = scmp.lt.s32.totalorder %s297, 7
        %s301 = scalar_select %p300, %s297, 7
        %s302 = smul.addr %s299, 8
        %s303 = sadd.s32 %s301, %s302
        %s304 = smul.addr %s303, 2
        %s305 = scalar_lea.vmem %s2, %s304
        %s306 = smul.u32 2, %s25
        %s307 = smul.u32 2, %s25
        %p308 = scmp.lt.s32.totalorder %s24, 0
        %s309 = scalar_select %p308, %s24, 0
        %p310 = scmp.lt.s32.totalorder %s307, 7
        %s311 = scalar_select %p310, %s307, 7
        %s312 = smul.addr %s309, 8
        %s313 = sadd.s32 %s311, %s312
        %s314 = scalar_lea.vmem %s3, %s313
        %s315 = smul.u32 2, %s25
        %s316 = smul.u32 2, %s25
        %p317 = scmp.lt.s32.totalorder %s24, 0
        %s318 = scalar_select %p317, %s24, 0
        %p319 = scmp.lt.s32.totalorder %s316, 7
        %s320 = scalar_select %p319, %s316, 7
        %s321 = smul.addr %s318, 8
        %s322 = sadd.s32 %s320, %s321
        %s323 = scalar_lea.vmem %s4, %s322
        %s324 = smul.u32 2, %s25
        %p326 = scmp.eq.s32.totalorder %s26, 0
        // Predicated region
        $region33: #{identity_generator_forward.12} parent=27 // pred_check
          %p327 = pneg %p326
        $region34: #{identity_generator_forward.12} parent=27 // pred_check_branch
          %329 = sbr.rel (%p327) target = $region36
        $region35: #{identity_generator_forward.12} parent=27 // pred_region
          %330 = vst [vmem:[#allocation2] sm:$0xf] 0.0
        $region36: #{identity_generator_forward.12} parent=27 // pred_fallthru
          _
        %v331 = vld [vmem:[#allocation2] sm:$0xf]
        %v332 = vld [vmem:[%s294] sm:$0x1]
        %v333 = vld [vmem:[%s237] sm:$0xff]
        %v334 = vld [vmem:[%s237 + $0x8] sm:$0xff]
        %v335 = vld [vmem:[%s237 + $0x10] sm:$0xff]
        %v336 = vld [vmem:[%s237 + $0x18] sm:$0xff]
        %v341 = vunpack.c.l.b16 %v333
        %v342 = vunpack.c.h.b16 %v333
        %v343 = vunpack.c.l.b16 %v334
        %v344 = vunpack.c.h.b16 %v334
        %v345 = vunpack.c.l.b16 %v335
        %v346 = vunpack.c.h.b16 %v335
        %v347 = vunpack.c.l.b16 %v336
        %v348 = vunpack.c.h.b16 %v336
        %v349 = vpack.c.b16 %v343, %v341
        %v350 = vpack.c.b16 %v344, %v342
        %v351 = vpack.c.b16 %v347, %v345
        %v352 = vpack.c.b16 %v348, %v346
        %vm357 = vcmask 261120
        %v359 = vsel %vm357, %v332, 0
        %361 = vmatpush.bf16.msra.mxu0 0
        %362 = vmatpush.bf16.msra.mxu0 0
        %363 = vmatpush.bf16.msra.mxu0 0
        %364 = vmatpush.bf16.msra.mxu0 0
        %365 = vmatpush.bf16.msra.mxu0 0
        %366 = vmatpush.bf16.msra.mxu0 0
        %367 = vmatpush.bf16.msra.mxu0 %v351
        %368 = vmatpush.bf16.msra.mxu0 %v349
        %369 = vmatmul.bf16.gmra.mxu0 %v359
        %v370 = vpop.f32.mrf.mxu0
        %v371 = vadd.f32 0.0, %v370
        %v372 = vpop.f32.mrf.mxu0
        %373 = vdwg.mxu0
        %374 = vmatpush.bf16.msra.mxu0 0
        %375 = vmatpush.bf16.msra.mxu0 0
        %376 = vmatpush.bf16.msra.mxu0 0
        %377 = vmatpush.bf16.msra.mxu0 0
        %378 = vmatpush.bf16.msra.mxu0 0
        %379 = vmatpush.bf16.msra.mxu0 0
        %380 = vmatpush.bf16.msra.mxu0 %v352
        %381 = vmatpush.bf16.msra.mxu0 %v350
        %382 = vmatmul.bf16.gmra.mxu0 %v359
        %v383 = vpop.f32.mrf.mxu0
        %v384 = vadd.f32 0.0, %v383
        %v385 = vpop.f32.mrf.mxu0
        %386 = vdwg.mxu0
        %v389 = vrot.slane %v384, 6
        %vm390 = vcmask 1041408
        %v391 = vsel %vm390, %v371, %v389
        %v393 = vadd.f32 %v331, %v391
        %394 = vst [vmem:[#allocation2] sm:$0xf] %v393
        // Predicated region
        $region37: #{identity_generator_forward.12} parent=27 // pred_check
          %p395 = pneg %p326
        $region38: #{identity_generator_forward.12} parent=27 // pred_check_branch
          %397 = sbr.rel (%p395) target = $region40
        $region39: #{identity_generator_forward.12} parent=27 // pred_region
          %v398 = vld [vmem:[#allocation2] sm:$0xf]
          %399 = vst [vmem:[%s305] sm:$0xf] %v398
          %401 = vst [vmem:[#allocation1] ss:$4 sm:$0xff] %v398
          %v402 = vld.sshfl [vmem:[#allocation1] sm:$0xff pattern:$0x73625140]
          %v403 = vld.sshfl [vmem:[#allocation1 + $0x8] sm:$0xff pattern:$0x73625140]
          %v406 = vsel %vm390, %v402, 0.0
          %v407 = vrot.slane %v406, 4
          %v408 = vadd.f32 %v406, %v407
          %v409 = vrot.slane %v408, 2
          %v410 = vadd.f32 %v408, %v409
          %v411 = vrot.slane %v410, 1
          %v412 = vadd.f32 %v410, %v411
          %v413 = vsel %vm390, %v403, 0.0
          %v414 = vrot.slane %v413, 4
          %v415 = vadd.f32 %v413, %v414
          %v416 = vrot.slane %v415, 2
          %v417 = vadd.f32 %v415, %v416
          %v418 = vrot.slane %v417, 1
          %v419 = vadd.f32 %v417, %v418
          %v422 = vrot.slane %v419, 7
          %vm423 = vcmask 1040384
          %v424 = vsel %vm423, %v412, %v422
          %v426 = vlaneseq
          %vm427 = vcmp.ge.s32.totalorder %v426, 0
          %vm428 = vcmp.lt.s32.totalorder %v426, 256
          %vm429 = vmand %vm427, %vm428
          %430 = vst.msk [vmem:[%s314] sm:$0x3] %vm429, %v424
          %v431 = vmul.f32 %v398, %v398
          %433 = vst [vmem:[#allocation1] ss:$4 sm:$0xff] %v431
          %v434 = vld.sshfl [vmem:[#allocation1] sm:$0xff pattern:$0x73625140]
          %v435 = vld.sshfl [vmem:[#allocation1 + $0x8] sm:$0xff pattern:$0x73625140]
          %v438 = vsel %vm390, %v434, 0.0
          %v439 = vrot.slane %v438, 4
          %v440 = vadd.f32 %v438, %v439
          %v441 = vrot.slane %v440, 2
          %v442 = vadd.f32 %v440, %v441
          %v443 = vrot.slane %v442, 1
          %v444 = vadd.f32 %v442, %v443
          %v445 = vsel %vm390, %v435, 0.0
          %v446 = vrot.slane %v445, 4
          %v447 = vadd.f32 %v445, %v446
          %v448 = vrot.slane %v447, 2
          %v449 = vadd.f32 %v447, %v448
          %v450 = vrot.slane %v449, 1
          %v451 = vadd.f32 %v449, %v450
          %v454 = vrot.slane %v451, 7
          %v455 = vsel %vm423, %v444, %v454
          %457 = vst.msk [vmem:[%s323] sm:$0x3] %vm429, %v455
        $region40: #{identity_generator_forward.12} parent=27 // pred_fallthru
          _
        %s458 = smul.u32 2, %s25
        %p459 = scmp.lt.s32.totalorder %s24, 0
        %s460 = scalar_select %p459, %s24, 0
        %p461 = scmp.lt.s32.totalorder %s458, 7
        %s462 = scalar_select %p461, %s458, 7
        %s463 = smul.addr %s460, 8
        %s464 = sadd.s32 %s462, %s463
        %s465 = smul.addr %s464, 2
        %s466 = scalar_lea.vmem %s2, %s465
        %s467 = smul.u32 2, %s25
        %p468 = scmp.lt.s32.totalorder %s24, 0
        %s469 = scalar_select %p468, %s24, 0
        %p470 = scmp.lt.s32.totalorder %s467, 7
        %s471 = scalar_select %p470, %s467, 7
        %s472 = smul.addr %s469, 8
        %s473 = sadd.s32 %s471, %s472
        %s474 = scalar_lea.vmem %s3, %s473
        %s475 = smul.u32 2, %s25
        %p476 = scmp.lt.s32.totalorder %s24, 0
        %s477 = scalar_select %p476, %s24, 0
        %p478 = scmp.lt.s32.totalorder %s475, 7
        %s479 = scalar_select %p478, %s475, 7
        %s480 = smul.addr %s477, 8
        %s481 = sadd.s32 %s479, %s480
        %s482 = scalar_lea.vmem %s4, %s481
        // Predicated region
        $region41: #{identity_generator_forward.12} parent=27 // pred_check
          %p483 = pneg %p114
        $region42: #{identity_generator_forward.12} parent=27 // pred_check_branch
          %485 = sbr.rel (%p483) target = $region44
        $region43: #{identity_generator_forward.12} parent=27 // pred_region
          %s486 = smul.u32 2, %s25
        $region44: #{identity_generator_forward.12} parent=27 // pred_fallthru
          _
        // Predicated region
        $region45: #{identity_generator_forward.12} parent=27 // pred_check
          %p487 = pneg %p142
        $region46: #{identity_generator_forward.12} parent=27 // pred_check_branch
          %489 = sbr.rel (%p487) target = $region48
        $region47: #{identity_generator_forward.12} parent=27 // pred_region
          %s490 = smul.u32 2, %s25
        $region48: #{identity_generator_forward.12} parent=27 // pred_fallthru
          _
        // Predicated region
        $region49: #{identity_generator_forward.12} parent=27 // pred_check
          %p491 = pneg %p170
        $region50: #{identity_generator_forward.12} parent=27 // pred_check_branch
          %493 = sbr.rel (%p491) target = $region52
        $region51: #{identity_generator_forward.12} parent=27 // pred_region
          %s494 = smul.u32 2, %s25
        $region52: #{identity_generator_forward.12} parent=27 // pred_fallthru
          _
      $region28: #{identity_generator_forward.12} parent=5 // pred_fallthru
        _
      %p495 = scmp.le.s32.totalorder 2, %s14
      // Predicated region
      $region53: #{identity_generator_forward.12} parent=5 // pred_check
        %p496 = pneg %p495
      $region54: #{identity_generator_forward.12} parent=5 // pred_check_branch
        %498 = sbr.rel (%p496) target = $region56
      $region55: #{identity_generator_forward.12} parent=5 // pred_region
        %s499 = ssub.s32 %s14, 2
        // Predicated region
        $region57: #{identity_generator_forward.12} parent=55 // pred_check
          %p500 = pneg %p120
        $region58: #{identity_generator_forward.12} parent=55 // pred_check_branch
          %502 = sbr.rel (%p500) target = $region60
        $region59: #{identity_generator_forward.12} parent=55 // pred_region
          %s503 = smul.u32 2, %s28
          %p504 = scmp.lt.s32.totalorder %s27, 0
          %s505 = scalar_select %p504, %s27, 0
          %p506 = scmp.lt.s32.totalorder %s503, 7
          %s507 = scalar_select %p506, %s503, 7
          %s508 = smul.addr %s505, 8
          %s509 = sadd.s32 %s507, %s508
          %s510 = smul.addr %s509, 2
          %s511 = scalar_lea.vmem %s2, %s510
        $region60: #{identity_generator_forward.12} parent=55 // pred_fallthru
          _
        // Predicated region
        $region61: #{identity_generator_forward.12} parent=55 // pred_check
          %p512 = pneg %p148
        $region62: #{identity_generator_forward.12} parent=55 // pred_check_branch
          %514 = sbr.rel (%p512) target = $region64
        $region63: #{identity_generator_forward.12} parent=55 // pred_region
          %s515 = smul.u32 2, %s28
          %p516 = scmp.lt.s32.totalorder %s27, 0
          %s517 = scalar_select %p516, %s27, 0
          %p518 = scmp.lt.s32.totalorder %s515, 7
          %s519 = scalar_select %p518, %s515, 7
          %s520 = smul.addr %s517, 8
          %s521 = sadd.s32 %s519, %s520
          %s522 = scalar_lea.vmem %s3, %s521
        $region64: #{identity_generator_forward.12} parent=55 // pred_fallthru
          _
        // Predicated region
        $region65: #{identity_generator_forward.12} parent=55 // pred_check
          %p523 = pneg %p176
        $region66: #{identity_generator_forward.12} parent=55 // pred_check_branch
          %525 = sbr.rel (%p523) target = $region68
        $region67: #{identity_generator_forward.12} parent=55 // pred_region
          %s526 = smul.u32 2, %s28
          %p527 = scmp.lt.s32.totalorder %s27, 0
          %s528 = scalar_select %p527, %s27, 0
          %p529 = scmp.lt.s32.totalorder %s526, 7
          %s530 = scalar_select %p529, %s526, 7
          %s531 = smul.addr %s528, 8
          %s532 = sadd.s32 %s530, %s531
          %s533 = scalar_lea.vmem %s4, %s532
        $region68: #{identity_generator_forward.12} parent=55 // pred_fallthru
          _
      $region56: #{identity_generator_forward.12} parent=5 // pred_fallthru
        _
    $region6: #{identity_generator_forward.12} parent=1 // loop_footer
      %s18 = sadd.s32 1, %s14
    $region7: #{identity_generator_forward.12} parent=1 // loop_footer_branch
      %13 = sbr.rel target = $region3
    $region8: #{identity_generator_forward.12} parent=1 // loop_exit
      _
    %534 = vsyncpa [#allocation4], 1
    %s535 = scalar_lea.sflag [#allocation4], 1
    %536 = vsyncpa %s535, 1

// kernel: identity_generator_forward.17
$region0: #{identity_generator_forward.17}
  #allocation0 [shape = 'u32[]', space=smem, size = 0x4, offset = 0x4, fixed_abs, tag = 'smem constant byte address 0x4 - core index']
  #allocation1 [shape = 'u32[72,128]{1,0:T(1,128)}', space=vmem, size = 0x9000, scoped, tag = 'internal scratch']
  #allocation2 [shape = 'f32[32,32]{1,0:T(8,128)}', space=vmem, size = 0x4000, scoped, tag = 'scratch operand']
  %s0 = inlined_call_operand.vmem [shape: bf16[32,256], index: 0, kind: input, shape index: {}]
  %s1 = inlined_call_operand.vmem [shape: bf16[256,32], index: 1, kind: input, shape index: {}]
  %s2 = inlined_call_operand.vmem [shape: f32[32,32], index: 2, kind: output, shape index: {0}]
  %s3 = inlined_call_operand.vmem [shape: f32[1,1,32], index: 3, kind: output, shape index: {1}]
  %s4 = inlined_call_operand.vmem [shape: f32[1,1,32], index: 4, kind: output, shape index: {2}]
  %5 = xla_tuple %s2, %s3, %s4
  %s6 = sld [smem:[#allocation0]]
  $region42: #{identity_generator_forward.17} parent=0
    _
  %s8 = ssub.s32 1, %s6
  %s9 = scalar_select 0, %s8, %s6
  // Predicated region
  $region2: #{identity_generator_forward.17} parent=0 // pred_check
    _
  $region3: #{identity_generator_forward.17} parent=0 // pred_check_branch
    %11 = sbr.rel (0) target = $region5
  $region4: #{identity_generator_forward.17} parent=0 // pred_region
    _
  $region5: #{identity_generator_forward.17} parent=0 // pred_fallthru
    _
  // Predicated region
  $region6: #{identity_generator_forward.17} parent=0 // pred_check
    _
  $region7: #{identity_generator_forward.17} parent=0 // pred_check_branch
    %13 = sbr.rel (0) target = $region9
  $region8: #{identity_generator_forward.17} parent=0 // pred_region
    _
  $region9: #{identity_generator_forward.17} parent=0 // pred_fallthru
    _
  %p14 = scmp.eq.s32.totalorder 0, 0
  // Predicated region
  $region10: #{identity_generator_forward.17} parent=0 // pred_check
    %p15 = pneg %p14
  $region11: #{identity_generator_forward.17} parent=0 // pred_check_branch
    %17 = sbr.rel (%p15) target = $region13
  $region12: #{identity_generator_forward.17} parent=0 // pred_region
    %vm18 = vcmask 261120
    %19 = vst.msk [vmem:[#allocation2] sm:$0xff] %vm18, 0.0
    %20 = vst.msk [vmem:[#allocation2 + $0x8] sm:$0xff] %vm18, 0.0
    %21 = vst.msk [vmem:[#allocation2 + $0x10] sm:$0xff] %vm18, 0.0
    %22 = vst.msk [vmem:[#allocation2 + $0x18] sm:$0xff] %vm18, 0.0
  $region13: #{identity_generator_forward.17} parent=0 // pred_fallthru
    _
  %v23 = vld [vmem:[#allocation2] sm:$0xff]
  %v24 = vld [vmem:[#allocation2 + $0x8] sm:$0xff]
  %v25 = vld [vmem:[#allocation2 + $0x10] sm:$0xff]
  %v26 = vld [vmem:[#allocation2 + $0x18] sm:$0xff]
  %v27 = vld [vmem:[%s0] sm:$0xff]
  %v28 = vld [vmem:[%s0 + $0x8] sm:$0xff]
  %v29 = vld [vmem:[%s0 + $0x10] sm:$0xff]
  %v30 = vld [vmem:[%s0 + $0x18] sm:$0xff]
  %v31 = vld [vmem:[%s1] sm:$0xf]
  %v32 = vld [vmem:[%s1 + $0x4] sm:$0xf]
  %v33 = vld [vmem:[%s1 + $0x8] sm:$0xf]
  %v34 = vld [vmem:[%s1 + $0xc] sm:$0xf]
  %v35 = vld [vmem:[%s1 + $0x10] sm:$0xf]
  %v36 = vld [vmem:[%s1 + $0x14] sm:$0xf]
  %v37 = vld [vmem:[%s1 + $0x18] sm:$0xf]
  %v38 = vld [vmem:[%s1 + $0x1c] sm:$0xf]
  %v39 = vld [vmem:[%s1 + $0x20] sm:$0xf]
  %v40 = vld [vmem:[%s1 + $0x24] sm:$0xf]
  %v41 = vld [vmem:[%s1 + $0x28] sm:$0xf]
  %v42 = vld [vmem:[%s1 + $0x2c] sm:$0xf]
  %v43 = vld [vmem:[%s1 + $0x30] sm:$0xf]
  %v44 = vld [vmem:[%s1 + $0x34] sm:$0xf]
  %v45 = vld [vmem:[%s1 + $0x38] sm:$0xf]
  %v46 = vld [vmem:[%s1 + $0x3c] sm:$0xf]
  %v47 = vld [vmem:[%s1 + $0x40] sm:$0xf]
  %v48 = vld [vmem:[%s1 + $0x44] sm:$0xf]
  %v49 = vld [vmem:[%s1 + $0x48] sm:$0xf]
  %v50 = vld [vmem:[%s1 + $0x4c] sm:$0xf]
  %v51 = vld [vmem:[%s1 + $0x50] sm:$0xf]
  %v52 = vld [vmem:[%s1 + $0x54] sm:$0xf]
  %v53 = vld [vmem:[%s1 + $0x58] sm:$0xf]
  %v54 = vld [vmem:[%s1 + $0x5c] sm:$0xf]
  %v55 = vld [vmem:[%s1 + $0x60] sm:$0xf]
  %v56 = vld [vmem:[%s1 + $0x64] sm:$0xf]
  %v57 = vld [vmem:[%s1 + $0x68] sm:$0xf]
  %v58 = vld [vmem:[%s1 + $0x6c] sm:$0xf]
  %v59 = vld [vmem:[%s1 + $0x70] sm:$0xf]
  %v60 = vld [vmem:[%s1 + $0x74] sm:$0xf]
  %v61 = vld [vmem:[%s1 + $0x78] sm:$0xf]
  %v62 = vld [vmem:[%s1 + $0x7c] sm:$0xf]
  %v67 = vunpack.c.l.b16 %v27
  %v68 = vunpack.c.h.b16 %v27
  %v69 = vunpack.c.l.b16 %v28
  %v70 = vunpack.c.h.b16 %v28
  %v71 = vunpack.c.l.b16 %v29
  %v72 = vunpack.c.h.b16 %v29
  %v73 = vunpack.c.l.b16 %v30
  %v74 = vunpack.c.h.b16 %v30
  %v75 = vpack.c.b16 %v69, %v67
  %v76 = vpack.c.b16 %v70, %v68
  %v77 = vpack.c.b16 %v73, %v71
  %v78 = vpack.c.b16 %v74, %v72
  %v115 = vunpack.c.l.b16 %v31
  %v116 = vunpack.c.l.b16 %v32
  %v117 = vunpack.c.l.b16 %v33
  %v118 = vunpack.c.l.b16 %v34
  %v119 = vunpack.c.l.b16 %v35
  %v120 = vunpack.c.l.b16 %v36
  %v121 = vunpack.c.l.b16 %v37
  %v122 = vunpack.c.l.b16 %v38
  %v123 = vunpack.c.l.b16 %v39
  %v124 = vunpack.c.l.b16 %v40
  %v125 = vunpack.c.l.b16 %v41
  %v126 = vunpack.c.l.b16 %v42
  %v127 = vunpack.c.l.b16 %v43
  %v128 = vunpack.c.l.b16 %v44
  %v129 = vunpack.c.l.b16 %v45
  %v130 = vunpack.c.l.b16 %v46
  %v131 = vunpack.c.l.b16 %v47
  %v132 = vunpack.c.l.b16 %v48
  %v133 = vunpack.c.l.b16 %v49
  %v134 = vunpack.c.l.b16 %v50
  %v135 = vunpack.c.l.b16 %v51
  %v136 = vunpack.c.l.b16 %v52
  %v137 = vunpack.c.l.b16 %v53
  %v138 = vunpack.c.l.b16 %v54
  %v139 = vunpack.c.l.b16 %v55
  %v140 = vunpack.c.l.b16 %v56
  %v141 = vunpack.c.l.b16 %v57
  %v142 = vunpack.c.l.b16 %v58
  %v143 = vunpack.c.l.b16 %v59
  %v144 = vunpack.c.l.b16 %v60
  %v145 = vunpack.c.l.b16 %v61
  %v146 = vunpack.c.l.b16 %v62
  %v147 = vpack.c.b16 %v116, %v115
  %v148 = vpack.c.b16 %v118, %v117
  %v149 = vpack.c.b16 %v120, %v119
  %v150 = vpack.c.b16 %v122, %v121
  %v151 = vpack.c.b16 %v124, %v123
  %v152 = vpack.c.b16 %v126, %v125
  %v153 = vpack.c.b16 %v128, %v127
  %v154 = vpack.c.b16 %v130, %v129
  %v155 = vpack.c.b16 %v132, %v131
  %v156 = vpack.c.b16 %v134, %v133
  %v157 = vpack.c.b16 %v136, %v135
  %v158 = vpack.c.b16 %v138, %v137
  %v159 = vpack.c.b16 %v140, %v139
  %v160 = vpack.c.b16 %v142, %v141
  %v161 = vpack.c.b16 %v144, %v143
  %v162 = vpack.c.b16 %v146, %v145
  %179 = vmatpush.bf16.msra.mxu0 %v154
  %180 = vmatpush.bf16.msra.mxu0 %v153
  %181 = vmatpush.bf16.msra.mxu0 %v152
  %182 = vmatpush.bf16.msra.mxu0 %v151
  %183 = vmatpush.bf16.msra.mxu0 %v150
  %184 = vmatpush.bf16.msra.mxu0 %v149
  %185 = vmatpush.bf16.msra.mxu0 %v148
  %186 = vmatpush.bf16.msra.mxu0 %v147
  %187 = vmatmul.bf16.gmra.mxu0 %v75
  %v188 = vpop.f32.mrf.mxu0
  %v189 = vadd.f32 0.0, %v188
  %v190 = vpop.f32.mrf.mxu0
  %v191 = vadd.f32 0.0, %v190
  %192 = vmatmul.bf16.gmra.mxu0 %v77
  %v193 = vpop.f32.mrf.mxu0
  %v194 = vadd.f32 0.0, %v193
  %v195 = vpop.f32.mrf.mxu0
  %v196 = vadd.f32 0.0, %v195
  %197 = vdwg.mxu0
  %198 = vmatpush.bf16.msra.mxu0 %v162
  %199 = vmatpush.bf16.msra.mxu0 %v161
  %200 = vmatpush.bf16.msra.mxu0 %v160
  %201 = vmatpush.bf16.msra.mxu0 %v159
  %202 = vmatpush.bf16.msra.mxu0 %v158
  %203 = vmatpush.bf16.msra.mxu0 %v157
  %204 = vmatpush.bf16.msra.mxu0 %v156
  %205 = vmatpush.bf16.msra.mxu0 %v155
  %206 = vmatmul.bf16.gmra.mxu0 %v76
  %v207 = vpop.f32.mrf.mxu0
  %v208 = vadd.f32 %v189, %v207
  %v209 = vpop.f32.mrf.mxu0
  %v210 = vadd.f32 %v191, %v209
  %211 = vmatmul.bf16.gmra.mxu0 %v78
  %v212 = vpop.f32.mrf.mxu0
  %v213 = vadd.f32 %v194, %v212
  %v214 = vpop.f32.mrf.mxu0
  %v215 = vadd.f32 %v196, %v214
  %216 = vdwg.mxu0
  %v217 = vadd.f32 %v23, %v208
  %v218 = vadd.f32 %v24, %v210
  %v219 = vadd.f32 %v25, %v213
  %v220 = vadd.f32 %v26, %v215
  %vm221 = vcmask 261120
  %222 = vst.msk [vmem:[#allocation2] sm:$0xff] %vm221, %v217
  %223 = vst.msk [vmem:[#allocation2 + $0x8] sm:$0xff] %vm221, %v218
  %224 = vst.msk [vmem:[#allocation2 + $0x10] sm:$0xff] %vm221, %v219
  %225 = vst.msk [vmem:[#allocation2 + $0x18] sm:$0xff] %vm221, %v220
  // Predicated region
  $region14: #{identity_generator_forward.17} parent=0 // pred_check
    %p226 = pneg %p14
  $region15: #{identity_generator_forward.17} parent=0 // pred_check_branch
    %228 = sbr.rel (%p226) target = $region17
  $region16: #{identity_generator_forward.17} parent=0 // pred_region
    %v229 = vld [vmem:[#allocation2] sm:$0xff]
    %v230 = vld [vmem:[#allocation2 + $0x8] sm:$0xff]
    %v231 = vld [vmem:[#allocation2 + $0x10] sm:$0xff]
    %v232 = vld [vmem:[#allocation2 + $0x18] sm:$0xff]
    %233 = vst.msk [vmem:[%s2] sm:$0xff] %vm221, %v229
    %234 = vst.msk [vmem:[%s2 + $0x8] sm:$0xff] %vm221, %v230
    %235 = vst.msk [vmem:[%s2 + $0x10] sm:$0xff] %vm221, %v231
    %236 = vst.msk [vmem:[%s2 + $0x18] sm:$0xff] %vm221, %v232
    %v237 = vsel %vm221, %v229, 0.0
    %v238 = vsel %vm221, %v230, 0.0
    %v239 = vadd.f32 %v237, %v238
    %v240 = vsel %vm221, %v231, 0.0
    %v241 = vadd.f32 %v239, %v240
    %v242 = vsel %vm221, %v232, 0.0
    %v243 = vadd.f32 %v241, %v242
    %v244 = vrot.slane %v243, 4
    %v245 = vadd.f32 %v243, %v244
    %v246 = vrot.slane %v245, 2
    %v247 = vadd.f32 %v245, %v246
    %v248 = vrot.slane %v247, 1
    %v249 = vadd.f32 %v247, %v248
    %vm250 = vcmask 253952
    %251 = vst.msk [vmem:[%s3] sm:$0x1] %vm250, %v249
    %v252 = vmul.f32 %v229, %v229
    %v253 = vmul.f32 %v230, %v230
    %v254 = vmul.f32 %v231, %v231
    %v255 = vmul.f32 %v232, %v232
    %v256 = vsel %vm221, %v252, 0.0
    %v257 = vsel %vm221, %v253, 0.0
    %v258 = vadd.f32 %v256, %v257
    %v259 = vsel %vm221, %v254, 0.0
    %v260 = vadd.f32 %v258, %v259
    %v261 = vsel %vm221, %v255, 0.0
    %v262 = vadd.f32 %v260, %v261
    %v263 = vrot.slane %v262, 4
    %v264 = vadd.f32 %v262, %v263
    %v265 = vrot.slane %v264, 2
    %v266 = vadd.f32 %v264, %v265
    %v267 = vrot.slane %v266, 1
    %v268 = vadd.f32 %v266, %v267
    %269 = vst.msk [vmem:[%s4] sm:$0x1] %vm250, %v268
  $region17: #{identity_generator_forward.17} parent=0 // pred_fallthru
    _
  // Predicated region
  $region18: #{identity_generator_forward.17} parent=0 // pred_check
    _
  $region19: #{identity_generator_forward.17} parent=0 // pred_check_branch
    %271 = sbr.rel (0) target = $region21
  $region20: #{identity_generator_forward.17} parent=0 // pred_region
    _
  $region21: #{identity_generator_forward.17} parent=0 // pred_fallthru
    _
  // Predicated region
  $region22: #{identity_generator_forward.17} parent=0 // pred_check
    _
  $region23: #{identity_generator_forward.17} parent=0 // pred_check_branch
    %273 = sbr.rel (0) target = $region25
  $region24: #{identity_generator_forward.17} parent=0 // pred_region
    _
  $region25: #{identity_generator_forward.17} parent=0 // pred_fallthru
    _
  // Predicated region
  $region26: #{identity_generator_forward.17} parent=0 // pred_check
    _
  $region27: #{identity_generator_forward.17} parent=0 // pred_check_branch
    %275 = sbr.rel (0) target = $region29
  $region28: #{identity_generator_forward.17} parent=0 // pred_region
    _
  $region29: #{identity_generator_forward.17} parent=0 // pred_fallthru
    _
  // Predicated region
  $region30: #{identity_generator_forward.17} parent=0 // pred_check
    _
  $region31: #{identity_generator_forward.17} parent=0 // pred_check_branch
    %277 = sbr.rel (0) target = $region33
  $region32: #{identity_generator_forward.17} parent=0 // pred_region
    _
  $region33: #{identity_generator_forward.17} parent=0 // pred_fallthru
    _
  // Predicated region
  $region34: #{identity_generator_forward.17} parent=0 // pred_check
    _
  $region35: #{identity_generator_forward.17} parent=0 // pred_check_branch
    %279 = sbr.rel (0) target = $region37
  $region36: #{identity_generator_forward.17} parent=0 // pred_region
    _
  $region37: #{identity_generator_forward.17} parent=0 // pred_fallthru
    _
  // Predicated region
  $region38: #{identity_generator_forward.17} parent=0 // pred_check
    _
  $region39: #{identity_generator_forward.17} parent=0 // pred_check_branch
    %281 = sbr.rel (0) target = $region41
  $region40: #{identity_generator_forward.17} parent=0 // pred_region
    _
  $region41: #{identity_generator_forward.17} parent=0 // pred_fallthru
    _

// kernel: identity_generator_forward.16
$region0: #{identity_generator_forward.16}
  #allocation0 [shape = 'u32[]', space=smem, size = 0x4, offset = 0x4, fixed_abs, tag = 'smem constant byte address 0x4 - core index']
  #allocation1 [shape = 'u32[72,128]{1,0:T(1,128)}', space=vmem, size = 0x9000, scoped, tag = 'internal scratch']
  #allocation2 [shape = 'f32[32,32]{1,0:T(8,128)}', space=vmem, size = 0x4000, scoped, tag = 'scratch operand']
  %s0 = inlined_call_operand.vmem [shape: bf16[32,384], index: 0, kind: input, shape index: {}]
  %s1 = inlined_call_operand.vmem [shape: bf16[384,32], index: 1, kind: input, shape index: {}]
  %s2 = inlined_call_operand.vmem [shape: f32[32,32], index: 2, kind: output, shape index: {0}]
  %s3 = inlined_call_operand.vmem [shape: f32[1,1,32], index: 3, kind: output, shape index: {1}]
  %s4 = inlined_call_operand.vmem [shape: f32[1,1,32], index: 4, kind: output, shape index: {2}]
  %5 = xla_tuple %s2, %s3, %s4
  %s6 = sld [smem:[#allocation0]]
  $region42: #{identity_generator_forward.16} parent=0
    _
  %s8 = ssub.s32 1, %s6
  %s9 = scalar_select 0, %s8, %s6
  // Predicated region
  $region2: #{identity_generator_forward.16} parent=0 // pred_check
    _
  $region3: #{identity_generator_forward.16} parent=0 // pred_check_branch
    %11 = sbr.rel (0) target = $region5
  $region4: #{identity_generator_forward.16} parent=0 // pred_region
    _
  $region5: #{identity_generator_forward.16} parent=0 // pred_fallthru
    _
  // Predicated region
  $region6: #{identity_generator_forward.16} parent=0 // pred_check
    _
  $region7: #{identity_generator_forward.16} parent=0 // pred_check_branch
    %13 = sbr.rel (0) target = $region9
  $region8: #{identity_generator_forward.16} parent=0 // pred_region
    _
  $region9: #{identity_generator_forward.16} parent=0 // pred_fallthru
    _
  %p14 = scmp.eq.s32.totalorder 0, 0
  // Predicated region
  $region10: #{identity_generator_forward.16} parent=0 // pred_check
    %p15 = pneg %p14
  $region11: #{identity_generator_forward.16} parent=0 // pred_check_branch
    %17 = sbr.rel (%p15) target = $region13
  $region12: #{identity_generator_forward.16} parent=0 // pred_region
    %vm18 = vcmask 261120
    %19 = vst.msk [vmem:[#allocation2] sm:$0xff] %vm18, 0.0
    %20 = vst.msk [vmem:[#allocation2 + $0x8] sm:$0xff] %vm18, 0.0
    %21 = vst.msk [vmem:[#allocation2 + $0x10] sm:$0xff] %vm18, 0.0
    %22 = vst.msk [vmem:[#allocation2 + $0x18] sm:$0xff] %vm18, 0.0
  $region13: #{identity_generator_forward.16} parent=0 // pred_fallthru
    _
  %v23 = vld [vmem:[#allocation2] sm:$0xff]
  %v24 = vld [vmem:[#allocation2 + $0x8] sm:$0xff]
  %v25 = vld [vmem:[#allocation2 + $0x10] sm:$0xff]
  %v26 = vld [vmem:[#allocation2 + $0x18] sm:$0xff]
  %v27 = vld [vmem:[%s0] sm:$0xff]
  %v28 = vld [vmem:[%s0 + $0x8] sm:$0xf]
  %v29 = vld [vmem:[%s0 + $0xc] sm:$0xff]
  %v30 = vld [vmem:[%s0 + $0x14] sm:$0xf]
  %v31 = vld [vmem:[%s0 + $0x18] sm:$0xff]
  %v32 = vld [vmem:[%s0 + $0x20] sm:$0xf]
  %v33 = vld [vmem:[%s0 + $0x24] sm:$0xff]
  %v34 = vld [vmem:[%s0 + $0x2c] sm:$0xf]
  %v35 = vld [vmem:[%s1] sm:$0xf]
  %v36 = vld [vmem:[%s1 + $0x4] sm:$0xf]
  %v37 = vld [vmem:[%s1 + $0x8] sm:$0xf]
  %v38 = vld [vmem:[%s1 + $0xc] sm:$0xf]
  %v39 = vld [vmem:[%s1 + $0x10] sm:$0xf]
  %v40 = vld [vmem:[%s1 + $0x14] sm:$0xf]
  %v41 = vld [vmem:[%s1 + $0x18] sm:$0xf]
  %v42 = vld [vmem:[%s1 + $0x1c] sm:$0xf]
  %v43 = vld [vmem:[%s1 + $0x20] sm:$0xf]
  %v44 = vld [vmem:[%s1 + $0x24] sm:$0xf]
  %v45 = vld [vmem:[%s1 + $0x28] sm:$0xf]
  %v46 = vld [vmem:[%s1 + $0x2c] sm:$0xf]
  %v47 = vld [vmem:[%s1 + $0x30] sm:$0xf]
  %v48 = vld [vmem:[%s1 + $0x34] sm:$0xf]
  %v49 = vld [vmem:[%s1 + $0x38] sm:$0xf]
  %v50 = vld [vmem:[%s1 + $0x3c] sm:$0xf]
  %v51 = vld [vmem:[%s1 + $0x40] sm:$0xf]
  %v52 = vld [vmem:[%s1 + $0x44] sm:$0xf]
  %v53 = vld [vmem:[%s1 + $0x48] sm:$0xf]
  %v54 = vld [vmem:[%s1 + $0x4c] sm:$0xf]
  %v55 = vld [vmem:[%s1 + $0x50] sm:$0xf]
  %v56 = vld [vmem:[%s1 + $0x54] sm:$0xf]
  %v57 = vld [vmem:[%s1 + $0x58] sm:$0xf]
  %v58 = vld [vmem:[%s1 + $0x5c] sm:$0xf]
  %v59 = vld [vmem:[%s1 + $0x60] sm:$0xf]
  %v60 = vld [vmem:[%s1 + $0x64] sm:$0xf]
  %v61 = vld [vmem:[%s1 + $0x68] sm:$0xf]
  %v62 = vld [vmem:[%s1 + $0x6c] sm:$0xf]
  %v63 = vld [vmem:[%s1 + $0x70] sm:$0xf]
  %v64 = vld [vmem:[%s1 + $0x74] sm:$0xf]
  %v65 = vld [vmem:[%s1 + $0x78] sm:$0xf]
  %v66 = vld [vmem:[%s1 + $0x7c] sm:$0xf]
  %v67 = vld [vmem:[%s1 + $0x80] sm:$0xf]
  %v68 = vld [vmem:[%s1 + $0x84] sm:$0xf]
  %v69 = vld [vmem:[%s1 + $0x88] sm:$0xf]
  %v70 = vld [vmem:[%s1 + $0x8c] sm:$0xf]
  %v71 = vld [vmem:[%s1 + $0x90] sm:$0xf]
  %v72 = vld [vmem:[%s1 + $0x94] sm:$0xf]
  %v73 = vld [vmem:[%s1 + $0x98] sm:$0xf]
  %v74 = vld [vmem:[%s1 + $0x9c] sm:$0xf]
  %v75 = vld [vmem:[%s1 + $0xa0] sm:$0xf]
  %v76 = vld [vmem:[%s1 + $0xa4] sm:$0xf]
  %v77 = vld [vmem:[%s1 + $0xa8] sm:$0xf]
  %v78 = vld [vmem:[%s1 + $0xac] sm:$0xf]
  %v79 = vld [vmem:[%s1 + $0xb0] sm:$0xf]
  %v80 = vld [vmem:[%s1 + $0xb4] sm:$0xf]
  %v81 = vld [vmem:[%s1 + $0xb8] sm:$0xf]
  %v82 = vld [vmem:[%s1 + $0xbc] sm:$0xf]
  %v91 = vunpack.c.l.b16 %v27
  %v92 = vunpack.c.h.b16 %v27
  %v93 = vunpack.c.l.b16 %v28
  %v94 = vunpack.c.l.b16 %v29
  %v95 = vunpack.c.h.b16 %v29
  %v96 = vunpack.c.l.b16 %v30
  %v97 = vunpack.c.l.b16 %v31
  %v98 = vunpack.c.h.b16 %v31
  %v99 = vunpack.c.l.b16 %v32
  %v100 = vunpack.c.l.b16 %v33
  %v101 = vunpack.c.h.b16 %v33
  %v102 = vunpack.c.l.b16 %v34
  %v103 = vpack.c.b16 %v94, %v91
  %v104 = vpack.c.b16 %v95, %v92
  %v105 = vpack.c.b16 %v96, %v93
  %v106 = vpack.c.b16 %v100, %v97
  %v107 = vpack.c.b16 %v101, %v98
  %v108 = vpack.c.b16 %v102, %v99
  %v163 = vunpack.c.l.b16 %v35
  %v164 = vunpack.c.l.b16 %v36
  %v165 = vunpack.c.l.b16 %v37
  %v166 = vunpack.c.l.b16 %v38
  %v167 = vunpack.c.l.b16 %v39
  %v168 = vunpack.c.l.b16 %v40
  %v169 = vunpack.c.l.b16 %v41
  %v170 = vunpack.c.l.b16 %v42
  %v171 = vunpack.c.l.b16 %v43
  %v172 = vunpack.c.l.b16 %v44
  %v173 = vunpack.c.l.b16 %v45
  %v174 = vunpack.c.l.b16 %v46
  %v175 = vunpack.c.l.b16 %v47
  %v176 = vunpack.c.l.b16 %v48
  %v177 = vunpack.c.l.b16 %v49
  %v178 = vunpack.c.l.b16 %v50
  %v179 = vunpack.c.l.b16 %v51
  %v180 = vunpack.c.l.b16 %v52
  %v181 = vunpack.c.l.b16 %v53
  %v182 = vunpack.c.l.b16 %v54
  %v183 = vunpack.c.l.b16 %v55
  %v184 = vunpack.c.l.b16 %v56
  %v185 = vunpack.c.l.b16 %v57
  %v186 = vunpack.c.l.b16 %v58
  %v187 = vunpack.c.l.b16 %v59
  %v188 = vunpack.c.l.b16 %v60
  %v189 = vunpack.c.l.b16 %v61
  %v190 = vunpack.c.l.b16 %v62
  %v191 = vunpack.c.l.b16 %v63
  %v192 = vunpack.c.l.b16 %v64
  %v193 = vunpack.c.l.b16 %v65
  %v194 = vunpack.c.l.b16 %v66
  %v195 = vunpack.c.l.b16 %v67
  %v196 = vunpack.c.l.b16 %v68
  %v197 = vunpack.c.l.b16 %v69
  %v198 = vunpack.c.l.b16 %v70
  %v199 = vunpack.c.l.b16 %v71
  %v200 = vunpack.c.l.b16 %v72
  %v201 = vunpack.c.l.b16 %v73
  %v202 = vunpack.c.l.b16 %v74
  %v203 = vunpack.c.l.b16 %v75
  %v204 = vunpack.c.l.b16 %v76
  %v205 = vunpack.c.l.b16 %v77
  %v206 = vunpack.c.l.b16 %v78
  %v207 = vunpack.c.l.b16 %v79
  %v208 = vunpack.c.l.b16 %v80
  %v209 = vunpack.c.l.b16 %v81
  %v210 = vunpack.c.l.b16 %v82
  %v211 = vpack.c.b16 %v164, %v163
  %v212 = vpack.c.b16 %v166, %v165
  %v213 = vpack.c.b16 %v168, %v167
  %v214 = vpack.c.b16 %v170, %v169
  %v215 = vpack.c.b16 %v172, %v171
  %v216 = vpack.c.b16 %v174, %v173
  %v217 = vpack.c.b16 %v176, %v175
  %v218 = vpack.c.b16 %v178, %v177
  %v219 = vpack.c.b16 %v180, %v179
  %v220 = vpack.c.b16 %v182, %v181
  %v221 = vpack.c.b16 %v184, %v183
  %v222 = vpack.c.b16 %v186, %v185
  %v223 = vpack.c.b16 %v188, %v187
  %v224 = vpack.c.b16 %v190, %v189
  %v225 = vpack.c.b16 %v192, %v191
  %v226 = vpack.c.b16 %v194, %v193
  %v227 = vpack.c.b16 %v196, %v195
  %v228 = vpack.c.b16 %v198, %v197
  %v229 = vpack.c.b16 %v200, %v199
  %v230 = vpack.c.b16 %v202, %v201
  %v231 = vpack.c.b16 %v204, %v203
  %v232 = vpack.c.b16 %v206, %v205
  %v233 = vpack.c.b16 %v208, %v207
  %v234 = vpack.c.b16 %v210, %v209
  %259 = vmatpush.bf16.msra.mxu0 %v218
  %260 = vmatpush.bf16.msra.mxu0 %v217
  %261 = vmatpush.bf16.msra.mxu0 %v216
  %262 = vmatpush.bf16.msra.mxu0 %v215
  %263 = vmatpush.bf16.msra.mxu0 %v214
  %264 = vmatpush.bf16.msra.mxu0 %v213
  %265 = vmatpush.bf16.msra.mxu0 %v212
  %266 = vmatpush.bf16.msra.mxu0 %v211
  %267 = vmatmul.bf16.gmra.mxu0 %v103
  %v268 = vpop.f32.mrf.mxu0
  %v269 = vadd.f32 0.0, %v268
  %v270 = vpop.f32.mrf.mxu0
  %v271 = vadd.f32 0.0, %v270
  %272 = vmatmul.bf16.gmra.mxu0 %v106
  %v273 = vpop.f32.mrf.mxu0
  %v274 = vadd.f32 0.0, %v273
  %v275 = vpop.f32.mrf.mxu0
  %v276 = vadd.f32 0.0, %v275
  %277 = vdwg.mxu0
  %278 = vmatpush.bf16.msra.mxu0 %v226
  %279 = vmatpush.bf16.msra.mxu0 %v225
  %280 = vmatpush.bf16.msra.mxu0 %v224
  %281 = vmatpush.bf16.msra.mxu0 %v223
  %282 = vmatpush.bf16.msra.mxu0 %v222
  %283 = vmatpush.bf16.msra.mxu0 %v221
  %284 = vmatpush.bf16.msra.mxu0 %v220
  %285 = vmatpush.bf16.msra.mxu0 %v219
  %286 = vmatmul.bf16.gmra.mxu0 %v104
  %v287 = vpop.f32.mrf.mxu0
  %v288 = vadd.f32 %v269, %v287
  %v289 = vpop.f32.mrf.mxu0
  %v290 = vadd.f32 %v271, %v289
  %291 = vmatmul.bf16.gmra.mxu0 %v107
  %v292 = vpop.f32.mrf.mxu0
  %v293 = vadd.f32 %v274, %v292
  %v294 = vpop.f32.mrf.mxu0
  %v295 = vadd.f32 %v276, %v294
  %296 = vdwg.mxu0
  %297 = vmatpush.bf16.msra.mxu0 %v234
  %298 = vmatpush.bf16.msra.mxu0 %v233
  %299 = vmatpush.bf16.msra.mxu0 %v232
  %300 = vmatpush.bf16.msra.mxu0 %v231
  %301 = vmatpush.bf16.msra.mxu0 %v230
  %302 = vmatpush.bf16.msra.mxu0 %v229
  %303 = vmatpush.bf16.msra.mxu0 %v228
  %304 = vmatpush.bf16.msra.mxu0 %v227
  %305 = vmatmul.bf16.gmra.mxu0 %v105
  %v306 = vpop.f32.mrf.mxu0
  %v307 = vadd.f32 %v288, %v306
  %v308 = vpop.f32.mrf.mxu0
  %v309 = vadd.f32 %v290, %v308
  %310 = vmatmul.bf16.gmra.mxu0 %v108
  %v311 = vpop.f32.mrf.mxu0
  %v312 = vadd.f32 %v293, %v311
  %v313 = vpop.f32.mrf.mxu0
  %v314 = vadd.f32 %v295, %v313
  %315 = vdwg.mxu0
  %v316 = vadd.f32 %v23, %v307
  %v317 = vadd.f32 %v24, %v309
  %v318 = vadd.f32 %v25, %v312
  %v319 = vadd.f32 %v26, %v314
  %vm320 = vcmask 261120
  %321 = vst.msk [vmem:[#allocation2] sm:$0xff] %vm320, %v316
  %322 = vst.msk [vmem:[#allocation2 + $0x8] sm:$0xff] %vm320, %v317
  %323 = vst.msk [vmem:[#allocation2 + $0x10] sm:$0xff] %vm320, %v318
  %324 = vst.msk [vmem:[#allocation2 + $0x18] sm:$0xff] %vm320, %v319
  // Predicated region
  $region14: #{identity_generator_forward.16} parent=0 // pred_check
    %p325 = pneg %p14
  $region15: #{identity_generator_forward.16} parent=0 // pred_check_branch
    %327 = sbr.rel (%p325) target = $region17
  $region16: #{identity_generator_forward.16} parent=0 // pred_region
    %v328 = vld [vmem:[#allocation2] sm:$0xff]
    %v329 = vld [vmem:[#allocation2 + $0x8] sm:$0xff]
    %v330 = vld [vmem:[#allocation2 + $0x10] sm:$0xff]
    %v331 = vld [vmem:[#allocation2 + $0x18] sm:$0xff]
    %332 = vst.msk [vmem:[%s2] sm:$0xff] %vm320, %v328
    %333 = vst.msk [vmem:[%s2 + $0x8] sm:$0xff] %vm320, %v329
    %334 = vst.msk [vmem:[%s2 + $0x10] sm:$0xff] %vm320, %v330
    %335 = vst.msk [vmem:[%s2 + $0x18] sm:$0xff] %vm320, %v331
    %v336 = vsel %vm320, %v328, 0.0
    %v337 = vsel %vm320, %v329, 0.0
    %v338 = vadd.f32 %v336, %v337
    %v339 = vsel %vm320, %v330, 0.0
    %v340 = vadd.f32 %v338, %v339
    %v341 = vsel %vm320, %v331, 0.0
    %v342 = vadd.f32 %v340, %v341
    %v343 = vrot.slane %v342, 4
    %v344 = vadd.f32 %v342, %v343
    %v345 = vrot.slane %v344, 2
    %v346 = vadd.f32 %v344, %v345
    %v347 = vrot.slane %v346, 1
    %v348 = vadd.f32 %v346, %v347
    %vm349 = vcmask 253952
    %350 = vst.msk [vmem:[%s3] sm:$0x1] %vm349, %v348
    %v351 = vmul.f32 %v328, %v328
    %v352 = vmul.f32 %v329, %v329
    %v353 = vmul.f32 %v330, %v330
    %v354 = vmul.f32 %v331, %v331
    %v355 = vsel %vm320, %v351, 0.0
    %v356 = vsel %vm320, %v352, 0.0
    %v357 = vadd.f32 %v355, %v356
    %v358 = vsel %vm320, %v353, 0.0
    %v359 = vadd.f32 %v357, %v358
    %v360 = vsel %vm320, %v354, 0.0
    %v361 = vadd.f32 %v359, %v360
    %v362 = vrot.slane %v361, 4
    %v363 = vadd.f32 %v361, %v362
    %v364 = vrot.slane %v363, 2
    %v365 = vadd.f32 %v363, %v364
    %v366 = vrot.slane %v365, 1
    %v367 = vadd.f32 %v365, %v366
    %368 = vst.msk [vmem:[%s4] sm:$0x1] %vm349, %v367
  $region17: #{identity_generator_forward.16} parent=0 // pred_fallthru
    _
  // Predicated region
  $region18: #{identity_generator_forward.16} parent=0 // pred_check
    _
  $region19: #{identity_generator_forward.16} parent=0 // pred_check_branch
    %370 = sbr.rel (0) target = $region21
  $region20: #{identity_generator_forward.16} parent=0 // pred_region
    _
  $region21: #{identity_generator_forward.16} parent=0 // pred_fallthru
    _
  // Predicated region
  $region22: #{identity_generator_forward.16} parent=0 // pred_check
    _
  $region23: #{identity_generator_forward.16} parent=0 // pred_check_branch
    %372 = sbr.rel (0) target = $region25
  $region24: #{identity_generator_forward.16} parent=0 // pred_region
    _
  $region25: #{identity_generator_forward.16} parent=0 // pred_fallthru
    _
  // Predicated region
  $region26: #{identity_generator_forward.16} parent=0 // pred_check
    _
  $region27: #{identity_generator_forward.16} parent=0 // pred_check_branch
    %374 = sbr.rel (0) target = $region29
  $region28: #{identity_generator_forward.16} parent=0 // pred_region
    _
  $region29: #{identity_generator_forward.16} parent=0 // pred_fallthru
    _
  // Predicated region
  $region30: #{identity_generator_forward.16} parent=0 // pred_check
    _
  $region31: #{identity_generator_forward.16} parent=0 // pred_check_branch
    %376 = sbr.rel (0) target = $region33
  $region32: #{identity_generator_forward.16} parent=0 // pred_region
    _
  $region33: #{identity_generator_forward.16} parent=0 // pred_fallthru
    _
  // Predicated region
  $region34: #{identity_generator_forward.16} parent=0 // pred_check
    _
  $region35: #{identity_generator_forward.16} parent=0 // pred_check_branch
    %378 = sbr.rel (0) target = $region37
  $region36: #{identity_generator_forward.16} parent=0 // pred_region
    _
  $region37: #{identity_generator_forward.16} parent=0 // pred_fallthru
    _
  // Predicated region
  $region38: #{identity_generator_forward.16} parent=0 // pred_check
    _
  $region39: #{identity_generator_forward.16} parent=0 // pred_check_branch
    %380 = sbr.rel (0) target = $region41
  $region40: #{identity_generator_forward.16} parent=0 // pred_region
    _
  $region41: #{identity_generator_forward.16} parent=0 // pred_fallthru
    _

// kernel: identity_generator_forward.14
$region0: #{identity_generator_forward.14}
  #allocation0 [shape = 'u32[]', space=smem, size = 0x4, offset = 0x4, fixed_abs, tag = 'smem constant byte address 0x4 - core index']
  #allocation1 [shape = 'u32[72,128]{1,0:T(1,128)}', space=vmem, size = 0x9000, scoped, tag = 'internal scratch']
  #allocation2 [shape = 'f32[32,32]{1,0:T(8,128)}', space=vmem, size = 0x4000, scoped, tag = 'scratch operand']
  %s0 = inlined_call_operand.vmem [shape: bf16[32,576], index: 0, kind: input, shape index: {}]
  %s1 = inlined_call_operand.vmem [shape: bf16[576,32], index: 1, kind: input, shape index: {}]
  %s2 = inlined_call_operand.vmem [shape: f32[32,32], index: 2, kind: output, shape index: {0}]
  %s3 = inlined_call_operand.vmem [shape: f32[1,1,32], index: 3, kind: output, shape index: {1}]
  %s4 = inlined_call_operand.vmem [shape: f32[1,1,32], index: 4, kind: output, shape index: {2}]
  %5 = xla_tuple %s2, %s3, %s4
  %s6 = sld [smem:[#allocation0]]
  $region42: #{identity_generator_forward.14} parent=0
    _
  %s8 = ssub.s32 1, %s6
  %s9 = scalar_select 0, %s8, %s6
  // Predicated region
  $region2: #{identity_generator_forward.14} parent=0 // pred_check
    _
  $region3: #{identity_generator_forward.14} parent=0 // pred_check_branch
    %11 = sbr.rel (0) target = $region5
  $region4: #{identity_generator_forward.14} parent=0 // pred_region
    _
  $region5: #{identity_generator_forward.14} parent=0 // pred_fallthru
    _
  // Predicated region
  $region6: #{identity_generator_forward.14} parent=0 // pred_check
    _
  $region7: #{identity_generator_forward.14} parent=0 // pred_check_branch
    %13 = sbr.rel (0) target = $region9
  $region8: #{identity_generator_forward.14} parent=0 // pred_region
    _
  $region9: #{identity_generator_forward.14} parent=0 // pred_fallthru
    _
  %p15 = scmp.eq.s32.totalorder 0, 0
  // Predicated region
  $region10: #{identity_generator_forward.14} parent=0 // pred_check
    %p16 = pneg %p15
  $region11: #{identity_generator_forward.14} parent=0 // pred_check_branch
    %18 = sbr.rel (%p16) target = $region13
  $region12: #{identity_generator_forward.14} parent=0 // pred_region
    %vm19 = vcmask 261120
    %20 = vst.msk [vmem:[#allocation2] sm:$0xff] %vm19, 0.0
    %21 = vst.msk [vmem:[#allocation2 + $0x8] sm:$0xff] %vm19, 0.0
    %22 = vst.msk [vmem:[#allocation2 + $0x10] sm:$0xff] %vm19, 0.0
    %23 = vst.msk [vmem:[#allocation2 + $0x18] sm:$0xff] %vm19, 0.0
  $region13: #{identity_generator_forward.14} parent=0 // pred_fallthru
    _
  %v24 = vld [vmem:[#allocation2] sm:$0xff]
  %v25 = vld [vmem:[#allocation2 + $0x8] sm:$0xff]
  %v26 = vld [vmem:[#allocation2 + $0x10] sm:$0xff]
  %v27 = vld [vmem:[#allocation2 + $0x18] sm:$0xff]
  %v28 = vld [vmem:[%s0] sm:$0xff]
  %v29 = vld [vmem:[%s0 + $0x8] sm:$0xff]
  %v30 = vld [vmem:[%s0 + $0x10] sm:$0xf]
  %v31 = vld [vmem:[%s0 + $0x14] sm:$0xff]
  %v32 = vld [vmem:[%s0 + $0x1c] sm:$0xff]
  %v33 = vld [vmem:[%s0 + $0x24] sm:$0xf]
  %v34 = vld [vmem:[%s0 + $0x28] sm:$0xff]
  %v35 = vld [vmem:[%s0 + $0x30] sm:$0xff]
  %v36 = vld [vmem:[%s0 + $0x38] sm:$0xf]
  %v37 = vld [vmem:[%s0 + $0x3c] sm:$0xff]
  %v38 = vld [vmem:[%s0 + $0x44] sm:$0xff]
  %v39 = vld [vmem:[%s0 + $0x4c] sm:$0xf]
  %v40 = vld [vmem:[%s1] sm:$0xf]
  %v41 = vld [vmem:[%s1 + $0x4] sm:$0xf]
  %v42 = vld [vmem:[%s1 + $0x8] sm:$0xf]
  %v43 = vld [vmem:[%s1 + $0xc] sm:$0xf]
  %v44 = vld [vmem:[%s1 + $0x10] sm:$0xf]
  %v45 = vld [vmem:[%s1 + $0x14] sm:$0xf]
  %v46 = vld [vmem:[%s1 + $0x18] sm:$0xf]
  %v47 = vld [vmem:[%s1 + $0x1c] sm:$0xf]
  %v48 = vld [vmem:[%s1 + $0x20] sm:$0xf]
  %v49 = vld [vmem:[%s1 + $0x24] sm:$0xf]
  %v50 = vld [vmem:[%s1 + $0x28] sm:$0xf]
  %v51 = vld [vmem:[%s1 + $0x2c] sm:$0xf]
  %v52 = vld [vmem:[%s1 + $0x30] sm:$0xf]
  %v53 = vld [vmem:[%s1 + $0x34] sm:$0xf]
  %v54 = vld [vmem:[%s1 + $0x38] sm:$0xf]
  %v55 = vld [vmem:[%s1 + $0x3c] sm:$0xf]
  %v56 = vld [vmem:[%s1 + $0x40] sm:$0xf]
  %v57 = vld [vmem:[%s1 + $0x44] sm:$0xf]
  %v58 = vld [vmem:[%s1 + $0x48] sm:$0xf]
  %v59 = vld [vmem:[%s1 + $0x4c] sm:$0xf]
  %v60 = vld [vmem:[%s1 + $0x50] sm:$0xf]
  %v61 = vld [vmem:[%s1 + $0x54] sm:$0xf]
  %v62 = vld [vmem:[%s1 + $0x58] sm:$0xf]
  %v63 = vld [vmem:[%s1 + $0x5c] sm:$0xf]
  %v64 = vld [vmem:[%s1 + $0x60] sm:$0xf]
  %v65 = vld [vmem:[%s1 + $0x64] sm:$0xf]
  %v66 = vld [vmem:[%s1 + $0x68] sm:$0xf]
  %v67 = vld [vmem:[%s1 + $0x6c] sm:$0xf]
  %v68 = vld [vmem:[%s1 + $0x70] sm:$0xf]
  %v69 = vld [vmem:[%s1 + $0x74] sm:$0xf]
  %v70 = vld [vmem:[%s1 + $0x78] sm:$0xf]
  %v71 = vld [vmem:[%s1 + $0x7c] sm:$0xf]
  %v72 = vld [vmem:[%s1 + $0x80] sm:$0xf]
  %v73 = vld [vmem:[%s1 + $0x84] sm:$0xf]
  %v74 = vld [vmem:[%s1 + $0x88] sm:$0xf]
  %v75 = vld [vmem:[%s1 + $0x8c] sm:$0xf]
  %v76 = vld [vmem:[%s1 + $0x90] sm:$0xf]
  %v77 = vld [vmem:[%s1 + $0x94] sm:$0xf]
  %v78 = vld [vmem:[%s1 + $0x98] sm:$0xf]
  %v79 = vld [vmem:[%s1 + $0x9c] sm:$0xf]
  %v80 = vld [vmem:[%s1 + $0xa0] sm:$0xf]
  %v81 = vld [vmem:[%s1 + $0xa4] sm:$0xf]
  %v82 = vld [vmem:[%s1 + $0xa8] sm:$0xf]
  %v83 = vld [vmem:[%s1 + $0xac] sm:$0xf]
  %v84 = vld [vmem:[%s1 + $0xb0] sm:$0xf]
  %v85 = vld [vmem:[%s1 + $0xb4] sm:$0xf]
  %v86 = vld [vmem:[%s1 + $0xb8] sm:$0xf]
  %v87 = vld [vmem:[%s1 + $0xbc] sm:$0xf]
  %v88 = vld [vmem:[%s1 + $0xc0] sm:$0xf]
  %v89 = vld [vmem:[%s1 + $0xc4] sm:$0xf]
  %v90 = vld [vmem:[%s1 + $0xc8] sm:$0xf]
  %v91 = vld [vmem:[%s1 + $0xcc] sm:$0xf]
  %v92 = vld [vmem:[%s1 + $0xd0] sm:$0xf]
  %v93 = vld [vmem:[%s1 + $0xd4] sm:$0xf]
  %v94 = vld [vmem:[%s1 + $0xd8] sm:$0xf]
  %v95 = vld [vmem:[%s1 + $0xdc] sm:$0xf]
  %v96 = vld [vmem:[%s1 + $0xe0] sm:$0xf]
  %v97 = vld [vmem:[%s1 + $0xe4] sm:$0xf]
  %v98 = vld [vmem:[%s1 + $0xe8] sm:$0xf]
  %v99 = vld [vmem:[%s1 + $0xec] sm:$0xf]
  %v100 = vld [vmem:[%s1 + $0xf0] sm:$0xf]
  %v101 = vld [vmem:[%s1 + $0xf4] sm:$0xf]
  %v102 = vld [vmem:[%s1 + $0xf8] sm:$0xf]
  %v103 = vld [vmem:[%s1 + $0xfc] sm:$0xf]
  %v104 = vld [vmem:[%s1 + $0x100] sm:$0xf]
  %v105 = vld [vmem:[%s1 + $0x104] sm:$0xf]
  %v106 = vld [vmem:[%s1 + $0x108] sm:$0xf]
  %v107 = vld [vmem:[%s1 + $0x10c] sm:$0xf]
  %v108 = vld [vmem:[%s1 + $0x110] sm:$0xf]
  %v109 = vld [vmem:[%s1 + $0x114] sm:$0xf]
  %v110 = vld [vmem:[%s1 + $0x118] sm:$0xf]
  %v111 = vld [vmem:[%s1 + $0x11c] sm:$0xf]
  %v124 = vunpack.c.l.b16 %v28
  %v125 = vunpack.c.h.b16 %v28
  %v126 = vunpack.c.l.b16 %v29
  %v127 = vunpack.c.h.b16 %v29
  %v128 = vunpack.c.l.b16 %v30
  %v129 = vunpack.c.l.b16 %v31
  %v130 = vunpack.c.h.b16 %v31
  %v131 = vunpack.c.l.b16 %v32
  %v132 = vunpack.c.h.b16 %v32
  %v133 = vunpack.c.l.b16 %v33
  %v134 = vunpack.c.l.b16 %v34
  %v135 = vunpack.c.h.b16 %v34
  %v136 = vunpack.c.l.b16 %v35
  %v137 = vunpack.c.h.b16 %v35
  %v138 = vunpack.c.l.b16 %v36
  %v139 = vunpack.c.l.b16 %v37
  %v140 = vunpack.c.h.b16 %v37
  %v141 = vunpack.c.l.b16 %v38
  %v142 = vunpack.c.h.b16 %v38
  %v143 = vunpack.c.l.b16 %v39
  %v144 = vpack.c.b16 %v129, %v124
  %v145 = vpack.c.b16 %v130, %v125
  %v146 = vpack.c.b16 %v131, %v126
  %v147 = vpack.c.b16 %v132, %v127
  %v148 = vpack.c.b16 %v133, %v128
  %v149 = vpack.c.b16 %v139, %v134
  %v150 = vpack.c.b16 %v140, %v135
  %v151 = vpack.c.b16 %v141, %v136
  %v152 = vpack.c.b16 %v142, %v137
  %v153 = vpack.c.b16 %v143, %v138
  %v234 = vunpack.c.l.b16 %v40
  %v235 = vunpack.c.l.b16 %v41
  %v236 = vunpack.c.l.b16 %v42
  %v237 = vunpack.c.l.b16 %v43
  %v238 = vunpack.c.l.b16 %v44
  %v239 = vunpack.c.l.b16 %v45
  %v240 = vunpack.c.l.b16 %v46
  %v241 = vunpack.c.l.b16 %v47
  %v242 = vunpack.c.l.b16 %v48
  %v243 = vunpack.c.l.b16 %v49
  %v244 = vunpack.c.l.b16 %v50
  %v245 = vunpack.c.l.b16 %v51
  %v246 = vunpack.c.l.b16 %v52
  %v247 = vunpack.c.l.b16 %v53
  %v248 = vunpack.c.l.b16 %v54
  %v249 = vunpack.c.l.b16 %v55
  %v250 = vunpack.c.l.b16 %v56
  %v251 = vunpack.c.l.b16 %v57
  %v252 = vunpack.c.l.b16 %v58
  %v253 = vunpack.c.l.b16 %v59
  %v254 = vunpack.c.l.b16 %v60
  %v255 = vunpack.c.l.b16 %v61
  %v256 = vunpack.c.l.b16 %v62
  %v257 = vunpack.c.l.b16 %v63
  %v258 = vunpack.c.l.b16 %v64
  %v259 = vunpack.c.l.b16 %v65
  %v260 = vunpack.c.l.b16 %v66
  %v261 = vunpack.c.l.b16 %v67
  %v262 = vunpack.c.l.b16 %v68
  %v263 = vunpack.c.l.b16 %v69
  %v264 = vunpack.c.l.b16 %v70
  %v265 = vunpack.c.l.b16 %v71
  %v266 = vunpack.c.l.b16 %v72
  %v267 = vunpack.c.l.b16 %v73
  %v268 = vunpack.c.l.b16 %v74
  %v269 = vunpack.c.l.b16 %v75
  %v270 = vunpack.c.l.b16 %v76
  %v271 = vunpack.c.l.b16 %v77
  %v272 = vunpack.c.l.b16 %v78
  %v273 = vunpack.c.l.b16 %v79
  %v274 = vunpack.c.l.b16 %v80
  %v275 = vunpack.c.l.b16 %v81
  %v276 = vunpack.c.l.b16 %v82
  %v277 = vunpack.c.l.b16 %v83
  %v278 = vunpack.c.l.b16 %v84
  %v279 = vunpack.c.l.b16 %v85
  %v280 = vunpack.c.l.b16 %v86
  %v281 = vunpack.c.l.b16 %v87
  %v282 = vunpack.c.l.b16 %v88
  %v283 = vunpack.c.l.b16 %v89
  %v284 = vunpack.c.l.b16 %v90
  %v285 = vunpack.c.l.b16 %v91
  %v286 = vunpack.c.l.b16 %v92
  %v287 = vunpack.c.l.b16 %v93
  %v288 = vunpack.c.l.b16 %v94
  %v289 = vunpack.c.l.b16 %v95
  %v290 = vunpack.c.l.b16 %v96
  %v291 = vunpack.c.l.b16 %v97
  %v292 = vunpack.c.l.b16 %v98
  %v293 = vunpack.c.l.b16 %v99
  %v294 = vunpack.c.l.b16 %v100
  %v295 = vunpack.c.l.b16 %v101
  %v296 = vunpack.c.l.b16 %v102
  %v297 = vunpack.c.l.b16 %v103
  %v298 = vunpack.c.l.b16 %v104
  %v299 = vunpack.c.l.b16 %v105
  %v300 = vunpack.c.l.b16 %v106
  %v301 = vunpack.c.l.b16 %v107
  %v302 = vunpack.c.l.b16 %v108
  %v303 = vunpack.c.l.b16 %v109
  %v304 = vunpack.c.l.b16 %v110
  %v305 = vunpack.c.l.b16 %v111
  %v306 = vpack.c.b16 %v235, %v234
  %v307 = vpack.c.b16 %v237, %v236
  %v308 = vpack.c.b16 %v239, %v238
  %v309 = vpack.c.b16 %v241, %v240
  %v310 = vpack.c.b16 %v243, %v242
  %v311 = vpack.c.b16 %v245, %v244
  %v312 = vpack.c.b16 %v247, %v246
  %v313 = vpack.c.b16 %v249, %v248
  %v314 = vpack.c.b16 %v251, %v250
  %v315 = vpack.c.b16 %v253, %v252
  %v316 = vpack.c.b16 %v255, %v254
  %v317 = vpack.c.b16 %v257, %v256
  %v318 = vpack.c.b16 %v259, %v258
  %v319 = vpack.c.b16 %v261, %v260
  %v320 = vpack.c.b16 %v263, %v262
  %v321 = vpack.c.b16 %v265, %v264
  %v322 = vpack.c.b16 %v267, %v266
  %v323 = vpack.c.b16 %v269, %v268
  %v324 = vpack.c.b16 %v271, %v270
  %v325 = vpack.c.b16 %v273, %v272
  %v326 = vpack.c.b16 %v275, %v274
  %v327 = vpack.c.b16 %v277, %v276
  %v328 = vpack.c.b16 %v279, %v278
  %v329 = vpack.c.b16 %v281, %v280
  %v330 = vpack.c.b16 %v283, %v282
  %v331 = vpack.c.b16 %v285, %v284
  %v332 = vpack.c.b16 %v287, %v286
  %v333 = vpack.c.b16 %v289, %v288
  %v334 = vpack.c.b16 %v291, %v290
  %v335 = vpack.c.b16 %v293, %v292
  %v336 = vpack.c.b16 %v295, %v294
  %v337 = vpack.c.b16 %v297, %v296
  %v338 = vpack.c.b16 %v299, %v298
  %v339 = vpack.c.b16 %v301, %v300
  %v340 = vpack.c.b16 %v303, %v302
  %v341 = vpack.c.b16 %v305, %v304
  %vm378 = vcmask 523264
  %v380 = vsel %vm378, %v148, 0
  %v383 = vsel %vm378, %v153, 0
  %385 = vmatpush.bf16.msra.mxu0 %v313
  %386 = vmatpush.bf16.msra.mxu0 %v312
  %387 = vmatpush.bf16.msra.mxu0 %v311
  %388 = vmatpush.bf16.msra.mxu0 %v310
  %389 = vmatpush.bf16.msra.mxu0 %v309
  %390 = vmatpush.bf16.msra.mxu0 %v308
  %391 = vmatpush.bf16.msra.mxu0 %v307
  %392 = vmatpush.bf16.msra.mxu0 %v306
  %393 = vmatmul.bf16.gmra.mxu0 %v144
  %v394 = vpop.f32.mrf.mxu0
  %v395 = vadd.f32 0.0, %v394
  %v396 = vpop.f32.mrf.mxu0
  %v397 = vadd.f32 0.0, %v396
  %398 = vmatmul.bf16.gmra.mxu0 %v149
  %v399 = vpop.f32.mrf.mxu0
  %v400 = vadd.f32 0.0, %v399
  %v401 = vpop.f32.mrf.mxu0
  %v402 = vadd.f32 0.0, %v401
  %403 = vdwg.mxu0
  %404 = vmatpush.bf16.msra.mxu0 %v321
  %405 = vmatpush.bf16.msra.mxu0 %v320
  %406 = vmatpush.bf16.msra.mxu0 %v319
  %407 = vmatpush.bf16.msra.mxu0 %v318
  %408 = vmatpush.bf16.msra.mxu0 %v317
  %409 = vmatpush.bf16.msra.mxu0 %v316
  %410 = vmatpush.bf16.msra.mxu0 %v315
  %411 = vmatpush.bf16.msra.mxu0 %v314
  %412 = vmatmul.bf16.gmra.mxu0 %v145
  %v413 = vpop.f32.mrf.mxu0
  %v414 = vadd.f32 %v395, %v413
  %v415 = vpop.f32.mrf.mxu0
  %v416 = vadd.f32 %v397, %v415
  %417 = vmatmul.bf16.gmra.mxu0 %v150
  %v418 = vpop.f32.mrf.mxu0
  %v419 = vadd.f32 %v400, %v418
  %v420 = vpop.f32.mrf.mxu0
  %v421 = vadd.f32 %v402, %v420
  %422 = vdwg.mxu0
  %423 = vmatpush.bf16.msra.mxu0 %v329
  %424 = vmatpush.bf16.msra.mxu0 %v328
  %425 = vmatpush.bf16.msra.mxu0 %v327
  %426 = vmatpush.bf16.msra.mxu0 %v326
  %427 = vmatpush.bf16.msra.mxu0 %v325
  %428 = vmatpush.bf16.msra.mxu0 %v324
  %429 = vmatpush.bf16.msra.mxu0 %v323
  %430 = vmatpush.bf16.msra.mxu0 %v322
  %431 = vmatmul.bf16.gmra.mxu0 %v146
  %v432 = vpop.f32.mrf.mxu0
  %v433 = vadd.f32 %v414, %v432
  %v434 = vpop.f32.mrf.mxu0
  %v435 = vadd.f32 %v416, %v434
  %436 = vmatmul.bf16.gmra.mxu0 %v151
  %v437 = vpop.f32.mrf.mxu0
  %v438 = vadd.f32 %v419, %v437
  %v439 = vpop.f32.mrf.mxu0
  %v440 = vadd.f32 %v421, %v439
  %441 = vdwg.mxu0
  %442 = vmatpush.bf16.msra.mxu0 %v337
  %443 = vmatpush.bf16.msra.mxu0 %v336
  %444 = vmatpush.bf16.msra.mxu0 %v335
  %445 = vmatpush.bf16.msra.mxu0 %v334
  %446 = vmatpush.bf16.msra.mxu0 %v333
  %447 = vmatpush.bf16.msra.mxu0 %v332
  %448 = vmatpush.bf16.msra.mxu0 %v331
  %449 = vmatpush.bf16.msra.mxu0 %v330
  %450 = vmatmul.bf16.gmra.mxu0 %v147
  %v451 = vpop.f32.mrf.mxu0
  %v452 = vadd.f32 %v433, %v451
  %v453 = vpop.f32.mrf.mxu0
  %v454 = vadd.f32 %v435, %v453
  %455 = vmatmul.bf16.gmra.mxu0 %v152
  %v456 = vpop.f32.mrf.mxu0
  %v457 = vadd.f32 %v438, %v456
  %v458 = vpop.f32.mrf.mxu0
  %v459 = vadd.f32 %v440, %v458
  %460 = vdwg.mxu0
  %461 = vmatpush.bf16.msra.mxu0 0
  %462 = vmatpush.bf16.msra.mxu0 0
  %463 = vmatpush.bf16.msra.mxu0 0
  %464 = vmatpush.bf16.msra.mxu0 0
  %465 = vmatpush.bf16.msra.mxu0 %v341
  %466 = vmatpush.bf16.msra.mxu0 %v340
  %467 = vmatpush.bf16.msra.mxu0 %v339
  %468 = vmatpush.bf16.msra.mxu0 %v338
  %469 = vmatmul.bf16.gmra.mxu0 %v380
  %v470 = vpop.f32.mrf.mxu0
  %v471 = vadd.f32 %v452, %v470
  %v472 = vpop.f32.mrf.mxu0
  %v473 = vadd.f32 %v454, %v472
  %474 = vmatmul.bf16.gmra.mxu0 %v383
  %v475 = vpop.f32.mrf.mxu0
  %v476 = vadd.f32 %v457, %v475
  %v477 = vpop.f32.mrf.mxu0
  %v478 = vadd.f32 %v459, %v477
  %479 = vdwg.mxu0
  %v480 = vadd.f32 %v24, %v471
  %v481 = vadd.f32 %v25, %v473
  %v482 = vadd.f32 %v26, %v476
  %v483 = vadd.f32 %v27, %v478
  %vm484 = vcmask 261120
  %485 = vst.msk [vmem:[#allocation2] sm:$0xff] %vm484, %v480
  %486 = vst.msk [vmem:[#allocation2 + $0x8] sm:$0xff] %vm484, %v481
  %487 = vst.msk [vmem:[#allocation2 + $0x10] sm:$0xff] %vm484, %v482
  %488 = vst.msk [vmem:[#allocation2 + $0x18] sm:$0xff] %vm484, %v483
  // Predicated region
  $region14: #{identity_generator_forward.14} parent=0 // pred_check
    %p489 = pneg %p15
  $region15: #{identity_generator_forward.14} parent=0 // pred_check_branch
    %491 = sbr.rel (%p489) target = $region17
  $region16: #{identity_generator_forward.14} parent=0 // pred_region
    %v492 = vld [vmem:[#allocation2] sm:$0xff]
    %v493 = vld [vmem:[#allocation2 + $0x8] sm:$0xff]
    %v494 = vld [vmem:[#allocation2 + $0x10] sm:$0xff]
    %v495 = vld [vmem:[#allocation2 + $0x18] sm:$0xff]
    %496 = vst.msk [vmem:[%s2] sm:$0xff] %vm484, %v492
    %497 = vst.msk [vmem:[%s2 + $0x8] sm:$0xff] %vm484, %v493
    %498 = vst.msk [vmem:[%s2 + $0x10] sm:$0xff] %vm484, %v494
    %499 = vst.msk [vmem:[%s2 + $0x18] sm:$0xff] %vm484, %v495
    %v500 = vsel %vm484, %v492, 0.0
    %v501 = vsel %vm484, %v493, 0.0
    %v502 = vadd.f32 %v500, %v501
    %v503 = vsel %vm484, %v494, 0.0
    %v504 = vadd.f32 %v502, %v503
    %v505 = vsel %vm484, %v495, 0.0
    %v506 = vadd.f32 %v504, %v505
    %v507 = vrot.slane %v506, 4
    %v508 = vadd.f32 %v506, %v507
    %v509 = vrot.slane %v508, 2
    %v510 = vadd.f32 %v508, %v509
    %v511 = vrot.slane %v510, 1
    %v512 = vadd.f32 %v510, %v511
    %vm513 = vcmask 253952
    %514 = vst.msk [vmem:[%s3] sm:$0x1] %vm513, %v512
    %v515 = vmul.f32 %v492, %v492
    %v516 = vmul.f32 %v493, %v493
    %v517 = vmul.f32 %v494, %v494
    %v518 = vmul.f32 %v495, %v495
    %v519 = vsel %vm484, %v515, 0.0
    %v520 = vsel %vm484, %v516, 0.0
    %v521 = vadd.f32 %v519, %v520
    %v522 = vsel %vm484, %v517, 0.0
    %v523 = vadd.f32 %v521, %v522
    %v524 = vsel %vm484, %v518, 0.0
    %v525 = vadd.f32 %v523, %v524
    %v526 = vrot.slane %v525, 4
    %v527 = vadd.f32 %v525, %v526
    %v528 = vrot.slane %v527, 2
    %v529 = vadd.f32 %v527, %v528
    %v530 = vrot.slane %v529, 1
    %v531 = vadd.f32 %v529, %v530
    %532 = vst.msk [vmem:[%s4] sm:$0x1] %vm513, %v531
  $region17: #{identity_generator_forward.14} parent=0 // pred_fallthru
    _
  // Predicated region
  $region18: #{identity_generator_forward.14} parent=0 // pred_check
    _
  $region19: #{identity_generator_forward.14} parent=0 // pred_check_branch
    %534 = sbr.rel (0) target = $region21
  $region20: #{identity_generator_forward.14} parent=0 // pred_region
    _
  $region21: #{identity_generator_forward.14} parent=0 // pred_fallthru
    _
  // Predicated region
  $region22: #{identity_generator_forward.14} parent=0 // pred_check
    _
  $region23: #{identity_generator_forward.14} parent=0 // pred_check_branch
    %536 = sbr.rel (0) target = $region25
  $region24: #{identity_generator_forward.14} parent=0 // pred_region
    _
  $region25: #{identity_generator_forward.14} parent=0 // pred_fallthru
    _
  // Predicated region
  $region26: #{identity_generator_forward.14} parent=0 // pred_check
    _
  $region27: #{identity_generator_forward.14} parent=0 // pred_check_branch
    %538 = sbr.rel (0) target = $region29
  $region28: #{identity_generator_forward.14} parent=0 // pred_region
    _
  $region29: #{identity_generator_forward.14} parent=0 // pred_fallthru
    _
  // Predicated region
  $region30: #{identity_generator_forward.14} parent=0 // pred_check
    _
  $region31: #{identity_generator_forward.14} parent=0 // pred_check_branch
    %540 = sbr.rel (0) target = $region33
  $region32: #{identity_generator_forward.14} parent=0 // pred_region
    _
  $region33: #{identity_generator_forward.14} parent=0 // pred_fallthru
    _
  // Predicated region
  $region34: #{identity_generator_forward.14} parent=0 // pred_check
    _
  $region35: #{identity_generator_forward.14} parent=0 // pred_check_branch
    %542 = sbr.rel (0) target = $region37
  $region36: #{identity_generator_forward.14} parent=0 // pred_region
    _
  $region37: #{identity_generator_forward.14} parent=0 // pred_fallthru
    _
  // Predicated region
  $region38: #{identity_generator_forward.14} parent=0 // pred_check
    _
  $region39: #{identity_generator_forward.14} parent=0 // pred_check_branch
    %544 = sbr.rel (0) target = $region41
  $region40: #{identity_generator_forward.14} parent=0 // pred_region
    _
  $region41: #{identity_generator_forward.14} parent=0 // pred_fallthru
    _

// kernel: identity_generator_forward.18
$region0: #{identity_generator_forward.18}
  #allocation0 [shape = 'u32[]', space=smem, size = 0x4, offset = 0x4, fixed_abs, tag = 'smem constant byte address 0x4 - core index']
  #allocation1 [shape = 'u32[72,128]{1,0:T(1,128)}', space=vmem, size = 0x9000, scoped, tag = 'internal scratch']
  %s0 = inlined_call_operand.vmem [shape: f32[128,32], index: 0, kind: input, shape index: {}]
  %s1 = inlined_call_operand.vmem [shape: f32[1,32], index: 1, kind: input, shape index: {}]
  %s2 = inlined_call_operand.vmem [shape: f32[1,32], index: 2, kind: input, shape index: {}]
  %s3 = inlined_call_operand.vmem [shape: bf16[128,32], index: 3, kind: output, shape index: {}]
  %s4 = sld [smem:[#allocation0]]
  $region22: #{identity_generator_forward.18} parent=0
    _
  %s6 = ssub.s32 1, %s4
  %s7 = scalar_select 0, %s6, %s4
  // Predicated region
  $region2: #{identity_generator_forward.18} parent=0 // pred_check
    _
  $region3: #{identity_generator_forward.18} parent=0 // pred_check_branch
    %9 = sbr.rel (0) target = $region5
  $region4: #{identity_generator_forward.18} parent=0 // pred_region
    _
  $region5: #{identity_generator_forward.18} parent=0 // pred_fallthru
    _
  // Predicated region
  $region6: #{identity_generator_forward.18} parent=0 // pred_check
    _
  $region7: #{identity_generator_forward.18} parent=0 // pred_check_branch
    %11 = sbr.rel (0) target = $region9
  $region8: #{identity_generator_forward.18} parent=0 // pred_region
    _
  $region9: #{identity_generator_forward.18} parent=0 // pred_fallthru
    _
  // Predicated region
  $region10: #{identity_generator_forward.18} parent=0 // pred_check
    _
  $region11: #{identity_generator_forward.18} parent=0 // pred_check_branch
    %13 = sbr.rel (0) target = $region13
  $region12: #{identity_generator_forward.18} parent=0 // pred_region
    _
  $region13: #{identity_generator_forward.18} parent=0 // pred_fallthru
    _
  %v14 = vld [vmem:[%s0] sm:$0xff]
  %v15 = vld [vmem:[%s0 + $0x8] sm:$0xff]
  %v16 = vld [vmem:[%s0 + $0x10] sm:$0xff]
  %v17 = vld [vmem:[%s0 + $0x18] sm:$0xff]
  %v18 = vld [vmem:[%s0 + $0x20] sm:$0xff]
  %v19 = vld [vmem:[%s0 + $0x28] sm:$0xff]
  %v20 = vld [vmem:[%s0 + $0x30] sm:$0xff]
  %v21 = vld [vmem:[%s0 + $0x38] sm:$0xff]
  %v22 = vld [vmem:[%s0 + $0x40] sm:$0xff]
  %v23 = vld [vmem:[%s0 + $0x48] sm:$0xff]
  %v24 = vld [vmem:[%s0 + $0x50] sm:$0xff]
  %v25 = vld [vmem:[%s0 + $0x58] sm:$0xff]
  %v26 = vld [vmem:[%s0 + $0x60] sm:$0xff]
  %v27 = vld [vmem:[%s0 + $0x68] sm:$0xff]
  %v28 = vld [vmem:[%s0 + $0x70] sm:$0xff]
  %v29 = vld [vmem:[%s0 + $0x78] sm:$0xff]
  %v30 = vld [vmem:[%s1] sm:$0x1]
  %v32 = vperm.slane %v30, 0
  %v34 = vmul.f32 %v14, %v32
  %v35 = vmul.f32 %v15, %v32
  %v36 = vmul.f32 %v16, %v32
  %v37 = vmul.f32 %v17, %v32
  %v38 = vmul.f32 %v18, %v32
  %v39 = vmul.f32 %v19, %v32
  %v40 = vmul.f32 %v20, %v32
  %v41 = vmul.f32 %v21, %v32
  %v42 = vmul.f32 %v22, %v32
  %v43 = vmul.f32 %v23, %v32
  %v44 = vmul.f32 %v24, %v32
  %v45 = vmul.f32 %v25, %v32
  %v46 = vmul.f32 %v26, %v32
  %v47 = vmul.f32 %v27, %v32
  %v48 = vmul.f32 %v28, %v32
  %v49 = vmul.f32 %v29, %v32
  %v50 = vld [vmem:[%s2] sm:$0x1]
  %v52 = vperm.slane %v50, 0
  %v54 = vadd.f32 %v34, %v52
  %v55 = vadd.f32 %v35, %v52
  %v56 = vadd.f32 %v36, %v52
  %v57 = vadd.f32 %v37, %v52
  %v58 = vadd.f32 %v38, %v52
  %v59 = vadd.f32 %v39, %v52
  %v60 = vadd.f32 %v40, %v52
  %v61 = vadd.f32 %v41, %v52
  %v62 = vadd.f32 %v42, %v52
  %v63 = vadd.f32 %v43, %v52
  %v64 = vadd.f32 %v44, %v52
  %v65 = vadd.f32 %v45, %v52
  %v66 = vadd.f32 %v46, %v52
  %v67 = vadd.f32 %v47, %v52
  %v68 = vadd.f32 %v48, %v52
  %v69 = vadd.f32 %v49, %v52
  %v70 = vmax.f32 %v54, 0.0
  %v71 = vmax.f32 %v55, 0.0
  %v72 = vmax.f32 %v56, 0.0
  %v73 = vmax.f32 %v57, 0.0
  %v74 = vmax.f32 %v58, 0.0
  %v75 = vmax.f32 %v59, 0.0
  %v76 = vmax.f32 %v60, 0.0
  %v77 = vmax.f32 %v61, 0.0
  %v78 = vmax.f32 %v62, 0.0
  %v79 = vmax.f32 %v63, 0.0
  %v80 = vmax.f32 %v64, 0.0
  %v81 = vmax.f32 %v65, 0.0
  %v82 = vmax.f32 %v66, 0.0
  %v83 = vmax.f32 %v67, 0.0
  %v84 = vmax.f32 %v68, 0.0
  %v85 = vmax.f32 %v69, 0.0
  %v86 = vpack.c.bf16 %v70, %v70
  %v87 = vpack.c.bf16 %v71, %v71
  %v88 = vpack.c.bf16 %v72, %v72
  %v89 = vpack.c.bf16 %v73, %v73
  %v90 = vpack.c.bf16 %v74, %v74
  %v91 = vpack.c.bf16 %v75, %v75
  %v92 = vpack.c.bf16 %v76, %v76
  %v93 = vpack.c.bf16 %v77, %v77
  %v94 = vpack.c.bf16 %v78, %v78
  %v95 = vpack.c.bf16 %v79, %v79
  %v96 = vpack.c.bf16 %v80, %v80
  %v97 = vpack.c.bf16 %v81, %v81
  %v98 = vpack.c.bf16 %v82, %v82
  %v99 = vpack.c.bf16 %v83, %v83
  %v100 = vpack.c.bf16 %v84, %v84
  %v101 = vpack.c.bf16 %v85, %v85
  %vm102 = vcmask 257024
  %103 = vst.msk [vmem:[%s3] sm:$0xf] %vm102, %v86
  %104 = vst.msk [vmem:[%s3 + $0x4] sm:$0xf] %vm102, %v87
  %105 = vst.msk [vmem:[%s3 + $0x8] sm:$0xf] %vm102, %v88
  %106 = vst.msk [vmem:[%s3 + $0xc] sm:$0xf] %vm102, %v89
  %107 = vst.msk [vmem:[%s3 + $0x10] sm:$0xf] %vm102, %v90
  %108 = vst.msk [vmem:[%s3 + $0x14] sm:$0xf] %vm102, %v91
  %109 = vst.msk [vmem:[%s3 + $0x18] sm:$0xf] %vm102, %v92
  %110 = vst.msk [vmem:[%s3 + $0x1c] sm:$0xf] %vm102, %v93
  %111 = vst.msk [vmem:[%s3 + $0x20] sm:$0xf] %vm102, %v94
  %112 = vst.msk [vmem:[%s3 + $0x24] sm:$0xf] %vm102, %v95
  %113 = vst.msk [vmem:[%s3 + $0x28] sm:$0xf] %vm102, %v96
  %114 = vst.msk [vmem:[%s3 + $0x2c] sm:$0xf] %vm102, %v97
  %115 = vst.msk [vmem:[%s3 + $0x30] sm:$0xf] %vm102, %v98
  %116 = vst.msk [vmem:[%s3 + $0x34] sm:$0xf] %vm102, %v99
  %117 = vst.msk [vmem:[%s3 + $0x38] sm:$0xf] %vm102, %v100
  %118 = vst.msk [vmem:[%s3 + $0x3c] sm:$0xf] %vm102, %v101
  // Predicated region
  $region14: #{identity_generator_forward.18} parent=0 // pred_check
    _
  $region15: #{identity_generator_forward.18} parent=0 // pred_check_branch
    %120 = sbr.rel (0) target = $region17
  $region16: #{identity_generator_forward.18} parent=0 // pred_region
    _
  $region17: #{identity_generator_forward.18} parent=0 // pred_fallthru
    _
  // Predicated region
  $region18: #{identity_generator_forward.18} parent=0 // pred_check
    _
  $region19: #{identity_generator_forward.18} parent=0 // pred_check_branch
    %122 = sbr.rel (0) target = $region21
  $region20: #{identity_generator_forward.18} parent=0 // pred_region
    _
  $region21: #{identity_generator_forward.18} parent=0 // pred_fallthru
    _

// kernel: identity_generator_forward.22
$region0: #{identity_generator_forward.22}
  #allocation0 [shape = 'u32[]', space=smem, size = 0x4, offset = 0x4, fixed_abs, tag = 'smem constant byte address 0x4 - core index']
  #allocation1 [shape = 'u32[72,128]{1,0:T(1,128)}', space=vmem, size = 0x9000, scoped, tag = 'internal scratch']
  #allocation2 [shape = 'f32[128,16]{1,0:T(8,128)}', space=vmem, size = 0x10000, scoped, tag = 'scratch operand']
  %s0 = inlined_call_operand.vmem [shape: bf16[128,128], index: 0, kind: input, shape index: {}]
  %s1 = inlined_call_operand.vmem [shape: bf16[128,16], index: 1, kind: input, shape index: {}]
  %s2 = inlined_call_operand.vmem [shape: f32[128,16], index: 2, kind: output, shape index: {0}]
  %s3 = inlined_call_operand.vmem [shape: f32[1,1,16], index: 3, kind: output, shape index: {1}]
  %s4 = inlined_call_operand.vmem [shape: f32[1,1,16], index: 4, kind: output, shape index: {2}]
  %5 = xla_tuple %s2, %s3, %s4
  %s6 = sld [smem:[#allocation0]]
  $region42: #{identity_generator_forward.22} parent=0
    _
  %s8 = ssub.s32 1, %s6
  %s9 = scalar_select 0, %s8, %s6
  // Predicated region
  $region2: #{identity_generator_forward.22} parent=0 // pred_check
    _
  $region3: #{identity_generator_forward.22} parent=0 // pred_check_branch
    %11 = sbr.rel (0) target = $region5
  $region4: #{identity_generator_forward.22} parent=0 // pred_region
    _
  $region5: #{identity_generator_forward.22} parent=0 // pred_fallthru
    _
  // Predicated region
  $region6: #{identity_generator_forward.22} parent=0 // pred_check
    _
  $region7: #{identity_generator_forward.22} parent=0 // pred_check_branch
    %13 = sbr.rel (0) target = $region9
  $region8: #{identity_generator_forward.22} parent=0 // pred_region
    _
  $region9: #{identity_generator_forward.22} parent=0 // pred_fallthru
    _
  %p14 = scmp.eq.s32.totalorder 0, 0
  // Predicated region
  $region10: #{identity_generator_forward.22} parent=0 // pred_check
    %p15 = pneg %p14
  $region11: #{identity_generator_forward.22} parent=0 // pred_check_branch
    %17 = sbr.rel (%p15) target = $region13
  $region12: #{identity_generator_forward.22} parent=0 // pred_region
    %vm18 = vcmask 130048
    %19 = vst.msk [vmem:[#allocation2] sm:$0xff] %vm18, 0.0
    %20 = vst.msk [vmem:[#allocation2 + $0x8] sm:$0xff] %vm18, 0.0
    %21 = vst.msk [vmem:[#allocation2 + $0x10] sm:$0xff] %vm18, 0.0
    %22 = vst.msk [vmem:[#allocation2 + $0x18] sm:$0xff] %vm18, 0.0
    %23 = vst.msk [vmem:[#allocation2 + $0x20] sm:$0xff] %vm18, 0.0
    %24 = vst.msk [vmem:[#allocation2 + $0x28] sm:$0xff] %vm18, 0.0
    %25 = vst.msk [vmem:[#allocation2 + $0x30] sm:$0xff] %vm18, 0.0
    %26 = vst.msk [vmem:[#allocation2 + $0x38] sm:$0xff] %vm18, 0.0
    %27 = vst.msk [vmem:[#allocation2 + $0x40] sm:$0xff] %vm18, 0.0
    %28 = vst.msk [vmem:[#allocation2 + $0x48] sm:$0xff] %vm18, 0.0
    %29 = vst.msk [vmem:[#allocation2 + $0x50] sm:$0xff] %vm18, 0.0
    %30 = vst.msk [vmem:[#allocation2 + $0x58] sm:$0xff] %vm18, 0.0
    %31 = vst.msk [vmem:[#allocation2 + $0x60] sm:$0xff] %vm18, 0.0
    %32 = vst.msk [vmem:[#allocation2 + $0x68] sm:$0xff] %vm18, 0.0
    %33 = vst.msk [vmem:[#allocation2 + $0x70] sm:$0xff] %vm18, 0.0
    %34 = vst.msk [vmem:[#allocation2 + $0x78] sm:$0xff] %vm18, 0.0
  $region13: #{identity_generator_forward.22} parent=0 // pred_fallthru
    _
  %v35 = vld [vmem:[#allocation2] sm:$0xff]
  %v36 = vld [vmem:[#allocation2 + $0x8] sm:$0xff]
  %v37 = vld [vmem:[#allocation2 + $0x10] sm:$0xff]
  %v38 = vld [vmem:[#allocation2 + $0x18] sm:$0xff]
  %v39 = vld [vmem:[#allocation2 + $0x20] sm:$0xff]
  %v40 = vld [vmem:[#allocation2 + $0x28] sm:$0xff]
  %v41 = vld [vmem:[#allocation2 + $0x30] sm:$0xff]
  %v42 = vld [vmem:[#allocation2 + $0x38] sm:$0xff]
  %v43 = vld [vmem:[#allocation2 + $0x40] sm:$0xff]
  %v44 = vld [vmem:[#allocation2 + $0x48] sm:$0xff]
  %v45 = vld [vmem:[#allocation2 + $0x50] sm:$0xff]
  %v46 = vld [vmem:[#allocation2 + $0x58] sm:$0xff]
  %v47 = vld [vmem:[#allocation2 + $0x60] sm:$0xff]
  %v48 = vld [vmem:[#allocation2 + $0x68] sm:$0xff]
  %v49 = vld [vmem:[#allocation2 + $0x70] sm:$0xff]
  %v50 = vld [vmem:[#allocation2 + $0x78] sm:$0xff]
  %v51 = vld [vmem:[%s0] sm:$0xf]
  %v52 = vld [vmem:[%s0 + $0x4] sm:$0xf]
  %v53 = vld [vmem:[%s0 + $0x8] sm:$0xf]
  %v54 = vld [vmem:[%s0 + $0xc] sm:$0xf]
  %v55 = vld [vmem:[%s0 + $0x10] sm:$0xf]
  %v56 = vld [vmem:[%s0 + $0x14] sm:$0xf]
  %v57 = vld [vmem:[%s0 + $0x18] sm:$0xf]
  %v58 = vld [vmem:[%s0 + $0x1c] sm:$0xf]
  %v59 = vld [vmem:[%s0 + $0x20] sm:$0xf]
  %v60 = vld [vmem:[%s0 + $0x24] sm:$0xf]
  %v61 = vld [vmem:[%s0 + $0x28] sm:$0xf]
  %v62 = vld [vmem:[%s0 + $0x2c] sm:$0xf]
  %v63 = vld [vmem:[%s0 + $0x30] sm:$0xf]
  %v64 = vld [vmem:[%s0 + $0x34] sm:$0xf]
  %v65 = vld [vmem:[%s0 + $0x38] sm:$0xf]
  %v66 = vld [vmem:[%s0 + $0x3c] sm:$0xf]
  %v67 = vld [vmem:[%s1] sm:$0xf]
  %v68 = vld [vmem:[%s1 + $0x4] sm:$0xf]
  %v69 = vld [vmem:[%s1 + $0x8] sm:$0xf]
  %v70 = vld [vmem:[%s1 + $0xc] sm:$0xf]
  %v71 = vld [vmem:[%s1 + $0x10] sm:$0xf]
  %v72 = vld [vmem:[%s1 + $0x14] sm:$0xf]
  %v73 = vld [vmem:[%s1 + $0x18] sm:$0xf]
  %v74 = vld [vmem:[%s1 + $0x1c] sm:$0xf]
  %v75 = vld [vmem:[%s1 + $0x20] sm:$0xf]
  %v76 = vld [vmem:[%s1 + $0x24] sm:$0xf]
  %v77 = vld [vmem:[%s1 + $0x28] sm:$0xf]
  %v78 = vld [vmem:[%s1 + $0x2c] sm:$0xf]
  %v79 = vld [vmem:[%s1 + $0x30] sm:$0xf]
  %v80 = vld [vmem:[%s1 + $0x34] sm:$0xf]
  %v81 = vld [vmem:[%s1 + $0x38] sm:$0xf]
  %v82 = vld [vmem:[%s1 + $0x3c] sm:$0xf]
  %v99 = vunpack.c.l.b16 %v51
  %v100 = vunpack.c.l.b16 %v52
  %v101 = vunpack.c.l.b16 %v53
  %v102 = vunpack.c.l.b16 %v54
  %v103 = vunpack.c.l.b16 %v55
  %v104 = vunpack.c.l.b16 %v56
  %v105 = vunpack.c.l.b16 %v57
  %v106 = vunpack.c.l.b16 %v58
  %v107 = vunpack.c.l.b16 %v59
  %v108 = vunpack.c.l.b16 %v60
  %v109 = vunpack.c.l.b16 %v61
  %v110 = vunpack.c.l.b16 %v62
  %v111 = vunpack.c.l.b16 %v63
  %v112 = vunpack.c.l.b16 %v64
  %v113 = vunpack.c.l.b16 %v65
  %v114 = vunpack.c.l.b16 %v66
  %v115 = vpack.c.b16 %v100, %v99
  %v116 = vpack.c.b16 %v102, %v101
  %v117 = vpack.c.b16 %v104, %v103
  %v118 = vpack.c.b16 %v106, %v105
  %v119 = vpack.c.b16 %v108, %v107
  %v120 = vpack.c.b16 %v110, %v109
  %v121 = vpack.c.b16 %v112, %v111
  %v122 = vpack.c.b16 %v114, %v113
  %v147 = vunpack.c.l.b16 %v67
  %v148 = vunpack.c.l.b16 %v68
  %v149 = vunpack.c.l.b16 %v69
  %v150 = vunpack.c.l.b16 %v70
  %v151 = vunpack.c.l.b16 %v71
  %v152 = vunpack.c.l.b16 %v72
  %v153 = vunpack.c.l.b16 %v73
  %v154 = vunpack.c.l.b16 %v74
  %v155 = vunpack.c.l.b16 %v75
  %v156 = vunpack.c.l.b16 %v76
  %v157 = vunpack.c.l.b16 %v77
  %v158 = vunpack.c.l.b16 %v78
  %v159 = vunpack.c.l.b16 %v79
  %v160 = vunpack.c.l.b16 %v80
  %v161 = vunpack.c.l.b16 %v81
  %v162 = vunpack.c.l.b16 %v82
  %v163 = vpack.c.b16 %v148, %v147
  %v164 = vpack.c.b16 %v150, %v149
  %v165 = vpack.c.b16 %v152, %v151
  %v166 = vpack.c.b16 %v154, %v153
  %v167 = vpack.c.b16 %v156, %v155
  %v168 = vpack.c.b16 %v158, %v157
  %v169 = vpack.c.b16 %v160, %v159
  %v170 = vpack.c.b16 %v162, %v161
  %179 = vmatpush.bf16.msra.mxu0 %v170
  %180 = vmatpush.bf16.msra.mxu0 %v169
  %181 = vmatpush.bf16.msra.mxu0 %v168
  %182 = vmatpush.bf16.msra.mxu0 %v167
  %183 = vmatpush.bf16.msra.mxu0 %v166
  %184 = vmatpush.bf16.msra.mxu0 %v165
  %185 = vmatpush.bf16.msra.mxu0 %v164
  %186 = vmatpush.bf16.msra.mxu0 %v163
  %187 = vmatmul.bf16.gmra.mxu0 %v115
  %v188 = vpop.f32.mrf.mxu0
  %v189 = vadd.f32 0.0, %v188
  %v190 = vpop.f32.mrf.mxu0
  %v191 = vadd.f32 0.0, %v190
  %192 = vmatmul.bf16.gmra.mxu0 %v116
  %v193 = vpop.f32.mrf.mxu0
  %v194 = vadd.f32 0.0, %v193
  %v195 = vpop.f32.mrf.mxu0
  %v196 = vadd.f32 0.0, %v195
  %197 = vmatmul.bf16.gmra.mxu0 %v117
  %v198 = vpop.f32.mrf.mxu0
  %v199 = vadd.f32 0.0, %v198
  %v200 = vpop.f32.mrf.mxu0
  %v201 = vadd.f32 0.0, %v200
  %202 = vmatmul.bf16.gmra.mxu0 %v118
  %v203 = vpop.f32.mrf.mxu0
  %v204 = vadd.f32 0.0, %v203
  %v205 = vpop.f32.mrf.mxu0
  %v206 = vadd.f32 0.0, %v205
  %207 = vmatmul.bf16.gmra.mxu0 %v119
  %v208 = vpop.f32.mrf.mxu0
  %v209 = vadd.f32 0.0, %v208
  %v210 = vpop.f32.mrf.mxu0
  %v211 = vadd.f32 0.0, %v210
  %212 = vmatmul.bf16.gmra.mxu0 %v120
  %v213 = vpop.f32.mrf.mxu0
  %v214 = vadd.f32 0.0, %v213
  %v215 = vpop.f32.mrf.mxu0
  %v216 = vadd.f32 0.0, %v215
  %217 = vmatmul.bf16.gmra.mxu0 %v121
  %v218 = vpop.f32.mrf.mxu0
  %v219 = vadd.f32 0.0, %v218
  %v220 = vpop.f32.mrf.mxu0
  %v221 = vadd.f32 0.0, %v220
  %222 = vmatmul.bf16.gmra.mxu0 %v122
  %v223 = vpop.f32.mrf.mxu0
  %v224 = vadd.f32 0.0, %v223
  %v225 = vpop.f32.mrf.mxu0
  %v226 = vadd.f32 0.0, %v225
  %227 = vdwg.mxu0
  %v228 = vadd.f32 %v35, %v189
  %v229 = vadd.f32 %v36, %v191
  %v230 = vadd.f32 %v37, %v194
  %v231 = vadd.f32 %v38, %v196
  %v232 = vadd.f32 %v39, %v199
  %v233 = vadd.f32 %v40, %v201
  %v234 = vadd.f32 %v41, %v204
  %v235 = vadd.f32 %v42, %v206
  %v236 = vadd.f32 %v43, %v209
  %v237 = vadd.f32 %v44, %v211
  %v238 = vadd.f32 %v45, %v214
  %v239 = vadd.f32 %v46, %v216
  %v240 = vadd.f32 %v47, %v219
  %v241 = vadd.f32 %v48, %v221
  %v242 = vadd.f32 %v49, %v224
  %v243 = vadd.f32 %v50, %v226
  %vm244 = vcmask 130048
  %245 = vst.msk [vmem:[#allocation2] sm:$0xff] %vm244, %v228
  %246 = vst.msk [vmem:[#allocation2 + $0x8] sm:$0xff] %vm244, %v229
  %247 = vst.msk [vmem:[#allocation2 + $0x10] sm:$0xff] %vm244, %v230
  %248 = vst.msk [vmem:[#allocation2 + $0x18] sm:$0xff] %vm244, %v231
  %249 = vst.msk [vmem:[#allocation2 + $0x20] sm:$0xff] %vm244, %v232
  %250 = vst.msk [vmem:[#allocation2 + $0x28] sm:$0xff] %vm244, %v233
  %251 = vst.msk [vmem:[#allocation2 + $0x30] sm:$0xff] %vm244, %v234
  %252 = vst.msk [vmem:[#allocation2 + $0x38] sm:$0xff] %vm244, %v235
  %253 = vst.msk [vmem:[#allocation2 + $0x40] sm:$0xff] %vm244, %v236
  %254 = vst.msk [vmem:[#allocation2 + $0x48] sm:$0xff] %vm244, %v237
  %255 = vst.msk [vmem:[#allocation2 + $0x50] sm:$0xff] %vm244, %v238
  %256 = vst.msk [vmem:[#allocation2 + $0x58] sm:$0xff] %vm244, %v239
  %257 = vst.msk [vmem:[#allocation2 + $0x60] sm:$0xff] %vm244, %v240
  %258 = vst.msk [vmem:[#allocation2 + $0x68] sm:$0xff] %vm244, %v241
  %259 = vst.msk [vmem:[#allocation2 + $0x70] sm:$0xff] %vm244, %v242
  %260 = vst.msk [vmem:[#allocation2 + $0x78] sm:$0xff] %vm244, %v243
  // Predicated region
  $region14: #{identity_generator_forward.22} parent=0 // pred_check
    %p261 = pneg %p14
  $region15: #{identity_generator_forward.22} parent=0 // pred_check_branch
    %263 = sbr.rel (%p261) target = $region17
  $region16: #{identity_generator_forward.22} parent=0 // pred_region
    %v264 = vld [vmem:[#allocation2] sm:$0xff]
    %v265 = vld [vmem:[#allocation2 + $0x8] sm:$0xff]
    %v266 = vld [vmem:[#allocation2 + $0x10] sm:$0xff]
    %v267 = vld [vmem:[#allocation2 + $0x18] sm:$0xff]
    %v268 = vld [vmem:[#allocation2 + $0x20] sm:$0xff]
    %v269 = vld [vmem:[#allocation2 + $0x28] sm:$0xff]
    %v270 = vld [vmem:[#allocation2 + $0x30] sm:$0xff]
    %v271 = vld [vmem:[#allocation2 + $0x38] sm:$0xff]
    %v272 = vld [vmem:[#allocation2 + $0x40] sm:$0xff]
    %v273 = vld [vmem:[#allocation2 + $0x48] sm:$0xff]
    %v274 = vld [vmem:[#allocation2 + $0x50] sm:$0xff]
    %v275 = vld [vmem:[#allocation2 + $0x58] sm:$0xff]
    %v276 = vld [vmem:[#allocation2 + $0x60] sm:$0xff]
    %v277 = vld [vmem:[#allocation2 + $0x68] sm:$0xff]
    %v278 = vld [vmem:[#allocation2 + $0x70] sm:$0xff]
    %v279 = vld [vmem:[#allocation2 + $0x78] sm:$0xff]
    %280 = vst.msk [vmem:[%s2] sm:$0xff] %vm244, %v264
    %281 = vst.msk [vmem:[%s2 + $0x8] sm:$0xff] %vm244, %v265
    %282 = vst.msk [vmem:[%s2 + $0x10] sm:$0xff] %vm244, %v266
    %283 = vst.msk [vmem:[%s2 + $0x18] sm:$0xff] %vm244, %v267
    %284 = vst.msk [vmem:[%s2 + $0x20] sm:$0xff] %vm244, %v268
    %285 = vst.msk [vmem:[%s2 + $0x28] sm:$0xff] %vm244, %v269
    %286 = vst.msk [vmem:[%s2 + $0x30] sm:$0xff] %vm244, %v270
    %287 = vst.msk [vmem:[%s2 + $0x38] sm:$0xff] %vm244, %v271
    %288 = vst.msk [vmem:[%s2 + $0x40] sm:$0xff] %vm244, %v272
    %289 = vst.msk [vmem:[%s2 + $0x48] sm:$0xff] %vm244, %v273
    %290 = vst.msk [vmem:[%s2 + $0x50] sm:$0xff] %vm244, %v274
    %291 = vst.msk [vmem:[%s2 + $0x58] sm:$0xff] %vm244, %v275
    %292 = vst.msk [vmem:[%s2 + $0x60] sm:$0xff] %vm244, %v276
    %293 = vst.msk [vmem:[%s2 + $0x68] sm:$0xff] %vm244, %v277
    %294 = vst.msk [vmem:[%s2 + $0x70] sm:$0xff] %vm244, %v278
    %295 = vst.msk [vmem:[%s2 + $0x78] sm:$0xff] %vm244, %v279
    %v296 = vsel %vm244, %v264, 0.0
    %v297 = vsel %vm244, %v265, 0.0
    %v298 = vadd.f32 %v296, %v297
    %v299 = vsel %vm244, %v266, 0.0
    %v300 = vadd.f32 %v298, %v299
    %v301 = vsel %vm244, %v267, 0.0
    %v302 = vadd.f32 %v300, %v301
    %v303 = vsel %vm244, %v268, 0.0
    %v304 = vadd.f32 %v302, %v303
    %v305 = vsel %vm244, %v269, 0.0
    %v306 = vadd.f32 %v304, %v305
    %v307 = vsel %vm244, %v270, 0.0
    %v308 = vadd.f32 %v306, %v307
    %v309 = vsel %vm244, %v271, 0.0
    %v310 = vadd.f32 %v308, %v309
    %v311 = vsel %vm244, %v272, 0.0
    %v312 = vadd.f32 %v310, %v311
    %v313 = vsel %vm244, %v273, 0.0
    %v314 = vadd.f32 %v312, %v313
    %v315 = vsel %vm244, %v274, 0.0
    %v316 = vadd.f32 %v314, %v315
    %v317 = vsel %vm244, %v275, 0.0
    %v318 = vadd.f32 %v316, %v317
    %v319 = vsel %vm244, %v276, 0.0
    %v320 = vadd.f32 %v318, %v319
    %v321 = vsel %vm244, %v277, 0.0
    %v322 = vadd.f32 %v320, %v321
    %v323 = vsel %vm244, %v278, 0.0
    %v324 = vadd.f32 %v322, %v323
    %v325 = vsel %vm244, %v279, 0.0
    %v326 = vadd.f32 %v324, %v325
    %v327 = vrot.slane %v326, 4
    %v328 = vadd.f32 %v326, %v327
    %v329 = vrot.slane %v328, 2
    %v330 = vadd.f32 %v328, %v329
    %v331 = vrot.slane %v330, 1
    %v332 = vadd.f32 %v330, %v331
    %vm333 = vcmask 122880
    %334 = vst.msk [vmem:[%s3] sm:$0x1] %vm333, %v332
    %v335 = vmul.f32 %v264, %v264
    %v336 = vmul.f32 %v265, %v265
    %v337 = vmul.f32 %v266, %v266
    %v338 = vmul.f32 %v267, %v267
    %v339 = vmul.f32 %v268, %v268
    %v340 = vmul.f32 %v269, %v269
    %v341 = vmul.f32 %v270, %v270
    %v342 = vmul.f32 %v271, %v271
    %v343 = vmul.f32 %v272, %v272
    %v344 = vmul.f32 %v273, %v273
    %v345 = vmul.f32 %v274, %v274
    %v346 = vmul.f32 %v275, %v275
    %v347 = vmul.f32 %v276, %v276
    %v348 = vmul.f32 %v277, %v277
    %v349 = vmul.f32 %v278, %v278
    %v350 = vmul.f32 %v279, %v279
    %v351 = vsel %vm244, %v335, 0.0
    %v352 = vsel %vm244, %v336, 0.0
    %v353 = vadd.f32 %v351, %v352
    %v354 = vsel %vm244, %v337, 0.0
    %v355 = vadd.f32 %v353, %v354
    %v356 = vsel %vm244, %v338, 0.0
    %v357 = vadd.f32 %v355, %v356
    %v358 = vsel %vm244, %v339, 0.0
    %v359 = vadd.f32 %v357, %v358
    %v360 = vsel %vm244, %v340, 0.0
    %v361 = vadd.f32 %v359, %v360
    %v362 = vsel %vm244, %v341, 0.0
    %v363 = vadd.f32 %v361, %v362
    %v364 = vsel %vm244, %v342, 0.0
    %v365 = vadd.f32 %v363, %v364
    %v366 = vsel %vm244, %v343, 0.0
    %v367 = vadd.f32 %v365, %v366
    %v368 = vsel %vm244, %v344, 0.0
    %v369 = vadd.f32 %v367, %v368
    %v370 = vsel %vm244, %v345, 0.0
    %v371 = vadd.f32 %v369, %v370
    %v372 = vsel %vm244, %v346, 0.0
    %v373 = vadd.f32 %v371, %v372
    %v374 = vsel %vm244, %v347, 0.0
    %v375 = vadd.f32 %v373, %v374
    %v376 = vsel %vm244, %v348, 0.0
    %v377 = vadd.f32 %v375, %v376
    %v378 = vsel %vm244, %v349, 0.0
    %v379 = vadd.f32 %v377, %v378
    %v380 = vsel %vm244, %v350, 0.0
    %v381 = vadd.f32 %v379, %v380
    %v382 = vrot.slane %v381, 4
    %v383 = vadd.f32 %v381, %v382
    %v384 = vrot.slane %v383, 2
    %v385 = vadd.f32 %v383, %v384
    %v386 = vrot.slane %v385, 1
    %v387 = vadd.f32 %v385, %v386
    %388 = vst.msk [vmem:[%s4] sm:$0x1] %vm333, %v387
  $region17: #{identity_generator_forward.22} parent=0 // pred_fallthru
    _
  // Predicated region
  $region18: #{identity_generator_forward.22} parent=0 // pred_check
    _
  $region19: #{identity_generator_forward.22} parent=0 // pred_check_branch
    %390 = sbr.rel (0) target = $region21
  $region20: #{identity_generator_forward.22} parent=0 // pred_region
    _
  $region21: #{identity_generator_forward.22} parent=0 // pred_fallthru
    _
  // Predicated region
  $region22: #{identity_generator_forward.22} parent=0 // pred_check
    _
  $region23: #{identity_generator_forward.22} parent=0 // pred_check_branch
    %392 = sbr.rel (0) target = $region25
  $region24: #{identity_generator_forward.22} parent=0 // pred_region
    _
  $region25: #{identity_generator_forward.22} parent=0 // pred_fallthru
    _
  // Predicated region
  $region26: #{identity_generator_forward.22} parent=0 // pred_check
    _
  $region27: #{identity_generator_forward.22} parent=0 // pred_check_branch
    %394 = sbr.rel (0) target = $region29
  $region28: #{identity_generator_forward.22} parent=0 // pred_region
    _
  $region29: #{identity_generator_forward.22} parent=0 // pred_fallthru
    _
  // Predicated region
  $region30: #{identity_generator_forward.22} parent=0 // pred_check
    _
  $region31: #{identity_generator_forward.22} parent=0 // pred_check_branch
    %396 = sbr.rel (0) target = $region33
  $region32: #{identity_generator_forward.22} parent=0 // pred_region
    _
  $region33: #{identity_generator_forward.22} parent=0 // pred_fallthru
    _
  // Predicated region
  $region34: #{identity_generator_forward.22} parent=0 // pred_check
    _
  $region35: #{identity_generator_forward.22} parent=0 // pred_check_branch
    %398 = sbr.rel (0) target = $region37
  $region36: #{identity_generator_forward.22} parent=0 // pred_region
    _
  $region37: #{identity_generator_forward.22} parent=0 // pred_fallthru
    _
  // Predicated region
  $region38: #{identity_generator_forward.22} parent=0 // pred_check
    _
  $region39: #{identity_generator_forward.22} parent=0 // pred_check_branch
    %400 = sbr.rel (0) target = $region41
  $region40: #{identity_generator_forward.22} parent=0 // pred_region
    _
  $region41: #{identity_generator_forward.22} parent=0 // pred_fallthru
    _

// kernel: identity_generator_forward.21
$region0: #{identity_generator_forward.21}
  #allocation0 [shape = 'u32[]', space=smem, size = 0x4, offset = 0x4, fixed_abs, tag = 'smem constant byte address 0x4 - core index']
  #allocation1 [shape = 'u32[72,128]{1,0:T(1,128)}', space=vmem, size = 0x9000, scoped, tag = 'internal scratch']
  #allocation2 [shape = 'f32[128,16]{1,0:T(8,128)}', space=vmem, size = 0x10000, scoped, tag = 'scratch operand']
  %s0 = inlined_call_operand.vmem [shape: bf16[128,192], index: 0, kind: input, shape index: {}]
  %s1 = inlined_call_operand.vmem [shape: bf16[192,16], index: 1, kind: input, shape index: {}]
  %s2 = inlined_call_operand.vmem [shape: f32[128,16], index: 2, kind: output, shape index: {0}]
  %s3 = inlined_call_operand.vmem [shape: f32[1,1,16], index: 3, kind: output, shape index: {1}]
  %s4 = inlined_call_operand.vmem [shape: f32[1,1,16], index: 4, kind: output, shape index: {2}]
  %5 = xla_tuple %s2, %s3, %s4
  %s6 = sld [smem:[#allocation0]]
  $region42: #{identity_generator_forward.21} parent=0
    _
  %s8 = ssub.s32 1, %s6
  %s9 = scalar_select 0, %s8, %s6
  // Predicated region
  $region2: #{identity_generator_forward.21} parent=0 // pred_check
    _
  $region3: #{identity_generator_forward.21} parent=0 // pred_check_branch
    %11 = sbr.rel (0) target = $region5
  $region4: #{identity_generator_forward.21} parent=0 // pred_region
    _
  $region5: #{identity_generator_forward.21} parent=0 // pred_fallthru
    _
  // Predicated region
  $region6: #{identity_generator_forward.21} parent=0 // pred_check
    _
  $region7: #{identity_generator_forward.21} parent=0 // pred_check_branch
    %13 = sbr.rel (0) target = $region9
  $region8: #{identity_generator_forward.21} parent=0 // pred_region
    _
  $region9: #{identity_generator_forward.21} parent=0 // pred_fallthru
    _
  %p15 = scmp.eq.s32.totalorder 0, 0
  // Predicated region
  $region10: #{identity_generator_forward.21} parent=0 // pred_check
    %p16 = pneg %p15
  $region11: #{identity_generator_forward.21} parent=0 // pred_check_branch
    %18 = sbr.rel (%p16) target = $region13
  $region12: #{identity_generator_forward.21} parent=0 // pred_region
    %vm19 = vcmask 130048
    %20 = vst.msk [vmem:[#allocation2] sm:$0xff] %vm19, 0.0
    %21 = vst.msk [vmem:[#allocation2 + $0x8] sm:$0xff] %vm19, 0.0
    %22 = vst.msk [vmem:[#allocation2 + $0x10] sm:$0xff] %vm19, 0.0
    %23 = vst.msk [vmem:[#allocation2 + $0x18] sm:$0xff] %vm19, 0.0
    %24 = vst.msk [vmem:[#allocation2 + $0x20] sm:$0xff] %vm19, 0.0
    %25 = vst.msk [vmem:[#allocation2 + $0x28] sm:$0xff] %vm19, 0.0
    %26 = vst.msk [vmem:[#allocation2 + $0x30] sm:$0xff] %vm19, 0.0
    %27 = vst.msk [vmem:[#allocation2 + $0x38] sm:$0xff] %vm19, 0.0
    %28 = vst.msk [vmem:[#allocation2 + $0x40] sm:$0xff] %vm19, 0.0
    %29 = vst.msk [vmem:[#allocation2 + $0x48] sm:$0xff] %vm19, 0.0
    %30 = vst.msk [vmem:[#allocation2 + $0x50] sm:$0xff] %vm19, 0.0
    %31 = vst.msk [vmem:[#allocation2 + $0x58] sm:$0xff] %vm19, 0.0
    %32 = vst.msk [vmem:[#allocation2 + $0x60] sm:$0xff] %vm19, 0.0
    %33 = vst.msk [vmem:[#allocation2 + $0x68] sm:$0xff] %vm19, 0.0
    %34 = vst.msk [vmem:[#allocation2 + $0x70] sm:$0xff] %vm19, 0.0
    %35 = vst.msk [vmem:[#allocation2 + $0x78] sm:$0xff] %vm19, 0.0
  $region13: #{identity_generator_forward.21} parent=0 // pred_fallthru
    _
  %v36 = vld [vmem:[#allocation2] sm:$0xff]
  %v37 = vld [vmem:[#allocation2 + $0x8] sm:$0xff]
  %v38 = vld [vmem:[#allocation2 + $0x10] sm:$0xff]
  %v39 = vld [vmem:[#allocation2 + $0x18] sm:$0xff]
  %v40 = vld [vmem:[#allocation2 + $0x20] sm:$0xff]
  %v41 = vld [vmem:[#allocation2 + $0x28] sm:$0xff]
  %v42 = vld [vmem:[#allocation2 + $0x30] sm:$0xff]
  %v43 = vld [vmem:[#allocation2 + $0x38] sm:$0xff]
  %v44 = vld [vmem:[#allocation2 + $0x40] sm:$0xff]
  %v45 = vld [vmem:[#allocation2 + $0x48] sm:$0xff]
  %v46 = vld [vmem:[#allocation2 + $0x50] sm:$0xff]
  %v47 = vld [vmem:[#allocation2 + $0x58] sm:$0xff]
  %v48 = vld [vmem:[#allocation2 + $0x60] sm:$0xff]
  %v49 = vld [vmem:[#allocation2 + $0x68] sm:$0xff]
  %v50 = vld [vmem:[#allocation2 + $0x70] sm:$0xff]
  %v51 = vld [vmem:[#allocation2 + $0x78] sm:$0xff]
  %v52 = vld [vmem:[%s0] sm:$0xff]
  %v53 = vld [vmem:[%s0 + $0x8] sm:$0xff]
  %v54 = vld [vmem:[%s0 + $0x10] sm:$0xff]
  %v55 = vld [vmem:[%s0 + $0x18] sm:$0xff]
  %v56 = vld [vmem:[%s0 + $0x20] sm:$0xff]
  %v57 = vld [vmem:[%s0 + $0x28] sm:$0xff]
  %v58 = vld [vmem:[%s0 + $0x30] sm:$0xff]
  %v59 = vld [vmem:[%s0 + $0x38] sm:$0xff]
  %v60 = vld [vmem:[%s0 + $0x40] sm:$0xff]
  %v61 = vld [vmem:[%s0 + $0x48] sm:$0xff]
  %v62 = vld [vmem:[%s0 + $0x50] sm:$0xff]
  %v63 = vld [vmem:[%s0 + $0x58] sm:$0xff]
  %v64 = vld [vmem:[%s0 + $0x60] sm:$0xff]
  %v65 = vld [vmem:[%s0 + $0x68] sm:$0xff]
  %v66 = vld [vmem:[%s0 + $0x70] sm:$0xff]
  %v67 = vld [vmem:[%s0 + $0x78] sm:$0xff]
  %v68 = vld [vmem:[%s1] sm:$0xf]
  %v69 = vld [vmem:[%s1 + $0x4] sm:$0xf]
  %v70 = vld [vmem:[%s1 + $0x8] sm:$0xf]
  %v71 = vld [vmem:[%s1 + $0xc] sm:$0xf]
  %v72 = vld [vmem:[%s1 + $0x10] sm:$0xf]
  %v73 = vld [vmem:[%s1 + $0x14] sm:$0xf]
  %v74 = vld [vmem:[%s1 + $0x18] sm:$0xf]
  %v75 = vld [vmem:[%s1 + $0x1c] sm:$0xf]
  %v76 = vld [vmem:[%s1 + $0x20] sm:$0xf]
  %v77 = vld [vmem:[%s1 + $0x24] sm:$0xf]
  %v78 = vld [vmem:[%s1 + $0x28] sm:$0xf]
  %v79 = vld [vmem:[%s1 + $0x2c] sm:$0xf]
  %v80 = vld [vmem:[%s1 + $0x30] sm:$0xf]
  %v81 = vld [vmem:[%s1 + $0x34] sm:$0xf]
  %v82 = vld [vmem:[%s1 + $0x38] sm:$0xf]
  %v83 = vld [vmem:[%s1 + $0x3c] sm:$0xf]
  %v84 = vld [vmem:[%s1 + $0x40] sm:$0xf]
  %v85 = vld [vmem:[%s1 + $0x44] sm:$0xf]
  %v86 = vld [vmem:[%s1 + $0x48] sm:$0xf]
  %v87 = vld [vmem:[%s1 + $0x4c] sm:$0xf]
  %v88 = vld [vmem:[%s1 + $0x50] sm:$0xf]
  %v89 = vld [vmem:[%s1 + $0x54] sm:$0xf]
  %v90 = vld [vmem:[%s1 + $0x58] sm:$0xf]
  %v91 = vld [vmem:[%s1 + $0x5c] sm:$0xf]
  %v108 = vunpack.c.l.b16 %v52
  %v109 = vunpack.c.h.b16 %v52
  %v110 = vunpack.c.l.b16 %v53
  %v111 = vunpack.c.h.b16 %v53
  %v112 = vunpack.c.l.b16 %v54
  %v113 = vunpack.c.h.b16 %v54
  %v114 = vunpack.c.l.b16 %v55
  %v115 = vunpack.c.h.b16 %v55
  %v116 = vunpack.c.l.b16 %v56
  %v117 = vunpack.c.h.b16 %v56
  %v118 = vunpack.c.l.b16 %v57
  %v119 = vunpack.c.h.b16 %v57
  %v120 = vunpack.c.l.b16 %v58
  %v121 = vunpack.c.h.b16 %v58
  %v122 = vunpack.c.l.b16 %v59
  %v123 = vunpack.c.h.b16 %v59
  %v124 = vunpack.c.l.b16 %v60
  %v125 = vunpack.c.h.b16 %v60
  %v126 = vunpack.c.l.b16 %v61
  %v127 = vunpack.c.h.b16 %v61
  %v128 = vunpack.c.l.b16 %v62
  %v129 = vunpack.c.h.b16 %v62
  %v130 = vunpack.c.l.b16 %v63
  %v131 = vunpack.c.h.b16 %v63
  %v132 = vunpack.c.l.b16 %v64
  %v133 = vunpack.c.h.b16 %v64
  %v134 = vunpack.c.l.b16 %v65
  %v135 = vunpack.c.h.b16 %v65
  %v136 = vunpack.c.l.b16 %v66
  %v137 = vunpack.c.h.b16 %v66
  %v138 = vunpack.c.l.b16 %v67
  %v139 = vunpack.c.h.b16 %v67
  %v140 = vpack.c.b16 %v110, %v108
  %v141 = vpack.c.b16 %v111, %v109
  %v142 = vpack.c.b16 %v114, %v112
  %v143 = vpack.c.b16 %v115, %v113
  %v144 = vpack.c.b16 %v118, %v116
  %v145 = vpack.c.b16 %v119, %v117
  %v146 = vpack.c.b16 %v122, %v120
  %v147 = vpack.c.b16 %v123, %v121
  %v148 = vpack.c.b16 %v126, %v124
  %v149 = vpack.c.b16 %v127, %v125
  %v150 = vpack.c.b16 %v130, %v128
  %v151 = vpack.c.b16 %v131, %v129
  %v152 = vpack.c.b16 %v134, %v132
  %v153 = vpack.c.b16 %v135, %v133
  %v154 = vpack.c.b16 %v138, %v136
  %v155 = vpack.c.b16 %v139, %v137
  %v188 = vunpack.c.l.b16 %v68
  %v189 = vunpack.c.l.b16 %v69
  %v190 = vunpack.c.l.b16 %v70
  %v191 = vunpack.c.l.b16 %v71
  %v192 = vunpack.c.l.b16 %v72
  %v193 = vunpack.c.l.b16 %v73
  %v194 = vunpack.c.l.b16 %v74
  %v195 = vunpack.c.l.b16 %v75
  %v196 = vunpack.c.l.b16 %v76
  %v197 = vunpack.c.l.b16 %v77
  %v198 = vunpack.c.l.b16 %v78
  %v199 = vunpack.c.l.b16 %v79
  %v200 = vunpack.c.l.b16 %v80
  %v201 = vunpack.c.l.b16 %v81
  %v202 = vunpack.c.l.b16 %v82
  %v203 = vunpack.c.l.b16 %v83
  %v204 = vunpack.c.l.b16 %v84
  %v205 = vunpack.c.l.b16 %v85
  %v206 = vunpack.c.l.b16 %v86
  %v207 = vunpack.c.l.b16 %v87
  %v208 = vunpack.c.l.b16 %v88
  %v209 = vunpack.c.l.b16 %v89
  %v210 = vunpack.c.l.b16 %v90
  %v211 = vunpack.c.l.b16 %v91
  %v212 = vpack.c.b16 %v189, %v188
  %v213 = vpack.c.b16 %v191, %v190
  %v214 = vpack.c.b16 %v193, %v192
  %v215 = vpack.c.b16 %v195, %v194
  %v216 = vpack.c.b16 %v197, %v196
  %v217 = vpack.c.b16 %v199, %v198
  %v218 = vpack.c.b16 %v201, %v200
  %v219 = vpack.c.b16 %v203, %v202
  %v220 = vpack.c.b16 %v205, %v204
  %v221 = vpack.c.b16 %v207, %v206
  %v222 = vpack.c.b16 %v209, %v208
  %v223 = vpack.c.b16 %v211, %v210
  %vm236 = vcmask 523264
  %v238 = vsel %vm236, %v141, 0
  %v241 = vsel %vm236, %v143, 0
  %v244 = vsel %vm236, %v145, 0
  %v247 = vsel %vm236, %v147, 0
  %v250 = vsel %vm236, %v149, 0
  %v253 = vsel %vm236, %v151, 0
  %v256 = vsel %vm236, %v153, 0
  %v259 = vsel %vm236, %v155, 0
  %261 = vmatpush.bf16.msra.mxu0 %v219
  %262 = vmatpush.bf16.msra.mxu0 %v218
  %263 = vmatpush.bf16.msra.mxu0 %v217
  %264 = vmatpush.bf16.msra.mxu0 %v216
  %265 = vmatpush.bf16.msra.mxu0 %v215
  %266 = vmatpush.bf16.msra.mxu0 %v214
  %267 = vmatpush.bf16.msra.mxu0 %v213
  %268 = vmatpush.bf16.msra.mxu0 %v212
  %269 = vmatmul.bf16.gmra.mxu0 %v140
  %v270 = vpop.f32.mrf.mxu0
  %v271 = vadd.f32 0.0, %v270
  %v272 = vpop.f32.mrf.mxu0
  %v273 = vadd.f32 0.0, %v272
  %274 = vmatmul.bf16.gmra.mxu0 %v142
  %v275 = vpop.f32.mrf.mxu0
  %v276 = vadd.f32 0.0, %v275
  %v277 = vpop.f32.mrf.mxu0
  %v278 = vadd.f32 0.0, %v277
  %279 = vmatmul.bf16.gmra.mxu0 %v144
  %v280 = vpop.f32.mrf.mxu0
  %v281 = vadd.f32 0.0, %v280
  %v282 = vpop.f32.mrf.mxu0
  %v283 = vadd.f32 0.0, %v282
  %284 = vmatmul.bf16.gmra.mxu0 %v146
  %v285 = vpop.f32.mrf.mxu0
  %v286 = vadd.f32 0.0, %v285
  %v287 = vpop.f32.mrf.mxu0
  %v288 = vadd.f32 0.0, %v287
  %289 = vmatmul.bf16.gmra.mxu0 %v148
  %v290 = vpop.f32.mrf.mxu0
  %v291 = vadd.f32 0.0, %v290
  %v292 = vpop.f32.mrf.mxu0
  %v293 = vadd.f32 0.0, %v292
  %294 = vmatmul.bf16.gmra.mxu0 %v150
  %v295 = vpop.f32.mrf.mxu0
  %v296 = vadd.f32 0.0, %v295
  %v297 = vpop.f32.mrf.mxu0
  %v298 = vadd.f32 0.0, %v297
  %299 = vmatmul.bf16.gmra.mxu0 %v152
  %v300 = vpop.f32.mrf.mxu0
  %v301 = vadd.f32 0.0, %v300
  %v302 = vpop.f32.mrf.mxu0
  %v303 = vadd.f32 0.0, %v302
  %304 = vmatmul.bf16.gmra.mxu0 %v154
  %v305 = vpop.f32.mrf.mxu0
  %v306 = vadd.f32 0.0, %v305
  %v307 = vpop.f32.mrf.mxu0
  %v308 = vadd.f32 0.0, %v307
  %309 = vdwg.mxu0
  %310 = vmatpush.bf16.msra.mxu0 0
  %311 = vmatpush.bf16.msra.mxu0 0
  %312 = vmatpush.bf16.msra.mxu0 0
  %313 = vmatpush.bf16.msra.mxu0 0
  %314 = vmatpush.bf16.msra.mxu0 %v223
  %315 = vmatpush.bf16.msra.mxu0 %v222
  %316 = vmatpush.bf16.msra.mxu0 %v221
  %317 = vmatpush.bf16.msra.mxu0 %v220
  %318 = vmatmul.bf16.gmra.mxu0 %v238
  %v319 = vpop.f32.mrf.mxu0
  %v320 = vadd.f32 %v271, %v319
  %v321 = vpop.f32.mrf.mxu0
  %v322 = vadd.f32 %v273, %v321
  %323 = vmatmul.bf16.gmra.mxu0 %v241
  %v324 = vpop.f32.mrf.mxu0
  %v325 = vadd.f32 %v276, %v324
  %v326 = vpop.f32.mrf.mxu0
  %v327 = vadd.f32 %v278, %v326
  %328 = vmatmul.bf16.gmra.mxu0 %v244
  %v329 = vpop.f32.mrf.mxu0
  %v330 = vadd.f32 %v281, %v329
  %v331 = vpop.f32.mrf.mxu0
  %v332 = vadd.f32 %v283, %v331
  %333 = vmatmul.bf16.gmra.mxu0 %v247
  %v334 = vpop.f32.mrf.mxu0
  %v335 = vadd.f32 %v286, %v334
  %v336 = vpop.f32.mrf.mxu0
  %v337 = vadd.f32 %v288, %v336
  %338 = vmatmul.bf16.gmra.mxu0 %v250
  %v339 = vpop.f32.mrf.mxu0
  %v340 = vadd.f32 %v291, %v339
  %v341 = vpop.f32.mrf.mxu0
  %v342 = vadd.f32 %v293, %v341
  %343 = vmatmul.bf16.gmra.mxu0 %v253
  %v344 = vpop.f32.mrf.mxu0
  %v345 = vadd.f32 %v296, %v344
  %v346 = vpop.f32.mrf.mxu0
  %v347 = vadd.f32 %v298, %v346
  %348 = vmatmul.bf16.gmra.mxu0 %v256
  %v349 = vpop.f32.mrf.mxu0
  %v350 = vadd.f32 %v301, %v349
  %v351 = vpop.f32.mrf.mxu0
  %v352 = vadd.f32 %v303, %v351
  %353 = vmatmul.bf16.gmra.mxu0 %v259
  %v354 = vpop.f32.mrf.mxu0
  %v355 = vadd.f32 %v306, %v354
  %v356 = vpop.f32.mrf.mxu0
  %v357 = vadd.f32 %v308, %v356
  %358 = vdwg.mxu0
  %v359 = vadd.f32 %v36, %v320
  %v360 = vadd.f32 %v37, %v322
  %v361 = vadd.f32 %v38, %v325
  %v362 = vadd.f32 %v39, %v327
  %v363 = vadd.f32 %v40, %v330
  %v364 = vadd.f32 %v41, %v332
  %v365 = vadd.f32 %v42, %v335
  %v366 = vadd.f32 %v43, %v337
  %v367 = vadd.f32 %v44, %v340
  %v368 = vadd.f32 %v45, %v342
  %v369 = vadd.f32 %v46, %v345
  %v370 = vadd.f32 %v47, %v347
  %v371 = vadd.f32 %v48, %v350
  %v372 = vadd.f32 %v49, %v352
  %v373 = vadd.f32 %v50, %v355
  %v374 = vadd.f32 %v51, %v357
  %vm375 = vcmask 130048
  %376 = vst.msk [vmem:[#allocation2] sm:$0xff] %vm375, %v359
  %377 = vst.msk [vmem:[#allocation2 + $0x8] sm:$0xff] %vm375, %v360
  %378 = vst.msk [vmem:[#allocation2 + $0x10] sm:$0xff] %vm375, %v361
  %379 = vst.msk [vmem:[#allocation2 + $0x18] sm:$0xff] %vm375, %v362
  %380 = vst.msk [vmem:[#allocation2 + $0x20] sm:$0xff] %vm375, %v363
  %381 = vst.msk [vmem:[#allocation2 + $0x28] sm:$0xff] %vm375, %v364
  %382 = vst.msk [vmem:[#allocation2 + $0x30] sm:$0xff] %vm375, %v365
  %383 = vst.msk [vmem:[#allocation2 + $0x38] sm:$0xff] %vm375, %v366
  %384 = vst.msk [vmem:[#allocation2 + $0x40] sm:$0xff] %vm375, %v367
  %385 = vst.msk [vmem:[#allocation2 + $0x48] sm:$0xff] %vm375, %v368
  %386 = vst.msk [vmem:[#allocation2 + $0x50] sm:$0xff] %vm375, %v369
  %387 = vst.msk [vmem:[#allocation2 + $0x58] sm:$0xff] %vm375, %v370
  %388 = vst.msk [vmem:[#allocation2 + $0x60] sm:$0xff] %vm375, %v371
  %389 = vst.msk [vmem:[#allocation2 + $0x68] sm:$0xff] %vm375, %v372
  %390 = vst.msk [vmem:[#allocation2 + $0x70] sm:$0xff] %vm375, %v373
  %391 = vst.msk [vmem:[#allocation2 + $0x78] sm:$0xff] %vm375, %v374
  // Predicated region
  $region14: #{identity_generator_forward.21} parent=0 // pred_check
    %p392 = pneg %p15
  $region15: #{identity_generator_forward.21} parent=0 // pred_check_branch
    %394 = sbr.rel (%p392) target = $region17
  $region16: #{identity_generator_forward.21} parent=0 // pred_region
    %v395 = vld [vmem:[#allocation2] sm:$0xff]
    %v396 = vld [vmem:[#allocation2 + $0x8] sm:$0xff]
    %v397 = vld [vmem:[#allocation2 + $0x10] sm:$0xff]
    %v398 = vld [vmem:[#allocation2 + $0x18] sm:$0xff]
    %v399 = vld [vmem:[#allocation2 + $0x20] sm:$0xff]
    %v400 = vld [vmem:[#allocation2 + $0x28] sm:$0xff]
    %v401 = vld [vmem:[#allocation2 + $0x30] sm:$0xff]
    %v402 = vld [vmem:[#allocation2 + $0x38] sm:$0xff]
    %v403 = vld [vmem:[#allocation2 + $0x40] sm:$0xff]
    %v404 = vld [vmem:[#allocation2 + $0x48] sm:$0xff]
    %v405 = vld [vmem:[#allocation2 + $0x50] sm:$0xff]
    %v406 = vld [vmem:[#allocation2 + $0x58] sm:$0xff]
    %v407 = vld [vmem:[#allocation2 + $0x60] sm:$0xff]
    %v408 = vld [vmem:[#allocation2 + $0x68] sm:$0xff]
    %v409 = vld [vmem:[#allocation2 + $0x70] sm:$0xff]
    %v410 = vld [vmem:[#allocation2 + $0x78] sm:$0xff]
    %411 = vst.msk [vmem:[%s2] sm:$0xff] %vm375, %v395
    %412 = vst.msk [vmem:[%s2 + $0x8] sm:$0xff] %vm375, %v396
    %413 = vst.msk [vmem:[%s2 + $0x10] sm:$0xff] %vm375, %v397
    %414 = vst.msk [vmem:[%s2 + $0x18] sm:$0xff] %vm375, %v398
    %415 = vst.msk [vmem:[%s2 + $0x20] sm:$0xff] %vm375, %v399
    %416 = vst.msk [vmem:[%s2 + $0x28] sm:$0xff] %vm375, %v400
    %417 = vst.msk [vmem:[%s2 + $0x30] sm:$0xff] %vm375, %v401
    %418 = vst.msk [vmem:[%s2 + $0x38] sm:$0xff] %vm375, %v402
    %419 = vst.msk [vmem:[%s2 + $0x40] sm:$0xff] %vm375, %v403
    %420 = vst.msk [vmem:[%s2 + $0x48] sm:$0xff] %vm375, %v404
    %421 = vst.msk [vmem:[%s2 + $0x50] sm:$0xff] %vm375, %v405
    %422 = vst.msk [vmem:[%s2 + $0x58] sm:$0xff] %vm375, %v406
    %423 = vst.msk [vmem:[%s2 + $0x60] sm:$0xff] %vm375, %v407
    %424 = vst.msk [vmem:[%s2 + $0x68] sm:$0xff] %vm375, %v408
    %425 = vst.msk [vmem:[%s2 + $0x70] sm:$0xff] %vm375, %v409
    %426 = vst.msk [vmem:[%s2 + $0x78] sm:$0xff] %vm375, %v410
    %v427 = vsel %vm375, %v395, 0.0
    %v428 = vsel %vm375, %v396, 0.0
    %v429 = vadd.f32 %v427, %v428
    %v430 = vsel %vm375, %v397, 0.0
    %v431 = vadd.f32 %v429, %v430
    %v432 = vsel %vm375, %v398, 0.0
    %v433 = vadd.f32 %v431, %v432
    %v434 = vsel %vm375, %v399, 0.0
    %v435 = vadd.f32 %v433, %v434
    %v436 = vsel %vm375, %v400, 0.0
    %v437 = vadd.f32 %v435, %v436
    %v438 = vsel %vm375, %v401, 0.0
    %v439 = vadd.f32 %v437, %v438
    %v440 = vsel %vm375, %v402, 0.0
    %v441 = vadd.f32 %v439, %v440
    %v442 = vsel %vm375, %v403, 0.0
    %v443 = vadd.f32 %v441, %v442
    %v444 = vsel %vm375, %v404, 0.0
    %v445 = vadd.f32 %v443, %v444
    %v446 = vsel %vm375, %v405, 0.0
    %v447 = vadd.f32 %v445, %v446
    %v448 = vsel %vm375, %v406, 0.0
    %v449 = vadd.f32 %v447, %v448
    %v450 = vsel %vm375, %v407, 0.0
    %v451 = vadd.f32 %v449, %v450
    %v452 = vsel %vm375, %v408, 0.0
    %v453 = vadd.f32 %v451, %v452
    %v454 = vsel %vm375, %v409, 0.0
    %v455 = vadd.f32 %v453, %v454
    %v456 = vsel %vm375, %v410, 0.0
    %v457 = vadd.f32 %v455, %v456
    %v458 = vrot.slane %v457, 4
    %v459 = vadd.f32 %v457, %v458
    %v460 = vrot.slane %v459, 2
    %v461 = vadd.f32 %v459, %v460
    %v462 = vrot.slane %v461, 1
    %v463 = vadd.f32 %v461, %v462
    %vm464 = vcmask 122880
    %465 = vst.msk [vmem:[%s3] sm:$0x1] %vm464, %v463
    %v466 = vmul.f32 %v395, %v395
    %v467 = vmul.f32 %v396, %v396
    %v468 = vmul.f32 %v397, %v397
    %v469 = vmul.f32 %v398, %v398
    %v470 = vmul.f32 %v399, %v399
    %v471 = vmul.f32 %v400, %v400
    %v472 = vmul.f32 %v401, %v401
    %v473 = vmul.f32 %v402, %v402
    %v474 = vmul.f32 %v403, %v403
    %v475 = vmul.f32 %v404, %v404
    %v476 = vmul.f32 %v405, %v405
    %v477 = vmul.f32 %v406, %v406
    %v478 = vmul.f32 %v407, %v407
    %v479 = vmul.f32 %v408, %v408
    %v480 = vmul.f32 %v409, %v409
    %v481 = vmul.f32 %v410, %v410
    %v482 = vsel %vm375, %v466, 0.0
    %v483 = vsel %vm375, %v467, 0.0
    %v484 = vadd.f32 %v482, %v483
    %v485 = vsel %vm375, %v468, 0.0
    %v486 = vadd.f32 %v484, %v485
    %v487 = vsel %vm375, %v469, 0.0
    %v488 = vadd.f32 %v486, %v487
    %v489 = vsel %vm375, %v470, 0.0
    %v490 = vadd.f32 %v488, %v489
    %v491 = vsel %vm375, %v471, 0.0
    %v492 = vadd.f32 %v490, %v491
    %v493 = vsel %vm375, %v472, 0.0
    %v494 = vadd.f32 %v492, %v493
    %v495 = vsel %vm375, %v473, 0.0
    %v496 = vadd.f32 %v494, %v495
    %v497 = vsel %vm375, %v474, 0.0
    %v498 = vadd.f32 %v496, %v497
    %v499 = vsel %vm375, %v475, 0.0
    %v500 = vadd.f32 %v498, %v499
    %v501 = vsel %vm375, %v476, 0.0
    %v502 = vadd.f32 %v500, %v501
    %v503 = vsel %vm375, %v477, 0.0
    %v504 = vadd.f32 %v502, %v503
    %v505 = vsel %vm375, %v478, 0.0
    %v506 = vadd.f32 %v504, %v505
    %v507 = vsel %vm375, %v479, 0.0
    %v508 = vadd.f32 %v506, %v507
    %v509 = vsel %vm375, %v480, 0.0
    %v510 = vadd.f32 %v508, %v509
    %v511 = vsel %vm375, %v481, 0.0
    %v512 = vadd.f32 %v510, %v511
    %v513 = vrot.slane %v512, 4
    %v514 = vadd.f32 %v512, %v513
    %v515 = vrot.slane %v514, 2
    %v516 = vadd.f32 %v514, %v515
    %v517 = vrot.slane %v516, 1
    %v518 = vadd.f32 %v516, %v517
    %519 = vst.msk [vmem:[%s4] sm:$0x1] %vm464, %v518
  $region17: #{identity_generator_forward.21} parent=0 // pred_fallthru
    _
  // Predicated region
  $region18: #{identity_generator_forward.21} parent=0 // pred_check
    _
  $region19: #{identity_generator_forward.21} parent=0 // pred_check_branch
    %521 = sbr.rel (0) target = $region21
  $region20: #{identity_generator_forward.21} parent=0 // pred_region
    _
  $region21: #{identity_generator_forward.21} parent=0 // pred_fallthru
    _
  // Predicated region
  $region22: #{identity_generator_forward.21} parent=0 // pred_check
    _
  $region23: #{identity_generator_forward.21} parent=0 // pred_check_branch
    %523 = sbr.rel (0) target = $region25
  $region24: #{identity_generator_forward.21} parent=0 // pred_region
    _
  $region25: #{identity_generator_forward.21} parent=0 // pred_fallthru
    _
  // Predicated region
  $region26: #{identity_generator_forward.21} parent=0 // pred_check
    _
  $region27: #{identity_generator_forward.21} parent=0 // pred_check_branch
    %525 = sbr.rel (0) target = $region29
  $region28: #{identity_generator_forward.21} parent=0 // pred_region
    _
  $region29: #{identity_generator_forward.21} parent=0 // pred_fallthru
    _
  // Predicated region
  $region30: #{identity_generator_forward.21} parent=0 // pred_check
    _
  $region31: #{identity_generator_forward.21} parent=0 // pred_check_branch
    %527 = sbr.rel (0) target = $region33
  $region32: #{identity_generator_forward.21} parent=0 // pred_region
    _
  $region33: #{identity_generator_forward.21} parent=0 // pred_fallthru
    _
  // Predicated region
  $region34: #{identity_generator_forward.21} parent=0 // pred_check
    _
  $region35: #{identity_generator_forward.21} parent=0 // pred_check_branch
    %529 = sbr.rel (0) target = $region37
  $region36: #{identity_generator_forward.21} parent=0 // pred_region
    _
  $region37: #{identity_generator_forward.21} parent=0 // pred_fallthru
    _
  // Predicated region
  $region38: #{identity_generator_forward.21} parent=0 // pred_check
    _
  $region39: #{identity_generator_forward.21} parent=0 // pred_check_branch
    %531 = sbr.rel (0) target = $region41
  $region40: #{identity_generator_forward.21} parent=0 // pred_region
    _
  $region41: #{identity_generator_forward.21} parent=0 // pred_fallthru
    _

// kernel: identity_generator_forward.19
$region0: #{identity_generator_forward.19}
  #allocation0 [shape = 'u32[]', space=smem, size = 0x4, offset = 0x4, fixed_abs, tag = 'smem constant byte address 0x4 - core index']
  #allocation1 [shape = 'u32[72,128]{1,0:T(1,128)}', space=vmem, size = 0x9000, scoped, tag = 'internal scratch']
  #allocation2 [shape = 'f32[128,16]{1,0:T(8,128)}', space=vmem, size = 0x10000, scoped, tag = 'scratch operand']
  %s0 = inlined_call_operand.vmem [shape: bf16[128,288], index: 0, kind: input, shape index: {}]
  %s1 = inlined_call_operand.vmem [shape: bf16[288,16], index: 1, kind: input, shape index: {}]
  %s2 = inlined_call_operand.vmem [shape: f32[128,16], index: 2, kind: output, shape index: {0}]
  %s3 = inlined_call_operand.vmem [shape: f32[1,1,16], index: 3, kind: output, shape index: {1}]
  %s4 = inlined_call_operand.vmem [shape: f32[1,1,16], index: 4, kind: output, shape index: {2}]
  %5 = xla_tuple %s2, %s3, %s4
  %s6 = sld [smem:[#allocation0]]
  $region42: #{identity_generator_forward.19} parent=0
    _
  %s8 = ssub.s32 1, %s6
  %s9 = scalar_select 0, %s8, %s6
  // Predicated region
  $region2: #{identity_generator_forward.19} parent=0 // pred_check
    _
  $region3: #{identity_generator_forward.19} parent=0 // pred_check_branch
    %11 = sbr.rel (0) target = $region5
  $region4: #{identity_generator_forward.19} parent=0 // pred_region
    _
  $region5: #{identity_generator_forward.19} parent=0 // pred_fallthru
    _
  // Predicated region
  $region6: #{identity_generator_forward.19} parent=0 // pred_check
    _
  $region7: #{identity_generator_forward.19} parent=0 // pred_check_branch
    %13 = sbr.rel (0) target = $region9
  $region8: #{identity_generator_forward.19} parent=0 // pred_region
    _
  $region9: #{identity_generator_forward.19} parent=0 // pred_fallthru
    _
  %p15 = scmp.eq.s32.totalorder 0, 0
  // Predicated region
  $region10: #{identity_generator_forward.19} parent=0 // pred_check
    %p16 = pneg %p15
  $region11: #{identity_generator_forward.19} parent=0 // pred_check_branch
    %18 = sbr.rel (%p16) target = $region13
  $region12: #{identity_generator_forward.19} parent=0 // pred_region
    %vm19 = vcmask 130048
    %20 = vst.msk [vmem:[#allocation2] sm:$0xff] %vm19, 0.0
    %21 = vst.msk [vmem:[#allocation2 + $0x8] sm:$0xff] %vm19, 0.0
    %22 = vst.msk [vmem:[#allocation2 + $0x10] sm:$0xff] %vm19, 0.0
    %23 = vst.msk [vmem:[#allocation2 + $0x18] sm:$0xff] %vm19, 0.0
    %24 = vst.msk [vmem:[#allocation2 + $0x20] sm:$0xff] %vm19, 0.0
    %25 = vst.msk [vmem:[#allocation2 + $0x28] sm:$0xff] %vm19, 0.0
    %26 = vst.msk [vmem:[#allocation2 + $0x30] sm:$0xff] %vm19, 0.0
    %27 = vst.msk [vmem:[#allocation2 + $0x38] sm:$0xff] %vm19, 0.0
    %28 = vst.msk [vmem:[#allocation2 + $0x40] sm:$0xff] %vm19, 0.0
    %29 = vst.msk [vmem:[#allocation2 + $0x48] sm:$0xff] %vm19, 0.0
    %30 = vst.msk [vmem:[#allocation2 + $0x50] sm:$0xff] %vm19, 0.0
    %31 = vst.msk [vmem:[#allocation2 + $0x58] sm:$0xff] %vm19, 0.0
    %32 = vst.msk [vmem:[#allocation2 + $0x60] sm:$0xff] %vm19, 0.0
    %33 = vst.msk [vmem:[#allocation2 + $0x68] sm:$0xff] %vm19, 0.0
    %34 = vst.msk [vmem:[#allocation2 + $0x70] sm:$0xff] %vm19, 0.0
    %35 = vst.msk [vmem:[#allocation2 + $0x78] sm:$0xff] %vm19, 0.0
  $region13: #{identity_generator_forward.19} parent=0 // pred_fallthru
    _
  %v36 = vld [vmem:[#allocation2] sm:$0xff]
  %v37 = vld [vmem:[#allocation2 + $0x8] sm:$0xff]
  %v38 = vld [vmem:[#allocation2 + $0x10] sm:$0xff]
  %v39 = vld [vmem:[#allocation2 + $0x18] sm:$0xff]
  %v40 = vld [vmem:[#allocation2 + $0x20] sm:$0xff]
  %v41 = vld [vmem:[#allocation2 + $0x28] sm:$0xff]
  %v42 = vld [vmem:[#allocation2 + $0x30] sm:$0xff]
  %v43 = vld [vmem:[#allocation2 + $0x38] sm:$0xff]
  %v44 = vld [vmem:[#allocation2 + $0x40] sm:$0xff]
  %v45 = vld [vmem:[#allocation2 + $0x48] sm:$0xff]
  %v46 = vld [vmem:[#allocation2 + $0x50] sm:$0xff]
  %v47 = vld [vmem:[#allocation2 + $0x58] sm:$0xff]
  %v48 = vld [vmem:[#allocation2 + $0x60] sm:$0xff]
  %v49 = vld [vmem:[#allocation2 + $0x68] sm:$0xff]
  %v50 = vld [vmem:[#allocation2 + $0x70] sm:$0xff]
  %v51 = vld [vmem:[#allocation2 + $0x78] sm:$0xff]
  %v52 = vld [vmem:[%s0] sm:$0xff]
  %v53 = vld [vmem:[%s0 + $0x8] sm:$0xf]
  %v54 = vld [vmem:[%s0 + $0xc] sm:$0xff]
  %v55 = vld [vmem:[%s0 + $0x14] sm:$0xf]
  %v56 = vld [vmem:[%s0 + $0x18] sm:$0xff]
  %v57 = vld [vmem:[%s0 + $0x20] sm:$0xf]
  %v58 = vld [vmem:[%s0 + $0x24] sm:$0xff]
  %v59 = vld [vmem:[%s0 + $0x2c] sm:$0xf]
  %v60 = vld [vmem:[%s0 + $0x30] sm:$0xff]
  %v61 = vld [vmem:[%s0 + $0x38] sm:$0xf]
  %v62 = vld [vmem:[%s0 + $0x3c] sm:$0xff]
  %v63 = vld [vmem:[%s0 + $0x44] sm:$0xf]
  %v64 = vld [vmem:[%s0 + $0x48] sm:$0xff]
  %v65 = vld [vmem:[%s0 + $0x50] sm:$0xf]
  %v66 = vld [vmem:[%s0 + $0x54] sm:$0xff]
  %v67 = vld [vmem:[%s0 + $0x5c] sm:$0xf]
  %v68 = vld [vmem:[%s0 + $0x60] sm:$0xff]
  %v69 = vld [vmem:[%s0 + $0x68] sm:$0xf]
  %v70 = vld [vmem:[%s0 + $0x6c] sm:$0xff]
  %v71 = vld [vmem:[%s0 + $0x74] sm:$0xf]
  %v72 = vld [vmem:[%s0 + $0x78] sm:$0xff]
  %v73 = vld [vmem:[%s0 + $0x80] sm:$0xf]
  %v74 = vld [vmem:[%s0 + $0x84] sm:$0xff]
  %v75 = vld [vmem:[%s0 + $0x8c] sm:$0xf]
  %v76 = vld [vmem:[%s0 + $0x90] sm:$0xff]
  %v77 = vld [vmem:[%s0 + $0x98] sm:$0xf]
  %v78 = vld [vmem:[%s0 + $0x9c] sm:$0xff]
  %v79 = vld [vmem:[%s0 + $0xa4] sm:$0xf]
  %v80 = vld [vmem:[%s0 + $0xa8] sm:$0xff]
  %v81 = vld [vmem:[%s0 + $0xb0] sm:$0xf]
  %v82 = vld [vmem:[%s0 + $0xb4] sm:$0xff]
  %v83 = vld [vmem:[%s0 + $0xbc] sm:$0xf]
  %v84 = vld [vmem:[%s1] sm:$0xf]
  %v85 = vld [vmem:[%s1 + $0x4] sm:$0xf]
  %v86 = vld [vmem:[%s1 + $0x8] sm:$0xf]
  %v87 = vld [vmem:[%s1 + $0xc] sm:$0xf]
  %v88 = vld [vmem:[%s1 + $0x10] sm:$0xf]
  %v89 = vld [vmem:[%s1 + $0x14] sm:$0xf]
  %v90 = vld [vmem:[%s1 + $0x18] sm:$0xf]
  %v91 = vld [vmem:[%s1 + $0x1c] sm:$0xf]
  %v92 = vld [vmem:[%s1 + $0x20] sm:$0xf]
  %v93 = vld [vmem:[%s1 + $0x24] sm:$0xf]
  %v94 = vld [vmem:[%s1 + $0x28] sm:$0xf]
  %v95 = vld [vmem:[%s1 + $0x2c] sm:$0xf]
  %v96 = vld [vmem:[%s1 + $0x30] sm:$0xf]
  %v97 = vld [vmem:[%s1 + $0x34] sm:$0xf]
  %v98 = vld [vmem:[%s1 + $0x38] sm:$0xf]
  %v99 = vld [vmem:[%s1 + $0x3c] sm:$0xf]
  %v100 = vld [vmem:[%s1 + $0x40] sm:$0xf]
  %v101 = vld [vmem:[%s1 + $0x44] sm:$0xf]
  %v102 = vld [vmem:[%s1 + $0x48] sm:$0xf]
  %v103 = vld [vmem:[%s1 + $0x4c] sm:$0xf]
  %v104 = vld [vmem:[%s1 + $0x50] sm:$0xf]
  %v105 = vld [vmem:[%s1 + $0x54] sm:$0xf]
  %v106 = vld [vmem:[%s1 + $0x58] sm:$0xf]
  %v107 = vld [vmem:[%s1 + $0x5c] sm:$0xf]
  %v108 = vld [vmem:[%s1 + $0x60] sm:$0xf]
  %v109 = vld [vmem:[%s1 + $0x64] sm:$0xf]
  %v110 = vld [vmem:[%s1 + $0x68] sm:$0xf]
  %v111 = vld [vmem:[%s1 + $0x6c] sm:$0xf]
  %v112 = vld [vmem:[%s1 + $0x70] sm:$0xf]
  %v113 = vld [vmem:[%s1 + $0x74] sm:$0xf]
  %v114 = vld [vmem:[%s1 + $0x78] sm:$0xf]
  %v115 = vld [vmem:[%s1 + $0x7c] sm:$0xf]
  %v116 = vld [vmem:[%s1 + $0x80] sm:$0xf]
  %v117 = vld [vmem:[%s1 + $0x84] sm:$0xf]
  %v118 = vld [vmem:[%s1 + $0x88] sm:$0xf]
  %v119 = vld [vmem:[%s1 + $0x8c] sm:$0xf]
  %v152 = vunpack.c.l.b16 %v52
  %v153 = vunpack.c.h.b16 %v52
  %v154 = vunpack.c.l.b16 %v53
  %v155 = vunpack.c.l.b16 %v54
  %v156 = vunpack.c.h.b16 %v54
  %v157 = vunpack.c.l.b16 %v55
  %v158 = vunpack.c.l.b16 %v56
  %v159 = vunpack.c.h.b16 %v56
  %v160 = vunpack.c.l.b16 %v57
  %v161 = vunpack.c.l.b16 %v58
  %v162 = vunpack.c.h.b16 %v58
  %v163 = vunpack.c.l.b16 %v59
  %v164 = vunpack.c.l.b16 %v60
  %v165 = vunpack.c.h.b16 %v60
  %v166 = vunpack.c.l.b16 %v61
  %v167 = vunpack.c.l.b16 %v62
  %v168 = vunpack.c.h.b16 %v62
  %v169 = vunpack.c.l.b16 %v63
  %v170 = vunpack.c.l.b16 %v64
  %v171 = vunpack.c.h.b16 %v64
  %v172 = vunpack.c.l.b16 %v65
  %v173 = vunpack.c.l.b16 %v66
  %v174 = vunpack.c.h.b16 %v66
  %v175 = vunpack.c.l.b16 %v67
  %v176 = vunpack.c.l.b16 %v68
  %v177 = vunpack.c.h.b16 %v68
  %v178 = vunpack.c.l.b16 %v69
  %v179 = vunpack.c.l.b16 %v70
  %v180 = vunpack.c.h.b16 %v70
  %v181 = vunpack.c.l.b16 %v71
  %v182 = vunpack.c.l.b16 %v72
  %v183 = vunpack.c.h.b16 %v72
  %v184 = vunpack.c.l.b16 %v73
  %v185 = vunpack.c.l.b16 %v74
  %v186 = vunpack.c.h.b16 %v74
  %v187 = vunpack.c.l.b16 %v75
  %v188 = vunpack.c.l.b16 %v76
  %v189 = vunpack.c.h.b16 %v76
  %v190 = vunpack.c.l.b16 %v77
  %v191 = vunpack.c.l.b16 %v78
  %v192 = vunpack.c.h.b16 %v78
  %v193 = vunpack.c.l.b16 %v79
  %v194 = vunpack.c.l.b16 %v80
  %v195 = vunpack.c.h.b16 %v80
  %v196 = vunpack.c.l.b16 %v81
  %v197 = vunpack.c.l.b16 %v82
  %v198 = vunpack.c.h.b16 %v82
  %v199 = vunpack.c.l.b16 %v83
  %v200 = vpack.c.b16 %v155, %v152
  %v201 = vpack.c.b16 %v156, %v153
  %v202 = vpack.c.b16 %v157, %v154
  %v203 = vpack.c.b16 %v161, %v158
  %v204 = vpack.c.b16 %v162, %v159
  %v205 = vpack.c.b16 %v163, %v160
  %v206 = vpack.c.b16 %v167, %v164
  %v207 = vpack.c.b16 %v168, %v165
  %v208 = vpack.c.b16 %v169, %v166
  %v209 = vpack.c.b16 %v173, %v170
  %v210 = vpack.c.b16 %v174, %v171
  %v211 = vpack.c.b16 %v175, %v172
  %v212 = vpack.c.b16 %v179, %v176
  %v213 = vpack.c.b16 %v180, %v177
  %v214 = vpack.c.b16 %v181, %v178
  %v215 = vpack.c.b16 %v185, %v182
  %v216 = vpack.c.b16 %v186, %v183
  %v217 = vpack.c.b16 %v187, %v184
  %v218 = vpack.c.b16 %v191, %v188
  %v219 = vpack.c.b16 %v192, %v189
  %v220 = vpack.c.b16 %v193, %v190
  %v221 = vpack.c.b16 %v197, %v194
  %v222 = vpack.c.b16 %v198, %v195
  %v223 = vpack.c.b16 %v199, %v196
  %v276 = vunpack.c.l.b16 %v84
  %v277 = vunpack.c.l.b16 %v85
  %v278 = vunpack.c.l.b16 %v86
  %v279 = vunpack.c.l.b16 %v87
  %v280 = vunpack.c.l.b16 %v88
  %v281 = vunpack.c.l.b16 %v89
  %v282 = vunpack.c.l.b16 %v90
  %v283 = vunpack.c.l.b16 %v91
  %v284 = vunpack.c.l.b16 %v92
  %v285 = vunpack.c.l.b16 %v93
  %v286 = vunpack.c.l.b16 %v94
  %v287 = vunpack.c.l.b16 %v95
  %v288 = vunpack.c.l.b16 %v96
  %v289 = vunpack.c.l.b16 %v97
  %v290 = vunpack.c.l.b16 %v98
  %v291 = vunpack.c.l.b16 %v99
  %v292 = vunpack.c.l.b16 %v100
  %v293 = vunpack.c.l.b16 %v101
  %v294 = vunpack.c.l.b16 %v102
  %v295 = vunpack.c.l.b16 %v103
  %v296 = vunpack.c.l.b16 %v104
  %v297 = vunpack.c.l.b16 %v105
  %v298 = vunpack.c.l.b16 %v106
  %v299 = vunpack.c.l.b16 %v107
  %v300 = vunpack.c.l.b16 %v108
  %v301 = vunpack.c.l.b16 %v109
  %v302 = vunpack.c.l.b16 %v110
  %v303 = vunpack.c.l.b16 %v111
  %v304 = vunpack.c.l.b16 %v112
  %v305 = vunpack.c.l.b16 %v113
  %v306 = vunpack.c.l.b16 %v114
  %v307 = vunpack.c.l.b16 %v115
  %v308 = vunpack.c.l.b16 %v116
  %v309 = vunpack.c.l.b16 %v117
  %v310 = vunpack.c.l.b16 %v118
  %v311 = vunpack.c.l.b16 %v119
  %v312 = vpack.c.b16 %v277, %v276
  %v313 = vpack.c.b16 %v279, %v278
  %v314 = vpack.c.b16 %v281, %v280
  %v315 = vpack.c.b16 %v283, %v282
  %v316 = vpack.c.b16 %v285, %v284
  %v317 = vpack.c.b16 %v287, %v286
  %v318 = vpack.c.b16 %v289, %v288
  %v319 = vpack.c.b16 %v291, %v290
  %v320 = vpack.c.b16 %v293, %v292
  %v321 = vpack.c.b16 %v295, %v294
  %v322 = vpack.c.b16 %v297, %v296
  %v323 = vpack.c.b16 %v299, %v298
  %v324 = vpack.c.b16 %v301, %v300
  %v325 = vpack.c.b16 %v303, %v302
  %v326 = vpack.c.b16 %v305, %v304
  %v327 = vpack.c.b16 %v307, %v306
  %v328 = vpack.c.b16 %v309, %v308
  %v329 = vpack.c.b16 %v311, %v310
  %vm348 = vcmask 261120
  %v350 = vsel %vm348, %v202, 0
  %v353 = vsel %vm348, %v205, 0
  %v356 = vsel %vm348, %v208, 0
  %v359 = vsel %vm348, %v211, 0
  %v362 = vsel %vm348, %v214, 0
  %v365 = vsel %vm348, %v217, 0
  %v368 = vsel %vm348, %v220, 0
  %v371 = vsel %vm348, %v223, 0
  %373 = vmatpush.bf16.msra.mxu0 %v319
  %374 = vmatpush.bf16.msra.mxu0 %v318
  %375 = vmatpush.bf16.msra.mxu0 %v317
  %376 = vmatpush.bf16.msra.mxu0 %v316
  %377 = vmatpush.bf16.msra.mxu0 %v315
  %378 = vmatpush.bf16.msra.mxu0 %v314
  %379 = vmatpush.bf16.msra.mxu0 %v313
  %380 = vmatpush.bf16.msra.mxu0 %v312
  %381 = vmatmul.bf16.gmra.mxu0 %v200
  %v382 = vpop.f32.mrf.mxu0
  %v383 = vadd.f32 0.0, %v382
  %v384 = vpop.f32.mrf.mxu0
  %v385 = vadd.f32 0.0, %v384
  %386 = vmatmul.bf16.gmra.mxu0 %v203
  %v387 = vpop.f32.mrf.mxu0
  %v388 = vadd.f32 0.0, %v387
  %v389 = vpop.f32.mrf.mxu0
  %v390 = vadd.f32 0.0, %v389
  %391 = vmatmul.bf16.gmra.mxu0 %v206
  %v392 = vpop.f32.mrf.mxu0
  %v393 = vadd.f32 0.0, %v392
  %v394 = vpop.f32.mrf.mxu0
  %v395 = vadd.f32 0.0, %v394
  %396 = vmatmul.bf16.gmra.mxu0 %v209
  %v397 = vpop.f32.mrf.mxu0
  %v398 = vadd.f32 0.0, %v397
  %v399 = vpop.f32.mrf.mxu0
  %v400 = vadd.f32 0.0, %v399
  %401 = vmatmul.bf16.gmra.mxu0 %v212
  %v402 = vpop.f32.mrf.mxu0
  %v403 = vadd.f32 0.0, %v402
  %v404 = vpop.f32.mrf.mxu0
  %v405 = vadd.f32 0.0, %v404
  %406 = vmatmul.bf16.gmra.mxu0 %v215
  %v407 = vpop.f32.mrf.mxu0
  %v408 = vadd.f32 0.0, %v407
  %v409 = vpop.f32.mrf.mxu0
  %v410 = vadd.f32 0.0, %v409
  %411 = vmatmul.bf16.gmra.mxu0 %v218
  %v412 = vpop.f32.mrf.mxu0
  %v413 = vadd.f32 0.0, %v412
  %v414 = vpop.f32.mrf.mxu0
  %v415 = vadd.f32 0.0, %v414
  %416 = vmatmul.bf16.gmra.mxu0 %v221
  %v417 = vpop.f32.mrf.mxu0
  %v418 = vadd.f32 0.0, %v417
  %v419 = vpop.f32.mrf.mxu0
  %v420 = vadd.f32 0.0, %v419
  %421 = vdwg.mxu0
  %422 = vmatpush.bf16.msra.mxu0 %v327
  %423 = vmatpush.bf16.msra.mxu0 %v326
  %424 = vmatpush.bf16.msra.mxu0 %v325
  %425 = vmatpush.bf16.msra.mxu0 %v324
  %426 = vmatpush.bf16.msra.mxu0 %v323
  %427 = vmatpush.bf16.msra.mxu0 %v322
  %428 = vmatpush.bf16.msra.mxu0 %v321
  %429 = vmatpush.bf16.msra.mxu0 %v320
  %430 = vmatmul.bf16.gmra.mxu0 %v201
  %v431 = vpop.f32.mrf.mxu0
  %v432 = vadd.f32 %v383, %v431
  %v433 = vpop.f32.mrf.mxu0
  %v434 = vadd.f32 %v385, %v433
  %435 = vmatmul.bf16.gmra.mxu0 %v204
  %v436 = vpop.f32.mrf.mxu0
  %v437 = vadd.f32 %v388, %v436
  %v438 = vpop.f32.mrf.mxu0
  %v439 = vadd.f32 %v390, %v438
  %440 = vmatmul.bf16.gmra.mxu0 %v207
  %v441 = vpop.f32.mrf.mxu0
  %v442 = vadd.f32 %v393, %v441
  %v443 = vpop.f32.mrf.mxu0
  %v444 = vadd.f32 %v395, %v443
  %445 = vmatmul.bf16.gmra.mxu0 %v210
  %v446 = vpop.f32.mrf.mxu0
  %v447 = vadd.f32 %v398, %v446
  %v448 = vpop.f32.mrf.mxu0
  %v449 = vadd.f32 %v400, %v448
  %450 = vmatmul.bf16.gmra.mxu0 %v213
  %v451 = vpop.f32.mrf.mxu0
  %v452 = vadd.f32 %v403, %v451
  %v453 = vpop.f32.mrf.mxu0
  %v454 = vadd.f32 %v405, %v453
  %455 = vmatmul.bf16.gmra.mxu0 %v216
  %v456 = vpop.f32.mrf.mxu0
  %v457 = vadd.f32 %v408, %v456
  %v458 = vpop.f32.mrf.mxu0
  %v459 = vadd.f32 %v410, %v458
  %460 = vmatmul.bf16.gmra.mxu0 %v219
  %v461 = vpop.f32.mrf.mxu0
  %v462 = vadd.f32 %v413, %v461
  %v463 = vpop.f32.mrf.mxu0
  %v464 = vadd.f32 %v415, %v463
  %465 = vmatmul.bf16.gmra.mxu0 %v222
  %v466 = vpop.f32.mrf.mxu0
  %v467 = vadd.f32 %v418, %v466
  %v468 = vpop.f32.mrf.mxu0
  %v469 = vadd.f32 %v420, %v468
  %470 = vdwg.mxu0
  %471 = vmatpush.bf16.msra.mxu0 0
  %472 = vmatpush.bf16.msra.mxu0 0
  %473 = vmatpush.bf16.msra.mxu0 0
  %474 = vmatpush.bf16.msra.mxu0 0
  %475 = vmatpush.bf16.msra.mxu0 0
  %476 = vmatpush.bf16.msra.mxu0 0
  %477 = vmatpush.bf16.msra.mxu0 %v329
  %478 = vmatpush.bf16.msra.mxu0 %v328
  %479 = vmatmul.bf16.gmra.mxu0 %v350
  %v480 = vpop.f32.mrf.mxu0
  %v481 = vadd.f32 %v432, %v480
  %v482 = vpop.f32.mrf.mxu0
  %v483 = vadd.f32 %v434, %v482
  %484 = vmatmul.bf16.gmra.mxu0 %v353
  %v485 = vpop.f32.mrf.mxu0
  %v486 = vadd.f32 %v437, %v485
  %v487 = vpop.f32.mrf.mxu0
  %v488 = vadd.f32 %v439, %v487
  %489 = vmatmul.bf16.gmra.mxu0 %v356
  %v490 = vpop.f32.mrf.mxu0
  %v491 = vadd.f32 %v442, %v490
  %v492 = vpop.f32.mrf.mxu0
  %v493 = vadd.f32 %v444, %v492
  %494 = vmatmul.bf16.gmra.mxu0 %v359
  %v495 = vpop.f32.mrf.mxu0
  %v496 = vadd.f32 %v447, %v495
  %v497 = vpop.f32.mrf.mxu0
  %v498 = vadd.f32 %v449, %v497
  %499 = vmatmul.bf16.gmra.mxu0 %v362
  %v500 = vpop.f32.mrf.mxu0
  %v501 = vadd.f32 %v452, %v500
  %v502 = vpop.f32.mrf.mxu0
  %v503 = vadd.f32 %v454, %v502
  %504 = vmatmul.bf16.gmra.mxu0 %v365
  %v505 = vpop.f32.mrf.mxu0
  %v506 = vadd.f32 %v457, %v505
  %v507 = vpop.f32.mrf.mxu0
  %v508 = vadd.f32 %v459, %v507
  %509 = vmatmul.bf16.gmra.mxu0 %v368
  %v510 = vpop.f32.mrf.mxu0
  %v511 = vadd.f32 %v462, %v510
  %v512 = vpop.f32.mrf.mxu0
  %v513 = vadd.f32 %v464, %v512
  %514 = vmatmul.bf16.gmra.mxu0 %v371
  %v515 = vpop.f32.mrf.mxu0
  %v516 = vadd.f32 %v467, %v515
  %v517 = vpop.f32.mrf.mxu0
  %v518 = vadd.f32 %v469, %v517
  %519 = vdwg.mxu0
  %v520 = vadd.f32 %v36, %v481
  %v521 = vadd.f32 %v37, %v483
  %v522 = vadd.f32 %v38, %v486
  %v523 = vadd.f32 %v39, %v488
  %v524 = vadd.f32 %v40, %v491
  %v525 = vadd.f32 %v41, %v493
  %v526 = vadd.f32 %v42, %v496
  %v527 = vadd.f32 %v43, %v498
  %v528 = vadd.f32 %v44, %v501
  %v529 = vadd.f32 %v45, %v503
  %v530 = vadd.f32 %v46, %v506
  %v531 = vadd.f32 %v47, %v508
  %v532 = vadd.f32 %v48, %v511
  %v533 = vadd.f32 %v49, %v513
  %v534 = vadd.f32 %v50, %v516
  %v535 = vadd.f32 %v51, %v518
  %vm536 = vcmask 130048
  %537 = vst.msk [vmem:[#allocation2] sm:$0xff] %vm536, %v520
  %538 = vst.msk [vmem:[#allocation2 + $0x8] sm:$0xff] %vm536, %v521
  %539 = vst.msk [vmem:[#allocation2 + $0x10] sm:$0xff] %vm536, %v522
  %540 = vst.msk [vmem:[#allocation2 + $0x18] sm:$0xff] %vm536, %v523
  %541 = vst.msk [vmem:[#allocation2 + $0x20] sm:$0xff] %vm536, %v524
  %542 = vst.msk [vmem:[#allocation2 + $0x28] sm:$0xff] %vm536, %v525
  %543 = vst.msk [vmem:[#allocation2 + $0x30] sm:$0xff] %vm536, %v526
  %544 = vst.msk [vmem:[#allocation2 + $0x38] sm:$0xff] %vm536, %v527
  %545 = vst.msk [vmem:[#allocation2 + $0x40] sm:$0xff] %vm536, %v528
  %546 = vst.msk [vmem:[#allocation2 + $0x48] sm:$0xff] %vm536, %v529
  %547 = vst.msk [vmem:[#allocation2 + $0x50] sm:$0xff] %vm536, %v530
  %548 = vst.msk [vmem:[#allocation2 + $0x58] sm:$0xff] %vm536, %v531
  %549 = vst.msk [vmem:[#allocation2 + $0x60] sm:$0xff] %vm536, %v532
  %550 = vst.msk [vmem:[#allocation2 + $0x68] sm:$0xff] %vm536, %v533
  %551 = vst.msk [vmem:[#allocation2 + $0x70] sm:$0xff] %vm536, %v534
  %552 = vst.msk [vmem:[#allocation2 + $0x78] sm:$0xff] %vm536, %v535
  // Predicated region
  $region14: #{identity_generator_forward.19} parent=0 // pred_check
    %p553 = pneg %p15
  $region15: #{identity_generator_forward.19} parent=0 // pred_check_branch
    %555 = sbr.rel (%p553) target = $region17
  $region16: #{identity_generator_forward.19} parent=0 // pred_region
    %v556 = vld [vmem:[#allocation2] sm:$0xff]
    %v557 = vld [vmem:[#allocation2 + $0x8] sm:$0xff]
    %v558 = vld [vmem:[#allocation2 + $0x10] sm:$0xff]
    %v559 = vld [vmem:[#allocation2 + $0x18] sm:$0xff]
    %v560 = vld [vmem:[#allocation2 + $0x20] sm:$0xff]
    %v561 = vld [vmem:[#allocation2 + $0x28] sm:$0xff]
    %v562 = vld [vmem:[#allocation2 + $0x30] sm:$0xff]
    %v563 = vld [vmem:[#allocation2 + $0x38] sm:$0xff]
    %v564 = vld [vmem:[#allocation2 + $0x40] sm:$0xff]
    %v565 = vld [vmem:[#allocation2 + $0x48] sm:$0xff]
    %v566 = vld [vmem:[#allocation2 + $0x50] sm:$0xff]
    %v567 = vld [vmem:[#allocation2 + $0x58] sm:$0xff]
    %v568 = vld [vmem:[#allocation2 + $0x60] sm:$0xff]
    %v569 = vld [vmem:[#allocation2 + $0x68] sm:$0xff]
    %v570 = vld [vmem:[#allocation2 + $0x70] sm:$0xff]
    %v571 = vld [vmem:[#allocation2 + $0x78] sm:$0xff]
    %572 = vst.msk [vmem:[%s2] sm:$0xff] %vm536, %v556
    %573 = vst.msk [vmem:[%s2 + $0x8] sm:$0xff] %vm536, %v557
    %574 = vst.msk [vmem:[%s2 + $0x10] sm:$0xff] %vm536, %v558
    %575 = vst.msk [vmem:[%s2 + $0x18] sm:$0xff] %vm536, %v559
    %576 = vst.msk [vmem:[%s2 + $0x20] sm:$0xff] %vm536, %v560
    %577 = vst.msk [vmem:[%s2 + $0x28] sm:$0xff] %vm536, %v561
    %578 = vst.msk [vmem:[%s2 + $0x30] sm:$0xff] %vm536, %v562
    %579 = vst.msk [vmem:[%s2 + $0x38] sm:$0xff] %vm536, %v563
    %580 = vst.msk [vmem:[%s2 + $0x40] sm:$0xff] %vm536, %v564
    %581 = vst.msk [vmem:[%s2 + $0x48] sm:$0xff] %vm536, %v565
    %582 = vst.msk [vmem:[%s2 + $0x50] sm:$0xff] %vm536, %v566
    %583 = vst.msk [vmem:[%s2 + $0x58] sm:$0xff] %vm536, %v567
    %584 = vst.msk [vmem:[%s2 + $0x60] sm:$0xff] %vm536, %v568
    %585 = vst.msk [vmem:[%s2 + $0x68] sm:$0xff] %vm536, %v569
    %586 = vst.msk [vmem:[%s2 + $0x70] sm:$0xff] %vm536, %v570
    %587 = vst.msk [vmem:[%s2 + $0x78] sm:$0xff] %vm536, %v571
    %v588 = vsel %vm536, %v556, 0.0
    %v589 = vsel %vm536, %v557, 0.0
    %v590 = vadd.f32 %v588, %v589
    %v591 = vsel %vm536, %v558, 0.0
    %v592 = vadd.f32 %v590, %v591
    %v593 = vsel %vm536, %v559, 0.0
    %v594 = vadd.f32 %v592, %v593
    %v595 = vsel %vm536, %v560, 0.0
    %v596 = vadd.f32 %v594, %v595
    %v597 = vsel %vm536, %v561, 0.0
    %v598 = vadd.f32 %v596, %v597
    %v599 = vsel %vm536, %v562, 0.0
    %v600 = vadd.f32 %v598, %v599
    %v601 = vsel %vm536, %v563, 0.0
    %v602 = vadd.f32 %v600, %v601
    %v603 = vsel %vm536, %v564, 0.0
    %v604 = vadd.f32 %v602, %v603
    %v605 = vsel %vm536, %v565, 0.0
    %v606 = vadd.f32 %v604, %v605
    %v607 = vsel %vm536, %v566, 0.0
    %v608 = vadd.f32 %v606, %v607
    %v609 = vsel %vm536, %v567, 0.0
    %v610 = vadd.f32 %v608, %v609
    %v611 = vsel %vm536, %v568, 0.0
    %v612 = vadd.f32 %v610, %v611
    %v613 = vsel %vm536, %v569, 0.0
    %v614 = vadd.f32 %v612, %v613
    %v615 = vsel %vm536, %v570, 0.0
    %v616 = vadd.f32 %v614, %v615
    %v617 = vsel %vm536, %v571, 0.0
    %v618 = vadd.f32 %v616, %v617
    %v619 = vrot.slane %v618, 4
    %v620 = vadd.f32 %v618, %v619
    %v621 = vrot.slane %v620, 2
    %v622 = vadd.f32 %v620, %v621
    %v623 = vrot.slane %v622, 1
    %v624 = vadd.f32 %v622, %v623
    %vm625 = vcmask 122880
    %626 = vst.msk [vmem:[%s3] sm:$0x1] %vm625, %v624
    %v627 = vmul.f32 %v556, %v556
    %v628 = vmul.f32 %v557, %v557
    %v629 = vmul.f32 %v558, %v558
    %v630 = vmul.f32 %v559, %v559
    %v631 = vmul.f32 %v560, %v560
    %v632 = vmul.f32 %v561, %v561
    %v633 = vmul.f32 %v562, %v562
    %v634 = vmul.f32 %v563, %v563
    %v635 = vmul.f32 %v564, %v564
    %v636 = vmul.f32 %v565, %v565
    %v637 = vmul.f32 %v566, %v566
    %v638 = vmul.f32 %v567, %v567
    %v639 = vmul.f32 %v568, %v568
    %v640 = vmul.f32 %v569, %v569
    %v641 = vmul.f32 %v570, %v570
    %v642 = vmul.f32 %v571, %v571
    %v643 = vsel %vm536, %v627, 0.0
    %v644 = vsel %vm536, %v628, 0.0
    %v645 = vadd.f32 %v643, %v644
    %v646 = vsel %vm536, %v629, 0.0
    %v647 = vadd.f32 %v645, %v646
    %v648 = vsel %vm536, %v630, 0.0
    %v649 = vadd.f32 %v647, %v648
    %v650 = vsel %vm536, %v631, 0.0
    %v651 = vadd.f32 %v649, %v650
    %v652 = vsel %vm536, %v632, 0.0
    %v653 = vadd.f32 %v651, %v652
    %v654 = vsel %vm536, %v633, 0.0
    %v655 = vadd.f32 %v653, %v654
    %v656 = vsel %vm536, %v634, 0.0
    %v657 = vadd.f32 %v655, %v656
    %v658 = vsel %vm536, %v635, 0.0
    %v659 = vadd.f32 %v657, %v658
    %v660 = vsel %vm536, %v636, 0.0
    %v661 = vadd.f32 %v659, %v660
    %v662 = vsel %vm536, %v637, 0.0
    %v663 = vadd.f32 %v661, %v662
    %v664 = vsel %vm536, %v638, 0.0
    %v665 = vadd.f32 %v663, %v664
    %v666 = vsel %vm536, %v639, 0.0
    %v667 = vadd.f32 %v665, %v666
    %v668 = vsel %vm536, %v640, 0.0
    %v669 = vadd.f32 %v667, %v668
    %v670 = vsel %vm536, %v641, 0.0
    %v671 = vadd.f32 %v669, %v670
    %v672 = vsel %vm536, %v642, 0.0
    %v673 = vadd.f32 %v671, %v672
    %v674 = vrot.slane %v673, 4
    %v675 = vadd.f32 %v673, %v674
    %v676 = vrot.slane %v675, 2
    %v677 = vadd.f32 %v675, %v676
    %v678 = vrot.slane %v677, 1
    %v679 = vadd.f32 %v677, %v678
    %680 = vst.msk [vmem:[%s4] sm:$0x1] %vm625, %v679
  $region17: #{identity_generator_forward.19} parent=0 // pred_fallthru
    _
  // Predicated region
  $region18: #{identity_generator_forward.19} parent=0 // pred_check
    _
  $region19: #{identity_generator_forward.19} parent=0 // pred_check_branch
    %682 = sbr.rel (0) target = $region21
  $region20: #{identity_generator_forward.19} parent=0 // pred_region
    _
  $region21: #{identity_generator_forward.19} parent=0 // pred_fallthru
    _
  // Predicated region
  $region22: #{identity_generator_forward.19} parent=0 // pred_check
    _
  $region23: #{identity_generator_forward.19} parent=0 // pred_check_branch
    %684 = sbr.rel (0) target = $region25
  $region24: #{identity_generator_forward.19} parent=0 // pred_region
    _
  $region25: #{identity_generator_forward.19} parent=0 // pred_fallthru
    _
  // Predicated region
  $region26: #{identity_generator_forward.19} parent=0 // pred_check
    _
  $region27: #{identity_generator_forward.19} parent=0 // pred_check_branch
    %686 = sbr.rel (0) target = $region29
  $region28: #{identity_generator_forward.19} parent=0 // pred_region
    _
  $region29: #{identity_generator_forward.19} parent=0 // pred_fallthru
    _
  // Predicated region
  $region30: #{identity_generator_forward.19} parent=0 // pred_check
    _
  $region31: #{identity_generator_forward.19} parent=0 // pred_check_branch
    %688 = sbr.rel (0) target = $region33
  $region32: #{identity_generator_forward.19} parent=0 // pred_region
    _
  $region33: #{identity_generator_forward.19} parent=0 // pred_fallthru
    _
  // Predicated region
  $region34: #{identity_generator_forward.19} parent=0 // pred_check
    _
  $region35: #{identity_generator_forward.19} parent=0 // pred_check_branch
    %690 = sbr.rel (0) target = $region37
  $region36: #{identity_generator_forward.19} parent=0 // pred_region
    _
  $region37: #{identity_generator_forward.19} parent=0 // pred_fallthru
    _
  // Predicated region
  $region38: #{identity_generator_forward.19} parent=0 // pred_check
    _
  $region39: #{identity_generator_forward.19} parent=0 // pred_check_branch
    %692 = sbr.rel (0) target = $region41
  $region40: #{identity_generator_forward.19} parent=0 // pred_region
    _
  $region41: #{identity_generator_forward.19} parent=0 // pred_fallthru
    _

// kernel: identity_generator_forward.23
$region0: #{identity_generator_forward.23}
  #allocation0 [shape = 'u32[]', space=smem, size = 0x4, offset = 0x4, fixed_abs, tag = 'smem constant byte address 0x4 - core index']
  #allocation1 [shape = 'u32[72,128]{1,0:T(1,128)}', space=vmem, size = 0x9000, scoped, tag = 'internal scratch']
  %s0 = inlined_call_operand.vmem [shape: f32[512,16], index: 0, kind: input, shape index: {}]
  %s1 = inlined_call_operand.vmem [shape: f32[1,16], index: 1, kind: input, shape index: {}]
  %s2 = inlined_call_operand.vmem [shape: f32[1,16], index: 2, kind: input, shape index: {}]
  %s3 = inlined_call_operand.vmem [shape: bf16[512,16], index: 3, kind: output, shape index: {}]
  %s4 = sld [smem:[#allocation0]]
  $region22: #{identity_generator_forward.23} parent=0
    _
  %s6 = ssub.s32 1, %s4
  %s7 = scalar_select 0, %s6, %s4
  // Predicated region
  $region2: #{identity_generator_forward.23} parent=0 // pred_check
    _
  $region3: #{identity_generator_forward.23} parent=0 // pred_check_branch
    %9 = sbr.rel (0) target = $region5
  $region4: #{identity_generator_forward.23} parent=0 // pred_region
    _
  $region5: #{identity_generator_forward.23} parent=0 // pred_fallthru
    _
  // Predicated region
  $region6: #{identity_generator_forward.23} parent=0 // pred_check
    _
  $region7: #{identity_generator_forward.23} parent=0 // pred_check_branch
    %11 = sbr.rel (0) target = $region9
  $region8: #{identity_generator_forward.23} parent=0 // pred_region
    _
  $region9: #{identity_generator_forward.23} parent=0 // pred_fallthru
    _
  // Predicated region
  $region10: #{identity_generator_forward.23} parent=0 // pred_check
    _
  $region11: #{identity_generator_forward.23} parent=0 // pred_check_branch
    %13 = sbr.rel (0) target = $region13
  $region12: #{identity_generator_forward.23} parent=0 // pred_region
    _
  $region13: #{identity_generator_forward.23} parent=0 // pred_fallthru
    _
  %v14 = vld [vmem:[%s0] sm:$0xff]
  %v15 = vld [vmem:[%s0 + $0x8] sm:$0xff]
  %v16 = vld [vmem:[%s0 + $0x10] sm:$0xff]
  %v17 = vld [vmem:[%s0 + $0x18] sm:$0xff]
  %v18 = vld [vmem:[%s0 + $0x20] sm:$0xff]
  %v19 = vld [vmem:[%s0 + $0x28] sm:$0xff]
  %v20 = vld [vmem:[%s0 + $0x30] sm:$0xff]
  %v21 = vld [vmem:[%s0 + $0x38] sm:$0xff]
  %v22 = vld [vmem:[%s0 + $0x40] sm:$0xff]
  %v23 = vld [vmem:[%s0 + $0x48] sm:$0xff]
  %v24 = vld [vmem:[%s0 + $0x50] sm:$0xff]
  %v25 = vld [vmem:[%s0 + $0x58] sm:$0xff]
  %v26 = vld [vmem:[%s0 + $0x60] sm:$0xff]
  %v27 = vld [vmem:[%s0 + $0x68] sm:$0xff]
  %v28 = vld [vmem:[%s0 + $0x70] sm:$0xff]
  %v29 = vld [vmem:[%s0 + $0x78] sm:$0xff]
  %v30 = vld [vmem:[%s0 + $0x80] sm:$0xff]
  %v31 = vld [vmem:[%s0 + $0x88] sm:$0xff]
  %v32 = vld [vmem:[%s0 + $0x90] sm:$0xff]
  %v33 = vld [vmem:[%s0 + $0x98] sm:$0xff]
  %v34 = vld [vmem:[%s0 + $0xa0] sm:$0xff]
  %v35 = vld [vmem:[%s0 + $0xa8] sm:$0xff]
  %v36 = vld [vmem:[%s0 + $0xb0] sm:$0xff]
  %v37 = vld [vmem:[%s0 + $0xb8] sm:$0xff]
  %v38 = vld [vmem:[%s0 + $0xc0] sm:$0xff]
  %v39 = vld [vmem:[%s0 + $0xc8] sm:$0xff]
  %v40 = vld [vmem:[%s0 + $0xd0] sm:$0xff]
  %v41 = vld [vmem:[%s0 + $0xd8] sm:$0xff]
  %v42 = vld [vmem:[%s0 + $0xe0] sm:$0xff]
  %v43 = vld [vmem:[%s0 + $0xe8] sm:$0xff]
  %v44 = vld [vmem:[%s0 + $0xf0] sm:$0xff]
  %v45 = vld [vmem:[%s0 + $0xf8] sm:$0xff]
  %v46 = vld [vmem:[%s0 + $0x100] sm:$0xff]
  %v47 = vld [vmem:[%s0 + $0x108] sm:$0xff]
  %v48 = vld [vmem:[%s0 + $0x110] sm:$0xff]
  %v49 = vld [vmem:[%s0 + $0x118] sm:$0xff]
  %v50 = vld [vmem:[%s0 + $0x120] sm:$0xff]
  %v51 = vld [vmem:[%s0 + $0x128] sm:$0xff]
  %v52 = vld [vmem:[%s0 + $0x130] sm:$0xff]
  %v53 = vld [vmem:[%s0 + $0x138] sm:$0xff]
  %v54 = vld [vmem:[%s0 + $0x140] sm:$0xff]
  %v55 = vld [vmem:[%s0 + $0x148] sm:$0xff]
  %v56 = vld [vmem:[%s0 + $0x150] sm:$0xff]
  %v57 = vld [vmem:[%s0 + $0x158] sm:$0xff]
  %v58 = vld [vmem:[%s0 + $0x160] sm:$0xff]
  %v59 = vld [vmem:[%s0 + $0x168] sm:$0xff]
  %v60 = vld [vmem:[%s0 + $0x170] sm:$0xff]
  %v61 = vld [vmem:[%s0 + $0x178] sm:$0xff]
  %v62 = vld [vmem:[%s0 + $0x180] sm:$0xff]
  %v63 = vld [vmem:[%s0 + $0x188] sm:$0xff]
  %v64 = vld [vmem:[%s0 + $0x190] sm:$0xff]
  %v65 = vld [vmem:[%s0 + $0x198] sm:$0xff]
  %v66 = vld [vmem:[%s0 + $0x1a0] sm:$0xff]
  %v67 = vld [vmem:[%s0 + $0x1a8] sm:$0xff]
  %v68 = vld [vmem:[%s0 + $0x1b0] sm:$0xff]
  %v69 = vld [vmem:[%s0 + $0x1b8] sm:$0xff]
  %v70 = vld [vmem:[%s0 + $0x1c0] sm:$0xff]
  %v71 = vld [vmem:[%s0 + $0x1c8] sm:$0xff]
  %v72 = vld [vmem:[%s0 + $0x1d0] sm:$0xff]
  %v73 = vld [vmem:[%s0 + $0x1d8] sm:$0xff]
  %v74 = vld [vmem:[%s0 + $0x1e0] sm:$0xff]
  %v75 = vld [vmem:[%s0 + $0x1e8] sm:$0xff]
  %v76 = vld [vmem:[%s0 + $0x1f0] sm:$0xff]
  %v77 = vld [vmem:[%s0 + $0x1f8] sm:$0xff]
  %v78 = vld [vmem:[%s1] sm:$0x1]
  %v80 = vperm.slane %v78, 0
  %v82 = vmul.f32 %v14, %v80
  %v83 = vmul.f32 %v15, %v80
  %v84 = vmul.f32 %v16, %v80
  %v85 = vmul.f32 %v17, %v80
  %v86 = vmul.f32 %v18, %v80
  %v87 = vmul.f32 %v19, %v80
  %v88 = vmul.f32 %v20, %v80
  %v89 = vmul.f32 %v21, %v80
  %v90 = vmul.f32 %v22, %v80
  %v91 = vmul.f32 %v23, %v80
  %v92 = vmul.f32 %v24, %v80
  %v93 = vmul.f32 %v25, %v80
  %v94 = vmul.f32 %v26, %v80
  %v95 = vmul.f32 %v27, %v80
  %v96 = vmul.f32 %v28, %v80
  %v97 = vmul.f32 %v29, %v80
  %v98 = vmul.f32 %v30, %v80
  %v99 = vmul.f32 %v31, %v80
  %v100 = vmul.f32 %v32, %v80
  %v101 = vmul.f32 %v33, %v80
  %v102 = vmul.f32 %v34, %v80
  %v103 = vmul.f32 %v35, %v80
  %v104 = vmul.f32 %v36, %v80
  %v105 = vmul.f32 %v37, %v80
  %v106 = vmul.f32 %v38, %v80
  %v107 = vmul.f32 %v39, %v80
  %v108 = vmul.f32 %v40, %v80
  %v109 = vmul.f32 %v41, %v80
  %v110 = vmul.f32 %v42, %v80
  %v111 = vmul.f32 %v43, %v80
  %v112 = vmul.f32 %v44, %v80
  %v113 = vmul.f32 %v45, %v80
  %v114 = vmul.f32 %v46, %v80
  %v115 = vmul.f32 %v47, %v80
  %v116 = vmul.f32 %v48, %v80
  %v117 = vmul.f32 %v49, %v80
  %v118 = vmul.f32 %v50, %v80
  %v119 = vmul.f32 %v51, %v80
  %v120 = vmul.f32 %v52, %v80
  %v121 = vmul.f32 %v53, %v80
  %v122 = vmul.f32 %v54, %v80
  %v123 = vmul.f32 %v55, %v80
  %v124 = vmul.f32 %v56, %v80
  %v125 = vmul.f32 %v57, %v80
  %v126 = vmul.f32 %v58, %v80
  %v127 = vmul.f32 %v59, %v80
  %v128 = vmul.f32 %v60, %v80
  %v129 = vmul.f32 %v61, %v80
  %v130 = vmul.f32 %v62, %v80
  %v131 = vmul.f32 %v63, %v80
  %v132 = vmul.f32 %v64, %v80
  %v133 = vmul.f32 %v65, %v80
  %v134 = vmul.f32 %v66, %v80
  %v135 = vmul.f32 %v67, %v80
  %v136 = vmul.f32 %v68, %v80
  %v137 = vmul.f32 %v69, %v80
  %v138 = vmul.f32 %v70, %v80
  %v139 = vmul.f32 %v71, %v80
  %v140 = vmul.f32 %v72, %v80
  %v141 = vmul.f32 %v73, %v80
  %v142 = vmul.f32 %v74, %v80
  %v143 = vmul.f32 %v75, %v80
  %v144 = vmul.f32 %v76, %v80
  %v145 = vmul.f32 %v77, %v80
  %v146 = vld [vmem:[%s2] sm:$0x1]
  %v148 = vperm.slane %v146, 0
  %v150 = vadd.f32 %v82, %v148
  %v151 = vadd.f32 %v83, %v148
  %v152 = vadd.f32 %v84, %v148
  %v153 = vadd.f32 %v85, %v148
  %v154 = vadd.f32 %v86, %v148
  %v155 = vadd.f32 %v87, %v148
  %v156 = vadd.f32 %v88, %v148
  %v157 = vadd.f32 %v89, %v148
  %v158 = vadd.f32 %v90, %v148
  %v159 = vadd.f32 %v91, %v148
  %v160 = vadd.f32 %v92, %v148
  %v161 = vadd.f32 %v93, %v148
  %v162 = vadd.f32 %v94, %v148
  %v163 = vadd.f32 %v95, %v148
  %v164 = vadd.f32 %v96, %v148
  %v165 = vadd.f32 %v97, %v148
  %v166 = vadd.f32 %v98, %v148
  %v167 = vadd.f32 %v99, %v148
  %v168 = vadd.f32 %v100, %v148
  %v169 = vadd.f32 %v101, %v148
  %v170 = vadd.f32 %v102, %v148
  %v171 = vadd.f32 %v103, %v148
  %v172 = vadd.f32 %v104, %v148
  %v173 = vadd.f32 %v105, %v148
  %v174 = vadd.f32 %v106, %v148
  %v175 = vadd.f32 %v107, %v148
  %v176 = vadd.f32 %v108, %v148
  %v177 = vadd.f32 %v109, %v148
  %v178 = vadd.f32 %v110, %v148
  %v179 = vadd.f32 %v111, %v148
  %v180 = vadd.f32 %v112, %v148
  %v181 = vadd.f32 %v113, %v148
  %v182 = vadd.f32 %v114, %v148
  %v183 = vadd.f32 %v115, %v148
  %v184 = vadd.f32 %v116, %v148
  %v185 = vadd.f32 %v117, %v148
  %v186 = vadd.f32 %v118, %v148
  %v187 = vadd.f32 %v119, %v148
  %v188 = vadd.f32 %v120, %v148
  %v189 = vadd.f32 %v121, %v148
  %v190 = vadd.f32 %v122, %v148
  %v191 = vadd.f32 %v123, %v148
  %v192 = vadd.f32 %v124, %v148
  %v193 = vadd.f32 %v125, %v148
  %v194 = vadd.f32 %v126, %v148
  %v195 = vadd.f32 %v127, %v148
  %v196 = vadd.f32 %v128, %v148
  %v197 = vadd.f32 %v129, %v148
  %v198 = vadd.f32 %v130, %v148
  %v199 = vadd.f32 %v131, %v148
  %v200 = vadd.f32 %v132, %v148
  %v201 = vadd.f32 %v133, %v148
  %v202 = vadd.f32 %v134, %v148
  %v203 = vadd.f32 %v135, %v148
  %v204 = vadd.f32 %v136, %v148
  %v205 = vadd.f32 %v137, %v148
  %v206 = vadd.f32 %v138, %v148
  %v207 = vadd.f32 %v139, %v148
  %v208 = vadd.f32 %v140, %v148
  %v209 = vadd.f32 %v141, %v148
  %v210 = vadd.f32 %v142, %v148
  %v211 = vadd.f32 %v143, %v148
  %v212 = vadd.f32 %v144, %v148
  %v213 = vadd.f32 %v145, %v148
  %v214 = vmax.f32 %v150, 0.0
  %v215 = vmax.f32 %v151, 0.0
  %v216 = vmax.f32 %v152, 0.0
  %v217 = vmax.f32 %v153, 0.0
  %v218 = vmax.f32 %v154, 0.0
  %v219 = vmax.f32 %v155, 0.0
  %v220 = vmax.f32 %v156, 0.0
  %v221 = vmax.f32 %v157, 0.0
  %v222 = vmax.f32 %v158, 0.0
  %v223 = vmax.f32 %v159, 0.0
  %v224 = vmax.f32 %v160, 0.0
  %v225 = vmax.f32 %v161, 0.0
  %v226 = vmax.f32 %v162, 0.0
  %v227 = vmax.f32 %v163, 0.0
  %v228 = vmax.f32 %v164, 0.0
  %v229 = vmax.f32 %v165, 0.0
  %v230 = vmax.f32 %v166, 0.0
  %v231 = vmax.f32 %v167, 0.0
  %v232 = vmax.f32 %v168, 0.0
  %v233 = vmax.f32 %v169, 0.0
  %v234 = vmax.f32 %v170, 0.0
  %v235 = vmax.f32 %v171, 0.0
  %v236 = vmax.f32 %v172, 0.0
  %v237 = vmax.f32 %v173, 0.0
  %v238 = vmax.f32 %v174, 0.0
  %v239 = vmax.f32 %v175, 0.0
  %v240 = vmax.f32 %v176, 0.0
  %v241 = vmax.f32 %v177, 0.0
  %v242 = vmax.f32 %v178, 0.0
  %v243 = vmax.f32 %v179, 0.0
  %v244 = vmax.f32 %v180, 0.0
  %v245 = vmax.f32 %v181, 0.0
  %v246 = vmax.f32 %v182, 0.0
  %v247 = vmax.f32 %v183, 0.0
  %v248 = vmax.f32 %v184, 0.0
  %v249 = vmax.f32 %v185, 0.0
  %v250 = vmax.f32 %v186, 0.0
  %v251 = vmax.f32 %v187, 0.0
  %v252 = vmax.f32 %v188, 0.0
  %v253 = vmax.f32 %v189, 0.0
  %v254 = vmax.f32 %v190, 0.0
  %v255 = vmax.f32 %v191, 0.0
  %v256 = vmax.f32 %v192, 0.0
  %v257 = vmax.f32 %v193, 0.0
  %v258 = vmax.f32 %v194, 0.0
  %v259 = vmax.f32 %v195, 0.0
  %v260 = vmax.f32 %v196, 0.0
  %v261 = vmax.f32 %v197, 0.0
  %v262 = vmax.f32 %v198, 0.0
  %v263 = vmax.f32 %v199, 0.0
  %v264 = vmax.f32 %v200, 0.0
  %v265 = vmax.f32 %v201, 0.0
  %v266 = vmax.f32 %v202, 0.0
  %v267 = vmax.f32 %v203, 0.0
  %v268 = vmax.f32 %v204, 0.0
  %v269 = vmax.f32 %v205, 0.0
  %v270 = vmax.f32 %v206, 0.0
  %v271 = vmax.f32 %v207, 0.0
  %v272 = vmax.f32 %v208, 0.0
  %v273 = vmax.f32 %v209, 0.0
  %v274 = vmax.f32 %v210, 0.0
  %v275 = vmax.f32 %v211, 0.0
  %v276 = vmax.f32 %v212, 0.0
  %v277 = vmax.f32 %v213, 0.0
  %v278 = vpack.c.bf16 %v214, %v214
  %v279 = vpack.c.bf16 %v215, %v215
  %v280 = vpack.c.bf16 %v216, %v216
  %v281 = vpack.c.bf16 %v217, %v217
  %v282 = vpack.c.bf16 %v218, %v218
  %v283 = vpack.c.bf16 %v219, %v219
  %v284 = vpack.c.bf16 %v220, %v220
  %v285 = vpack.c.bf16 %v221, %v221
  %v286 = vpack.c.bf16 %v222, %v222
  %v287 = vpack.c.bf16 %v223, %v223
  %v288 = vpack.c.bf16 %v224, %v224
  %v289 = vpack.c.bf16 %v225, %v225
  %v290 = vpack.c.bf16 %v226, %v226
  %v291 = vpack.c.bf16 %v227, %v227
  %v292 = vpack.c.bf16 %v228, %v228
  %v293 = vpack.c.bf16 %v229, %v229
  %v294 = vpack.c.bf16 %v230, %v230
  %v295 = vpack.c.bf16 %v231, %v231
  %v296 = vpack.c.bf16 %v232, %v232
  %v297 = vpack.c.bf16 %v233, %v233
  %v298 = vpack.c.bf16 %v234, %v234
  %v299 = vpack.c.bf16 %v235, %v235
  %v300 = vpack.c.bf16 %v236, %v236
  %v301 = vpack.c.bf16 %v237, %v237
  %v302 = vpack.c.bf16 %v238, %v238
  %v303 = vpack.c.bf16 %v239, %v239
  %v304 = vpack.c.bf16 %v240, %v240
  %v305 = vpack.c.bf16 %v241, %v241
  %v306 = vpack.c.bf16 %v242, %v242
  %v307 = vpack.c.bf16 %v243, %v243
  %v308 = vpack.c.bf16 %v244, %v244
  %v309 = vpack.c.bf16 %v245, %v245
  %v310 = vpack.c.bf16 %v246, %v246
  %v311 = vpack.c.bf16 %v247, %v247
  %v312 = vpack.c.bf16 %v248, %v248
  %v313 = vpack.c.bf16 %v249, %v249
  %v314 = vpack.c.bf16 %v250, %v250
  %v315 = vpack.c.bf16 %v251, %v251
  %v316 = vpack.c.bf16 %v252, %v252
  %v317 = vpack.c.bf16 %v253, %v253
  %v318 = vpack.c.bf16 %v254, %v254
  %v319 = vpack.c.bf16 %v255, %v255
  %v320 = vpack.c.bf16 %v256, %v256
  %v321 = vpack.c.bf16 %v257, %v257
  %v322 = vpack.c.bf16 %v258, %v258
  %v323 = vpack.c.bf16 %v259, %v259
  %v324 = vpack.c.bf16 %v260, %v260
  %v325 = vpack.c.bf16 %v261, %v261
  %v326 = vpack.c.bf16 %v262, %v262
  %v327 = vpack.c.bf16 %v263, %v263
  %v328 = vpack.c.bf16 %v264, %v264
  %v329 = vpack.c.bf16 %v265, %v265
  %v330 = vpack.c.bf16 %v266, %v266
  %v331 = vpack.c.bf16 %v267, %v267
  %v332 = vpack.c.bf16 %v268, %v268
  %v333 = vpack.c.bf16 %v269, %v269
  %v334 = vpack.c.bf16 %v270, %v270
  %v335 = vpack.c.bf16 %v271, %v271
  %v336 = vpack.c.bf16 %v272, %v272
  %v337 = vpack.c.bf16 %v273, %v273
  %v338 = vpack.c.bf16 %v274, %v274
  %v339 = vpack.c.bf16 %v275, %v275
  %v340 = vpack.c.bf16 %v276, %v276
  %v341 = vpack.c.bf16 %v277, %v277
  %vm342 = vcmask 125952
  %343 = vst.msk [vmem:[%s3] sm:$0xf] %vm342, %v278
  %344 = vst.msk [vmem:[%s3 + $0x4] sm:$0xf] %vm342, %v279
  %345 = vst.msk [vmem:[%s3 + $0x8] sm:$0xf] %vm342, %v280
  %346 = vst.msk [vmem:[%s3 + $0xc] sm:$0xf] %vm342, %v281
  %347 = vst.msk [vmem:[%s3 + $0x10] sm:$0xf] %vm342, %v282
  %348 = vst.msk [vmem:[%s3 + $0x14] sm:$0xf] %vm342, %v283
  %349 = vst.msk [vmem:[%s3 + $0x18] sm:$0xf] %vm342, %v284
  %350 = vst.msk [vmem:[%s3 + $0x1c] sm:$0xf] %vm342, %v285
  %351 = vst.msk [vmem:[%s3 + $0x20] sm:$0xf] %vm342, %v286
  %352 = vst.msk [vmem:[%s3 + $0x24] sm:$0xf] %vm342, %v287
  %353 = vst.msk [vmem:[%s3 + $0x28] sm:$0xf] %vm342, %v288
  %354 = vst.msk [vmem:[%s3 + $0x2c] sm:$0xf] %vm342, %v289
  %355 = vst.msk [vmem:[%s3 + $0x30] sm:$0xf] %vm342, %v290
  %356 = vst.msk [vmem:[%s3 + $0x34] sm:$0xf] %vm342, %v291
  %357 = vst.msk [vmem:[%s3 + $0x38] sm:$0xf] %vm342, %v292
  %358 = vst.msk [vmem:[%s3 + $0x3c] sm:$0xf] %vm342, %v293
  %359 = vst.msk [vmem:[%s3 + $0x40] sm:$0xf] %vm342, %v294
  %360 = vst.msk [vmem:[%s3 + $0x44] sm:$0xf] %vm342, %v295
  %361 = vst.msk [vmem:[%s3 + $0x48] sm:$0xf] %vm342, %v296
  %362 = vst.msk [vmem:[%s3 + $0x4c] sm:$0xf] %vm342, %v297
  %363 = vst.msk [vmem:[%s3 + $0x50] sm:$0xf] %vm342, %v298
  %364 = vst.msk [vmem:[%s3 + $0x54] sm:$0xf] %vm342, %v299
  %365 = vst.msk [vmem:[%s3 + $0x58] sm:$0xf] %vm342, %v300
  %366 = vst.msk [vmem:[%s3 + $0x5c] sm:$0xf] %vm342, %v301
  %367 = vst.msk [vmem:[%s3 + $0x60] sm:$0xf] %vm342, %v302
  %368 = vst.msk [vmem:[%s3 + $0x64] sm:$0xf] %vm342, %v303
  %369 = vst.msk [vmem:[%s3 + $0x68] sm:$0xf] %vm342, %v304
  %370 = vst.msk [vmem:[%s3 + $0x6c] sm:$0xf] %vm342, %v305
  %371 = vst.msk [vmem:[%s3 + $0x70] sm:$0xf] %vm342, %v306
  %372 = vst.msk [vmem:[%s3 + $0x74] sm:$0xf] %vm342, %v307
  %373 = vst.msk [vmem:[%s3 + $0x78] sm:$0xf] %vm342, %v308
  %374 = vst.msk [vmem:[%s3 + $0x7c] sm:$0xf] %vm342, %v309
  %375 = vst.msk [vmem:[%s3 + $0x80] sm:$0xf] %vm342, %v310
  %376 = vst.msk [vmem:[%s3 + $0x84] sm:$0xf] %vm342, %v311
  %377 = vst.msk [vmem:[%s3 + $0x88] sm:$0xf] %vm342, %v312
  %378 = vst.msk [vmem:[%s3 + $0x8c] sm:$0xf] %vm342, %v313
  %379 = vst.msk [vmem:[%s3 + $0x90] sm:$0xf] %vm342, %v314
  %380 = vst.msk [vmem:[%s3 + $0x94] sm:$0xf] %vm342, %v315
  %381 = vst.msk [vmem:[%s3 + $0x98] sm:$0xf] %vm342, %v316
  %382 = vst.msk [vmem:[%s3 + $0x9c] sm:$0xf] %vm342, %v317
  %383 = vst.msk [vmem:[%s3 + $0xa0] sm:$0xf] %vm342, %v318
  %384 = vst.msk [vmem:[%s3 + $0xa4] sm:$0xf] %vm342, %v319
  %385 = vst.msk [vmem:[%s3 + $0xa8] sm:$0xf] %vm342, %v320
  %386 = vst.msk [vmem:[%s3 + $0xac] sm:$0xf] %vm342, %v321
  %387 = vst.msk [vmem:[%s3 + $0xb0] sm:$0xf] %vm342, %v322
  %388 = vst.msk [vmem:[%s3 + $0xb4] sm:$0xf] %vm342, %v323
  %389 = vst.msk [vmem:[%s3 + $0xb8] sm:$0xf] %vm342, %v324
  %390 = vst.msk [vmem:[%s3 + $0xbc] sm:$0xf] %vm342, %v325
  %391 = vst.msk [vmem:[%s3 + $0xc0] sm:$0xf] %vm342, %v326
  %392 = vst.msk [vmem:[%s3 + $0xc4] sm:$0xf] %vm342, %v327
  %393 = vst.msk [vmem:[%s3 + $0xc8] sm:$0xf] %vm342, %v328
  %394 = vst.msk [vmem:[%s3 + $0xcc] sm:$0xf] %vm342, %v329
  %395 = vst.msk [vmem:[%s3 + $0xd0] sm:$0xf] %vm342, %v330
  %396 = vst.msk [vmem:[%s3 + $0xd4] sm:$0xf] %vm342, %v331
  %397 = vst.msk [vmem:[%s3 + $0xd8] sm:$0xf] %vm342, %v332
  %398 = vst.msk [vmem:[%s3 + $0xdc] sm:$0xf] %vm342, %v333
  %399 = vst.msk [vmem:[%s3 + $0xe0] sm:$0xf] %vm342, %v334
  %400 = vst.msk [vmem:[%s3 + $0xe4] sm:$0xf] %vm342, %v335
  %401 = vst.msk [vmem:[%s3 + $0xe8] sm:$0xf] %vm342, %v336
  %402 = vst.msk [vmem:[%s3 + $0xec] sm:$0xf] %vm342, %v337
  %403 = vst.msk [vmem:[%s3 + $0xf0] sm:$0xf] %vm342, %v338
  %404 = vst.msk [vmem:[%s3 + $0xf4] sm:$0xf] %vm342, %v339
  %405 = vst.msk [vmem:[%s3 + $0xf8] sm:$0xf] %vm342, %v340
  %406 = vst.msk [vmem:[%s3 + $0xfc] sm:$0xf] %vm342, %v341
  // Predicated region
  $region14: #{identity_generator_forward.23} parent=0 // pred_check
    _
  $region15: #{identity_generator_forward.23} parent=0 // pred_check_branch
    %408 = sbr.rel (0) target = $region17
  $region16: #{identity_generator_forward.23} parent=0 // pred_region
    _
  $region17: #{identity_generator_forward.23} parent=0 // pred_fallthru
    _
  // Predicated region
  $region18: #{identity_generator_forward.23} parent=0 // pred_check
    _
  $region19: #{identity_generator_forward.23} parent=0 // pred_check_branch
    %410 = sbr.rel (0) target = $region21
  $region20: #{identity_generator_forward.23} parent=0 // pred_region
    _
  $region21: #{identity_generator_forward.23} parent=0 // pred_fallthru
    _

</llo_original>
